<compile_context>
chip_gen: v7x
topology: tpu7x:2x2x1
jax: 0.10.0
libtpu: 0.0.40
codegen_flags: <defaults>
</compile_context>

<pallas_src>
import jax
import jax.numpy as jnp
from jax.experimental import pallas as pl
from jax.experimental.pallas import tpu as pltpu


def _round_up(x, m):
    return ((x + m - 1) // m) * m


# ----------------------------- in-kernel math ------------------------------

def _erf(x):
    # Abramowitz & Stegun 7.1.26 rational approximation, |err| <= 1.5e-7.
    a1, a2, a3, a4, a5 = 0.254829592, -0.284496736, 1.421413741, -1.453152027, 1.061405429
    p = 0.3275911
    ax = jnp.abs(x)
    # divide -> EUP approx reciprocal (frees VALU slots under the big GELU).
    t = pl.reciprocal(1.0 + p * ax, approx=True)
    poly = ((((a5 * t + a4) * t + a3) * t + a2) * t + a1) * t
    y = 1.0 - poly * jnp.exp(-ax * ax)
    return jnp.where(x >= 0.0, y, -y)


def _gelu(x):
    # Exact GELU (matches nn.GELU() default): 0.5*x*(1+erf(x/sqrt(2)))
    return 0.5 * x * (1.0 + _erf(x * 0.7071067811865476))


def _layernorm(x, gamma, beta, eps=1e-5):
    mu = jnp.mean(x, axis=-1, keepdims=True)
    var = jnp.mean((x - mu) ** 2, axis=-1, keepdims=True)
    return (x - mu) * jax.lax.rsqrt(var + eps) * gamma + beta


# ------------------------------- the kernel --------------------------------

def make_fastvit_kernel(compute_dtype, n_chunks, hid_chunk, inv_n_tokens, has_pad):
    cd = compute_dtype
    std_bmm = (((2,), (1,)), ((0,), (0,)))   # batched (b,m,k) @ (b,k,n)

    def dot2(a, b):
        # matmul in compute_dtype (bf16 on v6e/v7x by default), f32 accumulate.
        return jnp.dot(a.astype(cd), b.astype(cd), preferred_element_type=jnp.float32)

    def bdot(a, b):
        return jax.lax.dot_general(a.astype(cd), b.astype(cd),
                                   dimension_numbers=std_bmm,
                                   preferred_element_type=jnp.float32)

    def kernel(x_ref, pe_w_ref, pe_b_ref, pos_ref, tmask_ref, hmask_ref,
               ln1_g_ref, ln1_b_ref, qkv_w_ref, proj_w_ref, proj_b_ref,
               ln2_g_ref, ln2_b_ref, mlp_w1_ref, mlp_b1_ref, mlp_w2_ref, mlp_b2_ref,
               sp_w1_ref, sp_b1_ref, sp_w2_ref, sp_b2_ref, head_w_ref, head_b_ref,
               out_ref, x_acc):
        d = pl.program_id(1)
        tb, n, e = x_acc.shape

        # ---- d == 0: patch embed (1x1 conv == per-token linear) + pos embed ----
        @pl.when(d == 0)
        def _init():
            xin = x_ref[...]                                    # (TB, N_pad, Cin)
            cin = xin.shape[-1]
            h0 = dot2(xin.reshape(tb * n, cin), pe_w_ref[...]) + pe_b_ref[...]
            x_acc[...] = h0.reshape(tb, n, e) + pos_ref[...]

        x = x_acc[...]                                          # (TB, N_pad, E) f32

        # ---- transformer block d (this layer's weights streamed into VMEM) ----
        # efficient (linear-complexity) attention, fully batched over TB
        h = _layernorm(x, ln1_g_ref[0], ln1_b_ref[0])
        qkv = dot2(h.reshape(tb * n, e), qkv_w_ref[0]).reshape(tb, n, 3 * e)  # no bias
        q = qkv[:, :, :e]
        k = qkv[:, :, e:2 * e]
        v = qkv[:, :, 2 * e:]
        if has_pad:
            k = k + (tmask_ref[...] - 1.0) * 1e30               # exclude padded tokens
        k = jax.nn.softmax(k, axis=1)                           # softmax over tokens
        kt = jnp.transpose(k, (0, 2, 1))                        # (TB, E, N_pad)
        # full (E,E) k^T v masked block-diagonally == per-head contexts exactly
        ctx = bdot(kt, v) * hmask_ref[...]                      # (TB, E, E)
        attn = bdot(q, ctx)                                     # (TB, N_pad, E)
        attn = dot2(attn.reshape(tb * n, e), proj_w_ref[0]) + proj_b_ref[0]
        x = x + attn.reshape(tb, n, e)

        # ---- MLP (hidden dim optionally chunked to cap the f32 transient) ----
        h = _layernorm(x, ln2_g_ref[0], ln2_b_ref[0])
        h_flat = h.reshape(tb * n, e)
        if n_chunks == 1:
            h2 = _gelu(dot2(h_flat, mlp_w1_ref[0]) + mlp_b1_ref[0])
            mlp_out = dot2(h2, mlp_w2_ref[0]) + mlp_b2_ref[0]
        else:
            def chunk_body(c, acc):
                start = pl.multiple_of(c * hid_chunk, hid_chunk)
                w1c = mlp_w1_ref[0, :, pl.ds(start, hid_chunk)]
                b1c = mlp_b1_ref[0, :, pl.ds(start, hid_chunk)]
                w2c = mlp_w2_ref[0, pl.ds(start, hid_chunk), :]
                slab = _gelu(dot2(h_flat, w1c) + b1c)
                return acc + dot2(slab, w2c)
            acc0 = jnp.zeros((tb * n, e), jnp.float32) + mlp_b2_ref[0]
            mlp_out = jax.lax.fori_loop(0, n_chunks, chunk_body, acc0)
        x = x + mlp_out.reshape(tb, n, e)

        x_acc[...] = x

        # ---- d == depth-1: masked mean-pool, spectral MLP, classifier head ----
        @pl.when(d == pl.num_programs(1) - 1)
        def _fin():
            xp = x * tmask_ref[...] if has_pad else x
            pooled = jnp.sum(xp, axis=1) * inv_n_tokens          # (TB, E)
            s = _gelu(dot2(pooled, sp_w1_ref[...]) + sp_b1_ref[...])
            s = dot2(s, sp_w2_ref[...]) + sp_b2_ref[...]
            out_ref[0] = dot2(s, head_w_ref[...]) + head_b_ref[...]   # (TB, c_pad)

    return kernel


# -------------------------------- wrapper ----------------------------------

def _auto_batch_tile(B, n_pad, e, hid_chunk, budget=24 << 20):
    """Pick a default batch tile: prefer nb >= 2 (so the 'parallel' batch axis can
    shard across the two v7x TensorCores) and keep the f32 activation working set
    under `budget` (sized so it also fits v7x's 64 MiB VMEM next to 2x weights)."""
    per_tok = (e * (1 + 3 + 4) + hid_chunk) * 4   # x_acc + qkv + temps + MLP slab
    divisors = [d for d in range(1, B + 1) if B % d == 0]
    cands = [d for d in divisors if d <= B // 2] or [B]
    fitting = [d for d in cands if d * n_pad * per_tok <= budget]
    return max(fitting) if fitting else 1


def fastvit_forward(x_nchw, params, *, depth, num_heads, num_classes,
                    batch_tile=None, compute_dtype=jnp.bfloat16,
                    mlp_hidden_chunk=1024, weight_buffers=2):
    B, Cin, H, W = x_nchw.shape
    N = H * W
    E = params["pe_w"].shape[1]
    hid = params["mlp_w1"].shape[-1]
    shid = params["sp_w1"].shape[1]
    assert E % num_heads == 0

    f32 = jnp.float32
    n_pad = _round_up(N, 8)                 # sublane-aligned tokens: reshapes are relabels
    c_pad = _round_up(num_classes, 128)     # lane-dense classifier output (unmasked vst)
    has_pad = n_pad != N

    # MLP hidden chunking (caps the (TB*N, hid) f32 transient; key for v7x 64 MiB).
    if hid > mlp_hidden_chunk and hid % mlp_hidden_chunk == 0 and mlp_hidden_chunk % 128 == 0:
        hid_chunk = mlp_hidden_chunk
    else:
        hid_chunk = hid
    n_chunks = hid // hid_chunk

    if batch_tile is None:
        batch_tile = _auto_batch_tile(B, n_pad, E, hid_chunk)
    TB = batch_tile
    assert B % TB == 0, "batch must be divisible by batch_tile"
    nb = B // TB

    wcast = lambda a: a.astype(compute_dtype)

    # glue: NCHW -> (B, N, Cin) token order = flatten(2).transpose(1, 2); pad tokens.
    # TODO(synk): for very large H*W, feed (B, Cin, N) and contract Cin in-kernel to
    # avoid this XLA-side transpose; negligible at these sizes.
    x_tok = x_nchw.reshape(B, Cin, N).transpose(0, 2, 1)
    if has_pad:
        x_tok = jnp.pad(x_tok, ((0, 0), (0, n_pad - N), (0, 0)))
    x_tok = x_tok.astype(compute_dtype)

    pos = params["pos"].astype(f32)
    if has_pad:
        pos = jnp.pad(pos, ((0, n_pad - N), (0, 0)))

    # token-validity mask (all-ones when no padding) and block-diagonal head mask,
    # built once here instead of per grid step in the kernel.
    tmask = (jnp.arange(n_pad) < N).astype(f32).reshape(n_pad, 1)
    hidx = jnp.arange(E) // (E // num_heads)
    hmask = (hidx[:, None] == hidx[None, :]).astype(f32)          # (E, E)

    head_w = jnp.zeros((E, c_pad), f32).at[:, :num_classes].set(params["head_w"])
    head_b = jnp.zeros((1, c_pad), f32).at[:, :num_classes].set(params["head_b"])

    def const_spec(arr):
        # Constant block index -> fetched once, resident for the whole kernel.
        nd = arr.ndim
        return pl.BlockSpec(arr.shape, lambda b, d, nd=nd: (0,) * nd)

    def layer_spec(arr, buffers=2):
        # Depth-stacked (depth, ...): stream one layer per depth grid step so layer
        # d+1 weights DMA behind layer d compute (double-buffered by default).
        blk = (1,) + arr.shape[1:]
        nd = arr.ndim
        kw = {}
        if buffers != 2:
            kw["pipeline_mode"] = pl.Buffered(buffers)   # e.g. 3 on v6e if DMA exposed
        return pl.BlockSpec(blk, lambda b, d, nd=nd: (d,) + (0,) * (nd - 1), **kw)

    wb = weight_buffers
    inputs = [
        (x_tok, pl.BlockSpec((TB, n_pad, Cin), lambda b, d: (b, 0, 0))),
        (wcast(params["pe_w"]), const_spec(params["pe_w"])),
        (params["pe_b"].astype(f32), const_spec(params["pe_b"])),
        (pos, const_spec(pos)),
        (tmask, const_spec(tmask)),
        (hmask, const_spec(hmask)),
        (params["ln1_g"].astype(f32), layer_spec(params["ln1_g"])),
        (params["ln1_b"].astype(f32), layer_spec(params["ln1_b"])),
        (wcast(params["qkv_w"]), layer_spec(params["qkv_w"], wb)),
        (wcast(params["proj_w"]), layer_spec(params["proj_w"], wb)),
        (params["proj_b"].astype(f32), layer_spec(params["proj_b"])),
        (params["ln2_g"].astype(f32), layer_spec(params["ln2_g"])),
        (params["ln2_b"].astype(f32), layer_spec(params["ln2_b"])),
        (wcast(params["mlp_w1"]), layer_spec(params["mlp_w1"], wb)),
        (params["mlp_b1"].astype(f32), layer_spec(params["mlp_b1"])),
        (wcast(params["mlp_w2"]), layer_spec(params["mlp_w2"], wb)),
        (params["mlp_b2"].astype(f32), layer_spec(params["mlp_b2"])),
        (wcast(params["sp_w1"]), const_spec(params["sp_w1"])),
        (params["sp_b1"].astype(f32), const_spec(params["sp_b1"])),
        (wcast(params["sp_w2"]), const_spec(params["sp_w2"])),
        (params["sp_b2"].astype(f32), const_spec(params["sp_b2"])),
        (wcast(head_w), const_spec(head_w)),
        (head_b, const_spec(head_b)),
    ]
    args = [a for a, _ in inputs]
    in_specs = [s for _, s in inputs]

    # ---- explicit VMEM budget: N-buffered per-layer weights + consts + I/O tiles
    #      + persistent x_acc + dominant f32 intermediates, with ~30% headroom. ----
    ic = jnp.dtype(compute_dtype).itemsize
    n_wbuf = max(2, weight_buffers)
    per_layer_w = (3 * E * E + E * E + E * hid + hid * E) * ic + (6 * E + hid) * 4
    const_b = ((Cin * E + E * shid + shid * E + E * c_pad) * ic
               + (E + n_pad * E + E * E + n_pad + shid + E + c_pad) * 4)
    io_b = 2 * TB * n_pad * Cin * ic + 2 * TB * c_pad * 4
    scratch_b = TB * n_pad * E * 4
    inter_b = (TB * n_pad * (3 * E + 8 * E + hid_chunk) + TB * E * E) * 4
    vmem_limit = int(1.3 * (n_wbuf * per_layer_w + 2 * const_b + io_b
                            + scratch_b + inter_b)) + (4 << 20)
    vmem_limit = max(32 << 20, min(vmem_limit, 100 << 20))

    kernel = make_fastvit_kernel(compute_dtype, n_chunks, hid_chunk, 1.0 / N, has_pad)

    out3 = pl.pallas_call(
        kernel,
        out_shape=jax.ShapeDtypeStruct((nb, TB, c_pad), jnp.float32),
        grid=(nb, depth),
        in_specs=in_specs,
        # index_map independent of d: single writeback per batch tile (at d=depth-1).
        out_specs=pl.BlockSpec((1, TB, c_pad), lambda b, d: (b, 0, 0)),
        scratch_shapes=[pltpu.VMEM((TB, n_pad, E), jnp.float32)],
        compiler_params=pltpu.CompilerParams(
            dimension_semantics=("parallel", "arbitrary"),
            vmem_limit_bytes=vmem_limit),
    )(*args)

    return out3.reshape(B, c_pad)[:, :num_classes]


# --------------------------- deterministic params ---------------------------

def init_params(key, *, cin, n_tokens, dim, depth, mlp_ratio, num_classes):
    hid = int(dim * mlp_ratio)
    shid = dim // 2
    keys = jax.random.split(key, 16)

    def nrm(k, shape, scale=0.02):
        return (scale * jax.random.normal(k, shape)).astype(jnp.float32)

    return {
        "pe_w":   nrm(keys[0], (cin, dim)),          # 1x1 conv weight, (in, out)
        "pe_b":   nrm(keys[1], (1, dim)),
        "pos":    nrm(keys[2], (n_tokens, dim)),
        "ln1_g":  jnp.ones((depth, 1, dim), jnp.float32),
        "ln1_b":  jnp.zeros((depth, 1, dim), jnp.float32),
        "qkv_w":  nrm(keys[3], (depth, dim, 3 * dim)),
        "proj_w": nrm(keys[4], (depth, dim, dim)),
        "proj_b": nrm(keys[5], (depth, 1, dim)),
        "ln2_g":  jnp.ones((depth, 1, dim), jnp.float32),
        "ln2_b":  jnp.zeros((depth, 1, dim), jnp.float32),
        "mlp_w1": nrm(keys[6], (depth, dim, hid)),
        "mlp_b1": nrm(keys[7], (depth, 1, hid)),
        "mlp_w2": nrm(keys[8], (depth, hid, dim)),
        "mlp_b2": nrm(keys[9], (depth, 1, dim)),
        "sp_w1":  nrm(keys[10], (dim, shid)),
        "sp_b1":  nrm(keys[11], (1, shid)),
        "sp_w2":  nrm(keys[12], (shid, dim)),
        "sp_b2":  nrm(keys[13], (1, dim)),
        "head_w": nrm(keys[14], (dim, num_classes)),
        "head_b": nrm(keys[15], (1, num_classes)),
    }


if __name__ == "__main__":
    # small, shape-consistent configuration
    B, Cin, IMG = 2, 4, 8          # input (B, Cin, 8, 8), patch_size=1 -> N=64 tokens
    DIM, DEPTH, HEADS = 128, 2, 4  # embed dim, blocks, heads (head_dim=32)
    MLP_RATIO, NUM_CLASSES = 4.0, 8
    N_TOKENS = IMG * IMG

    key = jax.random.PRNGKey(0)
    kx, kp = jax.random.split(key)
    x = jax.random.normal(kx, (B, Cin, IMG, IMG), dtype=jnp.float32)
    params = init_params(kp, cin=Cin, n_tokens=N_TOKENS, dim=DIM,
                         depth=DEPTH, mlp_ratio=MLP_RATIO, num_classes=NUM_CLASSES)

    # bf16 matmuls / f32 accumulation by default (2x MXU on v6e/v7x, half weight
    # DMA); pass compute_dtype=jnp.float32 for exact f32 parity with the reference.
    # mlp_hidden_chunk=128 exercises the chunked-MLP path (hid=512 -> 4 chunks).
    logits = fastvit_forward(x, params, depth=DEPTH, num_heads=HEADS,
                             num_classes=NUM_CLASSES,
                             compute_dtype=jnp.bfloat16,
                             mlp_hidden_chunk=128)
    logits = jax.block_until_ready(logits)
    assert logits.shape == (B, NUM_CLASSES)
    assert bool(jnp.all(jnp.isfinite(logits)))
    print("KERNEL_OK")
</pallas_src>

<mosaic_0001>
module attributes {stable_mosaic.version = 11 : i64} {
  func.func @kernel(%arg0: i32, %arg1: i32, %arg2: memref<1x64x4xbf16, #tpu.memory_space<vmem>>, %arg3: memref<4x128xbf16, #tpu.memory_space<vmem>>, %arg4: memref<1x128xf32, #tpu.memory_space<vmem>>, %arg5: memref<64x128xf32, #tpu.memory_space<vmem>>, %arg6: memref<64x1xf32, #tpu.memory_space<vmem>>, %arg7: memref<128x128xf32, #tpu.memory_space<vmem>>, %arg8: memref<1x1x128xf32, #tpu.memory_space<vmem>>, %arg9: memref<1x1x128xf32, #tpu.memory_space<vmem>>, %arg10: memref<1x128x384xbf16, #tpu.memory_space<vmem>>, %arg11: memref<1x128x128xbf16, #tpu.memory_space<vmem>>, %arg12: memref<1x1x128xf32, #tpu.memory_space<vmem>>, %arg13: memref<1x1x128xf32, #tpu.memory_space<vmem>>, %arg14: memref<1x1x128xf32, #tpu.memory_space<vmem>>, %arg15: memref<1x128x512xbf16, #tpu.memory_space<vmem>>, %arg16: memref<1x1x512xf32, #tpu.memory_space<vmem>>, %arg17: memref<1x512x128xbf16, #tpu.memory_space<vmem>>, %arg18: memref<1x1x128xf32, #tpu.memory_space<vmem>>, %arg19: memref<128x64xbf16, #tpu.memory_space<vmem>>, %arg20: memref<1x64xf32, #tpu.memory_space<vmem>>, %arg21: memref<64x128xbf16, #tpu.memory_space<vmem>>, %arg22: memref<1x128xf32, #tpu.memory_space<vmem>>, %arg23: memref<128x128xbf16, #tpu.memory_space<vmem>>, %arg24: memref<1x128xf32, #tpu.memory_space<vmem>>, %arg25: memref<1x1x128xf32, #tpu.memory_space<vmem>>, %arg26: memref<1x64x128xf32, #tpu.memory_space<vmem>>) attributes {dimension_semantics = [#tpu.dimension_semantics<parallel>, #tpu.dimension_semantics<arbitrary>], iteration_bounds = array<i64: 2, 2>, scalar_prefetch = 0 : i64, scratch_operands = 1 : i64, tpu.core_type = #tpu.core_type<tc>, window_params = [{transform_indices = @transform_0, window_bounds = array<i64: 1, 64, 4>}, {pipeline_mode = #tpu.pipeline_mode<synchronous>, transform_indices = @transform_1, window_bounds = array<i64: 4, 128>}, {pipeline_mode = #tpu.pipeline_mode<synchronous>, transform_indices = @transform_2, window_bounds = array<i64: 1, 128>}, {pipeline_mode = #tpu.pipeline_mode<synchronous>, transform_indices = @transform_3, window_bounds = array<i64: 64, 128>}, {pipeline_mode = #tpu.pipeline_mode<synchronous>, transform_indices = @transform_4, window_bounds = array<i64: 64, 1>}, {pipeline_mode = #tpu.pipeline_mode<synchronous>, transform_indices = @transform_5, window_bounds = array<i64: 128, 128>}, {transform_indices = @transform_6, window_bounds = array<i64: 1, 1, 128>}, {transform_indices = @transform_7, window_bounds = array<i64: 1, 1, 128>}, {transform_indices = @transform_8, window_bounds = array<i64: 1, 128, 384>}, {transform_indices = @transform_9, window_bounds = array<i64: 1, 128, 128>}, {transform_indices = @transform_10, window_bounds = array<i64: 1, 1, 128>}, {transform_indices = @transform_11, window_bounds = array<i64: 1, 1, 128>}, {transform_indices = @transform_12, window_bounds = array<i64: 1, 1, 128>}, {transform_indices = @transform_13, window_bounds = array<i64: 1, 128, 512>}, {transform_indices = @transform_14, window_bounds = array<i64: 1, 1, 512>}, {transform_indices = @transform_15, window_bounds = array<i64: 1, 512, 128>}, {transform_indices = @transform_16, window_bounds = array<i64: 1, 1, 128>}, {pipeline_mode = #tpu.pipeline_mode<synchronous>, transform_indices = @transform_17, window_bounds = array<i64: 128, 64>}, {pipeline_mode = #tpu.pipeline_mode<synchronous>, transform_indices = @transform_18, window_bounds = array<i64: 1, 64>}, {pipeline_mode = #tpu.pipeline_mode<synchronous>, transform_indices = @transform_19, window_bounds = array<i64: 64, 128>}, {pipeline_mode = #tpu.pipeline_mode<synchronous>, transform_indices = @transform_20, window_bounds = array<i64: 1, 128>}, {pipeline_mode = #tpu.pipeline_mode<synchronous>, transform_indices = @transform_21, window_bounds = array<i64: 128, 128>}, {pipeline_mode = #tpu.pipeline_mode<synchronous>, transform_indices = @transform_22, window_bounds = array<i64: 1, 128>}, {transform_indices = @transform_23, window_bounds = array<i64: 1, 1, 128>}]} {
    %c0_i32 = arith.constant 0 : i32
    %0 = arith.cmpi eq, %arg1, %c0_i32 : i32
    %1 = arith.extui %0 : i1 to i32
    %c0_i32_0 = arith.constant 0 : i32
    %2 = arith.cmpi ne, %1, %c0_i32_0 : i32
    scf.if %2 {
      %c0_53 = arith.constant 0 : index
      %c0_54 = arith.constant 0 : index
      %c0_55 = arith.constant 0 : index
      %115 = vector.load %arg2[%c0_53, %c0_54, %c0_55] : memref<1x64x4xbf16, #tpu.memory_space<vmem>>, vector<1x64x4xbf16>
      %116 = vector.shape_cast %115 : vector<1x64x4xbf16> to vector<64x4xbf16>
      %c0_56 = arith.constant 0 : index
      %c0_57 = arith.constant 0 : index
      %117 = vector.load %arg3[%c0_56, %c0_57] : memref<4x128xbf16, #tpu.memory_space<vmem>>, vector<4x128xbf16>
      %cst_58 = arith.constant dense<0.000000e+00> : vector<64x128xf32>
      %118 = tpu.matmul %116, %117, %cst_58 {dimension_numbers = #tpu.dot_dimension_numbers<[1], [0], [0], [1], [0, 0, 1, 1], [], []>} : vector<64x4xbf16>, vector<4x128xbf16>, vector<64x128xf32> -> vector<64x128xf32>
      %c0_59 = arith.constant 0 : index
      %c0_60 = arith.constant 0 : index
      %119 = vector.load %arg4[%c0_59, %c0_60] : memref<1x128xf32, #tpu.memory_space<vmem>>, vector<1x128xf32>
      %120 = vector.broadcast %119 : vector<1x128xf32> to vector<64x128xf32>
      %121 = arith.addf %118, %120 : vector<64x128xf32>
      %122 = vector.shape_cast %121 : vector<64x128xf32> to vector<1x64x128xf32>
      %c0_61 = arith.constant 0 : index
      %c0_62 = arith.constant 0 : index
      %123 = vector.load %arg5[%c0_61, %c0_62] : memref<64x128xf32, #tpu.memory_space<vmem>>, vector<64x128xf32>
      %124 = vector.shape_cast %123 : vector<64x128xf32> to vector<1x64x128xf32>
      %125 = arith.addf %122, %124 : vector<1x64x128xf32>
      %c0_63 = arith.constant 0 : index
      %c0_64 = arith.constant 0 : index
      %c0_65 = arith.constant 0 : index
      %126 = vector.load %arg26[%c0_63, %c0_64, %c0_65] : memref<1x64x128xf32, #tpu.memory_space<vmem>>, vector<1x64x128xf32>
      tpu.vector_store %arg26[%c0_63, %c0_64, %c0_65], %125 {strides = array<i32>} : memref<1x64x128xf32, #tpu.memory_space<vmem>>, vector<1x64x128xf32>,
    } else {
    }
    %c0 = arith.constant 0 : index
    %c0_1 = arith.constant 0 : index
    %c0_2 = arith.constant 0 : index
    %3 = vector.load %arg26[%c0, %c0_1, %c0_2] : memref<1x64x128xf32, #tpu.memory_space<vmem>>, vector<1x64x128xf32>
    %c0_3 = arith.constant 0 : index
    %c0_4 = arith.constant 0 : index
    %c0_5 = arith.constant 0 : index
    %4 = vector.load %arg8[%c0_3, %c0_4, %c0_5] : memref<1x1x128xf32, #tpu.memory_space<vmem>>, vector<1x1x128xf32>
    %5 = vector.shape_cast %4 : vector<1x1x128xf32> to vector<1x128xf32>
    %c0_6 = arith.constant 0 : index
    %c0_7 = arith.constant 0 : index
    %c0_8 = arith.constant 0 : index
    %6 = vector.load %arg9[%c0_6, %c0_7, %c0_8] : memref<1x1x128xf32, #tpu.memory_space<vmem>>, vector<1x1x128xf32>
    %7 = vector.shape_cast %6 : vector<1x1x128xf32> to vector<1x128xf32>
    %cst = arith.constant dense<0.000000e+00> : vector<1x64xf32>
    %8 = vector.multi_reduction <add>, %3, %cst [2] : vector<1x64x128xf32> to vector<1x64xf32>
    %9 = vector.shape_cast %8 : vector<1x64xf32> to vector<1x64x1xf32>
    %cst_9 = arith.constant 1.280000e+02 : f32
    %10 = vector.broadcast %cst_9 : f32 to vector<1x64x1xf32>
    %11 = arith.divf %9, %10 : vector<1x64x1xf32>
    %12 = vector.broadcast %11 : vector<1x64x1xf32> to vector<1x64x128xf32>
    %13 = arith.subf %3, %12 : vector<1x64x128xf32>
    %14 = arith.mulf %13, %13 : vector<1x64x128xf32>
    %cst_10 = arith.constant dense<0.000000e+00> : vector<1x64xf32>
    %15 = vector.multi_reduction <add>, %14, %cst_10 [2] : vector<1x64x128xf32> to vector<1x64xf32>
    %16 = vector.shape_cast %15 : vector<1x64xf32> to vector<1x64x1xf32>
    %cst_11 = arith.constant 1.280000e+02 : f32
    %17 = vector.broadcast %cst_11 : f32 to vector<1x64x1xf32>
    %18 = arith.divf %16, %17 : vector<1x64x1xf32>
    %19 = vector.broadcast %11 : vector<1x64x1xf32> to vector<1x64x128xf32>
    %20 = arith.subf %3, %19 : vector<1x64x128xf32>
    %cst_12 = arith.constant 9.99999974E-6 : f32
    %21 = vector.broadcast %cst_12 : f32 to vector<1x64x1xf32>
    %22 = arith.addf %18, %21 : vector<1x64x1xf32>
    %23 = math.rsqrt %22 : vector<1x64x1xf32>
    %24 = vector.broadcast %23 : vector<1x64x1xf32> to vector<1x64x128xf32>
    %25 = arith.mulf %20, %24 : vector<1x64x128xf32>
    %26 = vector.shape_cast %5 : vector<1x128xf32> to vector<1x1x128xf32>
    %27 = vector.broadcast %26 : vector<1x1x128xf32> to vector<1x64x128xf32>
    %28 = arith.mulf %25, %27 : vector<1x64x128xf32>
    %29 = vector.shape_cast %7 : vector<1x128xf32> to vector<1x1x128xf32>
    %30 = vector.broadcast %29 : vector<1x1x128xf32> to vector<1x64x128xf32>
    %31 = arith.addf %28, %30 : vector<1x64x128xf32>
    %32 = vector.shape_cast %31 : vector<1x64x128xf32> to vector<64x128xf32>
    %c0_13 = arith.constant 0 : index
    %c0_14 = arith.constant 0 : index
    %c0_15 = arith.constant 0 : index
    %33 = vector.load %arg10[%c0_13, %c0_14, %c0_15] : memref<1x128x384xbf16, #tpu.memory_space<vmem>>, vector<1x128x384xbf16>
    %34 = vector.shape_cast %33 : vector<1x128x384xbf16> to vector<128x384xbf16>
    %35 = arith.truncf %32 : vector<64x128xf32> to vector<64x128xbf16>
    %cst_16 = arith.constant dense<0.000000e+00> : vector<64x384xf32>
    %36 = tpu.matmul %35, %34, %cst_16 {dimension_numbers = #tpu.dot_dimension_numbers<[1], [0], [0], [1], [0, 0, 1, 1], [], []>} : vector<64x128xbf16>, vector<128x384xbf16>, vector<64x384xf32> -> vector<64x384xf32>
    %37 = vector.shape_cast %36 : vector<64x384xf32> to vector<1x64x384xf32>
    %38 = vector.extract_strided_slice %37 {offsets = [0, 0, 0], sizes = [1, 64, 128], strides = [1, 1, 1]} : vector<1x64x384xf32> to vector<1x64x128xf32>
    %39 = vector.extract_strided_slice %37 {offsets = [0, 0, 128], sizes = [1, 64, 128], strides = [1, 1, 1]} : vector<1x64x384xf32> to vector<1x64x128xf32>
    %40 = vector.extract_strided_slice %37 {offsets = [0, 0, 256], sizes = [1, 64, 128], strides = [1, 1, 1]} : vector<1x64x384xf32> to vector<1x64x128xf32>
    %cst_17 = arith.constant dense<0xFF800000> : vector<1x128xf32>
    %41 = vector.multi_reduction <maximumf>, %39, %cst_17 [1] : vector<1x64x128xf32> to vector<1x128xf32>
    %cst_18 = arith.constant 0xFF800000 : f32
    %42 = vector.broadcast %cst_18 : f32 to vector<1x128xf32>
    %43 = arith.maximumf %42, %41 : vector<1x128xf32>
    %44 = vector.shape_cast %43 : vector<1x128xf32> to vector<1x1x128xf32>
    %45 = vector.broadcast %44 : vector<1x1x128xf32> to vector<1x64x128xf32>
    %46 = arith.subf %39, %45 : vector<1x64x128xf32>
    %47 = math.exp %46 : vector<1x64x128xf32>
    %cst_19 = arith.constant dense<0.000000e+00> : vector<1x128xf32>
    %48 = vector.multi_reduction <add>, %47, %cst_19 [1] : vector<1x64x128xf32> to vector<1x128xf32>
    %49 = vector.shape_cast %48 : vector<1x128xf32> to vector<1x1x128xf32>
    %50 = vector.broadcast %49 : vector<1x1x128xf32> to vector<1x64x128xf32>
    %51 = arith.divf %47, %50 : vector<1x64x128xf32>
    %52 = tpu.transpose %51, [0, 2, 1] : vector<1x64x128xf32> -> vector<1x128x64xf32>
    %53 = arith.truncf %52 : vector<1x128x64xf32> to vector<1x128x64xbf16>
    %54 = arith.truncf %40 : vector<1x64x128xf32> to vector<1x64x128xbf16>
    %cst_20 = arith.constant dense<0.000000e+00> : vector<1x128x128xf32>
    %55 = tpu.matmul %53, %54, %cst_20 {dimension_numbers = #tpu.dot_dimension_numbers<[2], [1], [1], [2], [0, 0, 0, 1, 1, 2], [0], [0]>} : vector<1x128x64xbf16>, vector<1x64x128xbf16>, vector<1x128x128xf32> -> vector<1x128x128xf32>
    %c0_21 = arith.constant 0 : index
    %c0_22 = arith.constant 0 : index
    %56 = vector.load %arg7[%c0_21, %c0_22] : memref<128x128xf32, #tpu.memory_space<vmem>>, vector<128x128xf32>
    %57 = vector.shape_cast %56 : vector<128x128xf32> to vector<1x128x128xf32>
    %58 = arith.mulf %55, %57 : vector<1x128x128xf32>
    %59 = arith.truncf %38 : vector<1x64x128xf32> to vector<1x64x128xbf16>
    %60 = arith.truncf %58 : vector<1x128x128xf32> to vector<1x128x128xbf16>
    %cst_23 = arith.constant dense<0.000000e+00> : vector<1x64x128xf32>
    %61 = tpu.matmul %59, %60, %cst_23 {dimension_numbers = #tpu.dot_dimension_numbers<[2], [1], [1], [2], [0, 0, 0, 1, 1, 2], [0], [0]>} : vector<1x64x128xbf16>, vector<1x128x128xbf16>, vector<1x64x128xf32> -> vector<1x64x128xf32>
    %62 = vector.shape_cast %61 : vector<1x64x128xf32> to vector<64x128xf32>
    %c0_24 = arith.constant 0 : index
    %c0_25 = arith.constant 0 : index
    %c0_26 = arith.constant 0 : index
    %63 = vector.load %arg11[%c0_24, %c0_25, %c0_26] : memref<1x128x128xbf16, #tpu.memory_space<vmem>>, vector<1x128x128xbf16>
    %64 = vector.shape_cast %63 : vector<1x128x128xbf16> to vector<128x128xbf16>
    %65 = arith.truncf %62 : vector<64x128xf32> to vector<64x128xbf16>
    %cst_27 = arith.constant dense<0.000000e+00> : vector<64x128xf32>
    %66 = tpu.matmul %65, %64, %cst_27 {dimension_numbers = #tpu.dot_dimension_numbers<[1], [0], [0], [1], [0, 0, 1, 1], [], []>} : vector<64x128xbf16>, vector<128x128xbf16>, vector<64x128xf32> -> vector<64x128xf32>
    %c0_28 = arith.constant 0 : index
    %c0_29 = arith.constant 0 : index
    %c0_30 = arith.constant 0 : index
    %67 = vector.load %arg12[%c0_28, %c0_29, %c0_30] : memref<1x1x128xf32, #tpu.memory_space<vmem>>, vector<1x1x128xf32>
    %68 = vector.shape_cast %67 : vector<1x1x128xf32> to vector<1x128xf32>
    %69 = vector.broadcast %68 : vector<1x128xf32> to vector<64x128xf32>
    %70 = arith.addf %66, %69 : vector<64x128xf32>
    %71 = vector.shape_cast %70 : vector<64x128xf32> to vector<1x64x128xf32>
    %72 = arith.addf %3, %71 : vector<1x64x128xf32>
    %c0_31 = arith.constant 0 : index
    %c0_32 = arith.constant 0 : index
    %c0_33 = arith.constant 0 : index
    %73 = vector.load %arg13[%c0_31, %c0_32, %c0_33] : memref<1x1x128xf32, #tpu.memory_space<vmem>>, vector<1x1x128xf32>
    %74 = vector.shape_cast %73 : vector<1x1x128xf32> to vector<1x128xf32>
    %c0_34 = arith.constant 0 : index
    %c0_35 = arith.constant 0 : index
    %c0_36 = arith.constant 0 : index
    %75 = vector.load %arg14[%c0_34, %c0_35, %c0_36] : memref<1x1x128xf32, #tpu.memory_space<vmem>>, vector<1x1x128xf32>
    %76 = vector.shape_cast %75 : vector<1x1x128xf32> to vector<1x128xf32>
    %cst_37 = arith.constant dense<0.000000e+00> : vector<1x64xf32>
    %77 = vector.multi_reduction <add>, %72, %cst_37 [2] : vector<1x64x128xf32> to vector<1x64xf32>
    %78 = vector.shape_cast %77 : vector<1x64xf32> to vector<1x64x1xf32>
    %cst_38 = arith.constant 1.280000e+02 : f32
    %79 = vector.broadcast %cst_38 : f32 to vector<1x64x1xf32>
    %80 = arith.divf %78, %79 : vector<1x64x1xf32>
    %81 = vector.broadcast %80 : vector<1x64x1xf32> to vector<1x64x128xf32>
    %82 = arith.subf %72, %81 : vector<1x64x128xf32>
    %83 = arith.mulf %82, %82 : vector<1x64x128xf32>
    %cst_39 = arith.constant dense<0.000000e+00> : vector<1x64xf32>
    %84 = vector.multi_reduction <add>, %83, %cst_39 [2] : vector<1x64x128xf32> to vector<1x64xf32>
    %85 = vector.shape_cast %84 : vector<1x64xf32> to vector<1x64x1xf32>
    %cst_40 = arith.constant 1.280000e+02 : f32
    %86 = vector.broadcast %cst_40 : f32 to vector<1x64x1xf32>
    %87 = arith.divf %85, %86 : vector<1x64x1xf32>
    %88 = vector.broadcast %80 : vector<1x64x1xf32> to vector<1x64x128xf32>
    %89 = arith.subf %72, %88 : vector<1x64x128xf32>
    %cst_41 = arith.constant 9.99999974E-6 : f32
    %90 = vector.broadcast %cst_41 : f32 to vector<1x64x1xf32>
    %91 = arith.addf %87, %90 : vector<1x64x1xf32>
    %92 = math.rsqrt %91 : vector<1x64x1xf32>
    %93 = vector.broadcast %92 : vector<1x64x1xf32> to vector<1x64x128xf32>
    %94 = arith.mulf %89, %93 : vector<1x64x128xf32>
    %95 = vector.shape_cast %74 : vector<1x128xf32> to vector<1x1x128xf32>
    %96 = vector.broadcast %95 : vector<1x1x128xf32> to vector<1x64x128xf32>
    %97 = arith.mulf %94, %96 : vector<1x64x128xf32>
    %98 = vector.shape_cast %76 : vector<1x128xf32> to vector<1x1x128xf32>
    %99 = vector.broadcast %98 : vector<1x1x128xf32> to vector<1x64x128xf32>
    %100 = arith.addf %97, %99 : vector<1x64x128xf32>
    %101 = vector.shape_cast %100 : vector<1x64x128xf32> to vector<64x128xf32>
    %cst_42 = arith.constant 0.000000e+00 : f32
    %102 = vector.broadcast %cst_42 : f32 to vector<64x128xf32>
    %c0_43 = arith.constant 0 : index
    %c0_44 = arith.constant 0 : index
    %c0_45 = arith.constant 0 : index
    %103 = vector.load %arg18[%c0_43, %c0_44, %c0_45] : memref<1x1x128xf32, #tpu.memory_space<vmem>>, vector<1x1x128xf32>
    %104 = vector.shape_cast %103 : vector<1x1x128xf32> to vector<1x128xf32>
    %105 = vector.broadcast %104 : vector<1x128xf32> to vector<64x128xf32>
    %106 = arith.addf %102, %105 : vector<64x128xf32>
    %c0_i32_46 = arith.constant 0 : i32
    %c4_i32 = arith.constant 4 : i32
    %107 = arith.addi %c0_i32_46, %c4_i32 : i32
    %c1_i32 = arith.constant 1 : i32
    %108 = scf.for %arg27 = %c0_i32_46 to %107 step %c1_i32 iter_args(%arg28 = %106) -> (vector<64x128xf32>)  : i32 {
      %c128_i32 = arith.constant 128 : i32
      %115 = arith.muli %arg27, %c128_i32 : i32
      %116 = tpu.assume_multiple %115, 128 : i32
      %c0_53 = arith.constant 0 : index
      %c0_54 = arith.constant 0 : index
      %117 = arith.index_cast %116 : i32 to index
      %118 = vector.load %arg15[%c0_53, %c0_54, %117] : memref<1x128x512xbf16, #tpu.memory_space<vmem>>, vector<1x128x128xbf16>
      %119 = vector.shape_cast %118 : vector<1x128x128xbf16> to vector<128x128xbf16>
      %c0_55 = arith.constant 0 : index
      %c0_56 = arith.constant 0 : index
      %120 = arith.index_cast %116 : i32 to index
      %121 = vector.load %arg16[%c0_55, %c0_56, %120] : memref<1x1x512xf32, #tpu.memory_space<vmem>>, vector<1x1x128xf32>
      %122 = vector.shape_cast %121 : vector<1x1x128xf32> to vector<1x128xf32>
      %c0_57 = arith.constant 0 : index
      %123 = arith.index_cast %116 : i32 to index
      %c0_58 = arith.constant 0 : index
      %124 = vector.load %arg17[%c0_57, %123, %c0_58] : memref<1x512x128xbf16, #tpu.memory_space<vmem>>, vector<1x128x128xbf16>
      %125 = vector.shape_cast %124 : vector<1x128x128xbf16> to vector<128x128xbf16>
      %126 = arith.truncf %101 : vector<64x128xf32> to vector<64x128xbf16>
      %cst_59 = arith.constant dense<0.000000e+00> : vector<64x128xf32>
      %127 = tpu.matmul %126, %119, %cst_59 {dimension_numbers = #tpu.dot_dimension_numbers<[1], [0], [0], [1], [0, 0, 1, 1], [], []>} : vector<64x128xbf16>, vector<128x128xbf16>, vector<64x128xf32> -> vector<64x128xf32>
      %128 = vector.broadcast %122 : vector<1x128xf32> to vector<64x128xf32>
      %129 = arith.addf %127, %128 : vector<64x128xf32>
      %cst_60 = arith.constant 5.000000e-01 : f32
      %130 = vector.broadcast %cst_60 : f32 to vector<64x128xf32>
      %131 = arith.mulf %130, %129 : vector<64x128xf32>
      %cst_61 = arith.constant 0.707106769 : f32
      %132 = vector.broadcast %cst_61 : f32 to vector<64x128xf32>
      %133 = arith.mulf %129, %132 : vector<64x128xf32>
      %134 = math.absf %133 : vector<64x128xf32>
      %cst_62 = arith.constant 0.327591091 : f32
      %135 = vector.broadcast %cst_62 : f32 to vector<64x128xf32>
      %136 = arith.mulf %135, %134 : vector<64x128xf32>
      %cst_63 = arith.constant 1.000000e+00 : f32
      %137 = vector.broadcast %cst_63 : f32 to vector<64x128xf32>
      %138 = arith.addf %137, %136 : vector<64x128xf32>
      %139 = tpu.reciprocal %138 {approx = true} : vector<64x128xf32> -> vector<64x128xf32>
      %cst_64 = arith.constant 1.06140542 : f32
      %140 = vector.broadcast %cst_64 : f32 to vector<64x128xf32>
      %141 = arith.mulf %140, %139 : vector<64x128xf32>
      %cst_65 = arith.constant -1.45315206 : f32
      %142 = vector.broadcast %cst_65 : f32 to vector<64x128xf32>
      %143 = arith.addf %141, %142 : vector<64x128xf32>
      %144 = arith.mulf %143, %139 : vector<64x128xf32>
      %cst_66 = arith.constant 1.42141378 : f32
      %145 = vector.broadcast %cst_66 : f32 to vector<64x128xf32>
      %146 = arith.addf %144, %145 : vector<64x128xf32>
      %147 = arith.mulf %146, %139 : vector<64x128xf32>
      %cst_67 = arith.constant -0.284496725 : f32
      %148 = vector.broadcast %cst_67 : f32 to vector<64x128xf32>
      %149 = arith.addf %147, %148 : vector<64x128xf32>
      %150 = arith.mulf %149, %139 : vector<64x128xf32>
      %cst_68 = arith.constant 0.254829586 : f32
      %151 = vector.broadcast %cst_68 : f32 to vector<64x128xf32>
      %152 = arith.addf %150, %151 : vector<64x128xf32>
      %153 = arith.mulf %152, %139 : vector<64x128xf32>
      %cst_69 = arith.constant 0.000000e+00 : f32
      %154 = vector.broadcast %cst_69 : f32 to vector<64x128xf32>
      %155 = arith.subf %154, %134 : vector<64x128xf32>
      %156 = arith.mulf %155, %134 : vector<64x128xf32>
      %157 = math.exp %156 : vector<64x128xf32>
      %158 = arith.mulf %153, %157 : vector<64x128xf32>
      %cst_70 = arith.constant 1.000000e+00 : f32
      %159 = vector.broadcast %cst_70 : f32 to vector<64x128xf32>
      %160 = arith.subf %159, %158 : vector<64x128xf32>
      %cst_71 = arith.constant 0.000000e+00 : f32
      %161 = vector.broadcast %cst_71 : f32 to vector<64x128xf32>
      %162 = arith.cmpf oge, %133, %161 : vector<64x128xf32>
      %cst_72 = arith.constant 0.000000e+00 : f32
      %163 = vector.broadcast %cst_72 : f32 to vector<64x128xf32>
      %164 = arith.subf %163, %160 : vector<64x128xf32>
      %165 = arith.select %162, %160, %164 : vector<64x128xi1>, vector<64x128xf32>
      %cst_73 = arith.constant 1.000000e+00 : f32
      %166 = vector.broadcast %cst_73 : f32 to vector<64x128xf32>
      %167 = arith.addf %166, %165 : vector<64x128xf32>
      %168 = arith.mulf %131, %167 : vector<64x128xf32>
      %169 = arith.truncf %168 : vector<64x128xf32> to vector<64x128xbf16>
      %cst_74 = arith.constant dense<0.000000e+00> : vector<64x128xf32>
      %170 = tpu.matmul %169, %125, %cst_74 {dimension_numbers = #tpu.dot_dimension_numbers<[1], [0], [0], [1], [0, 0, 1, 1], [], []>} : vector<64x128xbf16>, vector<128x128xbf16>, vector<64x128xf32> -> vector<64x128xf32>
      %171 = arith.addf %arg28, %170 : vector<64x128xf32>
      scf.yield %171 : vector<64x128xf32>
    }
    %c4_i32_47 = arith.constant 4 : i32
    %109 = vector.shape_cast %108 : vector<64x128xf32> to vector<1x64x128xf32>
    %110 = arith.addf %72, %109 : vector<1x64x128xf32>
    %c0_48 = arith.constant 0 : index
    %c0_49 = arith.constant 0 : index
    %c0_50 = arith.constant 0 : index
    %111 = vector.load %arg26[%c0_48, %c0_49, %c0_50] : memref<1x64x128xf32, #tpu.memory_space<vmem>>, vector<1x64x128xf32>
    tpu.vector_store %arg26[%c0_48, %c0_49, %c0_50], %110 {strides = array<i32>} : memref<1x64x128xf32, #tpu.memory_space<vmem>>, vector<1x64x128xf32>,
    %c1_i32_51 = arith.constant 1 : i32
    %112 = arith.cmpi eq, %arg1, %c1_i32_51 : i32
    %113 = arith.extui %112 : i1 to i32
    %c0_i32_52 = arith.constant 0 : i32
    %114 = arith.cmpi ne, %113, %c0_i32_52 : i32
    scf.if %114 {
      %cst_53 = arith.constant dense<0.000000e+00> : vector<1x128xf32>
      %115 = vector.multi_reduction <add>, %110, %cst_53 [1] : vector<1x64x128xf32> to vector<1x128xf32>
      %cst_54 = arith.constant 1.562500e-02 : f32
      %116 = vector.broadcast %cst_54 : f32 to vector<1x128xf32>
      %117 = arith.mulf %115, %116 : vector<1x128xf32>
      %c0_55 = arith.constant 0 : index
      %c0_56 = arith.constant 0 : index
      %118 = vector.load %arg19[%c0_55, %c0_56] : memref<128x64xbf16, #tpu.memory_space<vmem>>, vector<128x64xbf16>
      %119 = arith.truncf %117 : vector<1x128xf32> to vector<1x128xbf16>
      %cst_57 = arith.constant dense<0.000000e+00> : vector<1x64xf32>
      %120 = tpu.matmul %119, %118, %cst_57 {dimension_numbers = #tpu.dot_dimension_numbers<[1], [0], [0], [1], [0, 0, 1, 1], [], []>} : vector<1x128xbf16>, vector<128x64xbf16>, vector<1x64xf32> -> vector<1x64xf32>
      %c0_58 = arith.constant 0 : index
      %c0_59 = arith.constant 0 : index
      %121 = vector.load %arg20[%c0_58, %c0_59] : memref<1x64xf32, #tpu.memory_space<vmem>>, vector<1x64xf32>
      %122 = arith.addf %120, %121 : vector<1x64xf32>
      %cst_60 = arith.constant 5.000000e-01 : f32
      %123 = vector.broadcast %cst_60 : f32 to vector<1x64xf32>
      %124 = arith.mulf %123, %122 : vector<1x64xf32>
      %cst_61 = arith.constant 0.707106769 : f32
      %125 = vector.broadcast %cst_61 : f32 to vector<1x64xf32>
      %126 = arith.mulf %122, %125 : vector<1x64xf32>
      %127 = math.absf %126 : vector<1x64xf32>
      %cst_62 = arith.constant 0.327591091 : f32
      %128 = vector.broadcast %cst_62 : f32 to vector<1x64xf32>
      %129 = arith.mulf %128, %127 : vector<1x64xf32>
      %cst_63 = arith.constant 1.000000e+00 : f32
      %130 = vector.broadcast %cst_63 : f32 to vector<1x64xf32>
      %131 = arith.addf %130, %129 : vector<1x64xf32>
      %132 = tpu.reciprocal %131 {approx = true} : vector<1x64xf32> -> vector<1x64xf32>
      %cst_64 = arith.constant 1.06140542 : f32
      %133 = vector.broadcast %cst_64 : f32 to vector<1x64xf32>
      %134 = arith.mulf %133, %132 : vector<1x64xf32>
      %cst_65 = arith.constant -1.45315206 : f32
      %135 = vector.broadcast %cst_65 : f32 to vector<1x64xf32>
      %136 = arith.addf %134, %135 : vector<1x64xf32>
      %137 = arith.mulf %136, %132 : vector<1x64xf32>
      %cst_66 = arith.constant 1.42141378 : f32
      %138 = vector.broadcast %cst_66 : f32 to vector<1x64xf32>
      %139 = arith.addf %137, %138 : vector<1x64xf32>
      %140 = arith.mulf %139, %132 : vector<1x64xf32>
      %cst_67 = arith.constant -0.284496725 : f32
      %141 = vector.broadcast %cst_67 : f32 to vector<1x64xf32>
      %142 = arith.addf %140, %141 : vector<1x64xf32>
      %143 = arith.mulf %142, %132 : vector<1x64xf32>
      %cst_68 = arith.constant 0.254829586 : f32
      %144 = vector.broadcast %cst_68 : f32 to vector<1x64xf32>
      %145 = arith.addf %143, %144 : vector<1x64xf32>
      %146 = arith.mulf %145, %132 : vector<1x64xf32>
      %cst_69 = arith.constant 0.000000e+00 : f32
      %147 = vector.broadcast %cst_69 : f32 to vector<1x64xf32>
      %148 = arith.subf %147, %127 : vector<1x64xf32>
      %149 = arith.mulf %148, %127 : vector<1x64xf32>
      %150 = math.exp %149 : vector<1x64xf32>
      %151 = arith.mulf %146, %150 : vector<1x64xf32>
      %cst_70 = arith.constant 1.000000e+00 : f32
      %152 = vector.broadcast %cst_70 : f32 to vector<1x64xf32>
      %153 = arith.subf %152, %151 : vector<1x64xf32>
      %cst_71 = arith.constant 0.000000e+00 : f32
      %154 = vector.broadcast %cst_71 : f32 to vector<1x64xf32>
      %155 = arith.cmpf oge, %126, %154 : vector<1x64xf32>
      %cst_72 = arith.constant 0.000000e+00 : f32
      %156 = vector.broadcast %cst_72 : f32 to vector<1x64xf32>
      %157 = arith.subf %156, %153 : vector<1x64xf32>
      %158 = arith.select %155, %153, %157 : vector<1x64xi1>, vector<1x64xf32>
      %cst_73 = arith.constant 1.000000e+00 : f32
      %159 = vector.broadcast %cst_73 : f32 to vector<1x64xf32>
      %160 = arith.addf %159, %158 : vector<1x64xf32>
      %161 = arith.mulf %124, %160 : vector<1x64xf32>
      %c0_74 = arith.constant 0 : index
      %c0_75 = arith.constant 0 : index
      %162 = vector.load %arg21[%c0_74, %c0_75] : memref<64x128xbf16, #tpu.memory_space<vmem>>, vector<64x128xbf16>
      %163 = arith.truncf %161 : vector<1x64xf32> to vector<1x64xbf16>
      %cst_76 = arith.constant dense<0.000000e+00> : vector<1x128xf32>
      %164 = tpu.matmul %163, %162, %cst_76 {dimension_numbers = #tpu.dot_dimension_numbers<[1], [0], [0], [1], [0, 0, 1, 1], [], []>} : vector<1x64xbf16>, vector<64x128xbf16>, vector<1x128xf32> -> vector<1x128xf32>
      %c0_77 = arith.constant 0 : index
      %c0_78 = arith.constant 0 : index
      %165 = vector.load %arg22[%c0_77, %c0_78] : memref<1x128xf32, #tpu.memory_space<vmem>>, vector<1x128xf32>
      %166 = arith.addf %164, %165 : vector<1x128xf32>
      %c0_79 = arith.constant 0 : index
      %c0_80 = arith.constant 0 : index
      %167 = vector.load %arg23[%c0_79, %c0_80] : memref<128x128xbf16, #tpu.memory_space<vmem>>, vector<128x128xbf16>
      %168 = arith.truncf %166 : vector<1x128xf32> to vector<1x128xbf16>
      %cst_81 = arith.constant dense<0.000000e+00> : vector<1x128xf32>
      %169 = tpu.matmul %168, %167, %cst_81 {dimension_numbers = #tpu.dot_dimension_numbers<[1], [0], [0], [1], [0, 0, 1, 1], [], []>} : vector<1x128xbf16>, vector<128x128xbf16>, vector<1x128xf32> -> vector<1x128xf32>
      %c0_82 = arith.constant 0 : index
      %c0_83 = arith.constant 0 : index
      %170 = vector.load %arg24[%c0_82, %c0_83] : memref<1x128xf32, #tpu.memory_space<vmem>>, vector<1x128xf32>
      %171 = arith.addf %169, %170 : vector<1x128xf32>
      %c0_84 = arith.constant 0 : index
      %c0_85 = arith.constant 0 : index
      %c0_86 = arith.constant 0 : index
      %172 = vector.load %arg25[%c0_84, %c0_85, %c0_86] : memref<1x1x128xf32, #tpu.memory_space<vmem>>, vector<1x1x128xf32>
      %173 = vector.shape_cast %172 : vector<1x1x128xf32> to vector<1x128xf32>
      %174 = vector.shape_cast %171 : vector<1x128xf32> to vector<1x1x128xf32>
      tpu.vector_store %arg25[%c0_84, %c0_85, %c0_86], %174 {strides = array<i32>} : memref<1x1x128xf32, #tpu.memory_space<vmem>>, vector<1x1x128xf32>,
    } else {
    }
    return
  }
  func.func @transform_0(%arg0: i32, %arg1: i32) -> (i32, i32, i32) {
    %c0_i32 = arith.constant 0 : i32
    %c0_i32_0 = arith.constant 0 : i32
    %c0_i32_1 = arith.constant 0 : i32
    return %arg0, %c0_i32, %c0_i32_0 : i32, i32, i32
  }
  func.func @transform_1(%arg0: i32, %arg1: i32) -> (i32, i32) {
    %c0_i32 = arith.constant 0 : i32
    %c0_i32_0 = arith.constant 0 : i32
    %c0_i32_1 = arith.constant 0 : i32
    return %c0_i32, %c0_i32_0 : i32, i32
  }
  func.func @transform_2(%arg0: i32, %arg1: i32) -> (i32, i32) {
    %c0_i32 = arith.constant 0 : i32
    %c0_i32_0 = arith.constant 0 : i32
    %c0_i32_1 = arith.constant 0 : i32
    return %c0_i32, %c0_i32_0 : i32, i32
  }
  func.func @transform_3(%arg0: i32, %arg1: i32) -> (i32, i32) {
    %c0_i32 = arith.constant 0 : i32
    %c0_i32_0 = arith.constant 0 : i32
    %c0_i32_1 = arith.constant 0 : i32
    return %c0_i32, %c0_i32_0 : i32, i32
  }
  func.func @transform_4(%arg0: i32, %arg1: i32) -> (i32, i32) {
    %c0_i32 = arith.constant 0 : i32
    %c0_i32_0 = arith.constant 0 : i32
    %c0_i32_1 = arith.constant 0 : i32
    return %c0_i32, %c0_i32_0 : i32, i32
  }
  func.func @transform_5(%arg0: i32, %arg1: i32) -> (i32, i32) {
    %c0_i32 = arith.constant 0 : i32
    %c0_i32_0 = arith.constant 0 : i32
    %c0_i32_1 = arith.constant 0 : i32
    return %c0_i32, %c0_i32_0 : i32, i32
  }
  func.func @transform_6(%arg0: i32, %arg1: i32) -> (i32, i32, i32) {
    %c0_i32 = arith.constant 0 : i32
    %c0_i32_0 = arith.constant 0 : i32
    %c0_i32_1 = arith.constant 0 : i32
    return %arg1, %c0_i32, %c0_i32_0 : i32, i32, i32
  }
  func.func @transform_7(%arg0: i32, %arg1: i32) -> (i32, i32, i32) {
    %c0_i32 = arith.constant 0 : i32
    %c0_i32_0 = arith.constant 0 : i32
    %c0_i32_1 = arith.constant 0 : i32
    return %arg1, %c0_i32, %c0_i32_0 : i32, i32, i32
  }
  func.func @transform_8(%arg0: i32, %arg1: i32) -> (i32, i32, i32) {
    %c0_i32 = arith.constant 0 : i32
    %c0_i32_0 = arith.constant 0 : i32
    %c0_i32_1 = arith.constant 0 : i32
    return %arg1, %c0_i32, %c0_i32_0 : i32, i32, i32
  }
  func.func @transform_9(%arg0: i32, %arg1: i32) -> (i32, i32, i32) {
    %c0_i32 = arith.constant 0 : i32
    %c0_i32_0 = arith.constant 0 : i32
    %c0_i32_1 = arith.constant 0 : i32
    return %arg1, %c0_i32, %c0_i32_0 : i32, i32, i32
  }
  func.func @transform_10(%arg0: i32, %arg1: i32) -> (i32, i32, i32) {
    %c0_i32 = arith.constant 0 : i32
    %c0_i32_0 = arith.constant 0 : i32
    %c0_i32_1 = arith.constant 0 : i32
    return %arg1, %c0_i32, %c0_i32_0 : i32, i32, i32
  }
  func.func @transform_11(%arg0: i32, %arg1: i32) -> (i32, i32, i32) {
    %c0_i32 = arith.constant 0 : i32
    %c0_i32_0 = arith.constant 0 : i32
    %c0_i32_1 = arith.constant 0 : i32
    return %arg1, %c0_i32, %c0_i32_0 : i32, i32, i32
  }
  func.func @transform_12(%arg0: i32, %arg1: i32) -> (i32, i32, i32) {
    %c0_i32 = arith.constant 0 : i32
    %c0_i32_0 = arith.constant 0 : i32
    %c0_i32_1 = arith.constant 0 : i32
    return %arg1, %c0_i32, %c0_i32_0 : i32, i32, i32
  }
  func.func @transform_13(%arg0: i32, %arg1: i32) -> (i32, i32, i32) {
    %c0_i32 = arith.constant 0 : i32
    %c0_i32_0 = arith.constant 0 : i32
    %c0_i32_1 = arith.constant 0 : i32
    return %arg1, %c0_i32, %c0_i32_0 : i32, i32, i32
  }
  func.func @transform_14(%arg0: i32, %arg1: i32) -> (i32, i32, i32) {
    %c0_i32 = arith.constant 0 : i32
    %c0_i32_0 = arith.constant 0 : i32
    %c0_i32_1 = arith.constant 0 : i32
    return %arg1, %c0_i32, %c0_i32_0 : i32, i32, i32
  }
  func.func @transform_15(%arg0: i32, %arg1: i32) -> (i32, i32, i32) {
    %c0_i32 = arith.constant 0 : i32
    %c0_i32_0 = arith.constant 0 : i32
    %c0_i32_1 = arith.constant 0 : i32
    return %arg1, %c0_i32, %c0_i32_0 : i32, i32, i32
  }
  func.func @transform_16(%arg0: i32, %arg1: i32) -> (i32, i32, i32) {
    %c0_i32 = arith.constant 0 : i32
    %c0_i32_0 = arith.constant 0 : i32
    %c0_i32_1 = arith.constant 0 : i32
    return %arg1, %c0_i32, %c0_i32_0 : i32, i32, i32
  }
  func.func @transform_17(%arg0: i32, %arg1: i32) -> (i32, i32) {
    %c0_i32 = arith.constant 0 : i32
    %c0_i32_0 = arith.constant 0 : i32
    %c0_i32_1 = arith.constant 0 : i32
    return %c0_i32, %c0_i32_0 : i32, i32
  }
  func.func @transform_18(%arg0: i32, %arg1: i32) -> (i32, i32) {
    %c0_i32 = arith.constant 0 : i32
    %c0_i32_0 = arith.constant 0 : i32
    %c0_i32_1 = arith.constant 0 : i32
    return %c0_i32, %c0_i32_0 : i32, i32
  }
  func.func @transform_19(%arg0: i32, %arg1: i32) -> (i32, i32) {
    %c0_i32 = arith.constant 0 : i32
    %c0_i32_0 = arith.constant 0 : i32
    %c0_i32_1 = arith.constant 0 : i32
    return %c0_i32, %c0_i32_0 : i32, i32
  }
  func.func @transform_20(%arg0: i32, %arg1: i32) -> (i32, i32) {
    %c0_i32 = arith.constant 0 : i32
    %c0_i32_0 = arith.constant 0 : i32
    %c0_i32_1 = arith.constant 0 : i32
    return %c0_i32, %c0_i32_0 : i32, i32
  }
  func.func @transform_21(%arg0: i32, %arg1: i32) -> (i32, i32) {
    %c0_i32 = arith.constant 0 : i32
    %c0_i32_0 = arith.constant 0 : i32
    %c0_i32_1 = arith.constant 0 : i32
    return %c0_i32, %c0_i32_0 : i32, i32
  }
  func.func @transform_22(%arg0: i32, %arg1: i32) -> (i32, i32) {
    %c0_i32 = arith.constant 0 : i32
    %c0_i32_0 = arith.constant 0 : i32
    %c0_i32_1 = arith.constant 0 : i32
    return %c0_i32, %c0_i32_0 : i32, i32
  }
  func.func @transform_23(%arg0: i32, %arg1: i32) -> (i32, i32, i32) {
    %c0_i32 = arith.constant 0 : i32
    %c0_i32_0 = arith.constant 0 : i32
    %c0_i32_1 = arith.constant 0 : i32
    return %arg0, %c0_i32, %c0_i32_0 : i32, i32, i32
  }
}

</mosaic_0001>

<llo_original>
// kernel: tpu_custom_call.1
$region0: #{tpu_custom_call.1}
  #allocation0 [shape = 'u32[]', space=smem, size = 0x4, offset = 0x4, fixed_abs, tag = 'smem constant byte address 0x4 - core index']
  #allocation1 [shape = 'u32[144,128]{1,0:T(1,128)}', space=vmem, size = 0x12000, scoped, tag = 'internal scratch']
  #allocation2 [shape = 'f32[1,64,128]{2,1,0:T(8,128)}', space=vmem, size = 0x8000, scoped, tag = 'scratch operand']
  %s0 = inlined_call_operand.vmem [shape: bf16[2,64,4], index: 0, kind: input, shape index: {}]
  %s1 = inlined_call_operand.hbm [shape: bf16[4,128], index: 1, kind: input, shape index: {}]
  %s2 = inlined_call_operand.vmem [shape: f32[1,128], index: 2, kind: input, shape index: {}]
  %s3 = inlined_call_operand.hbm [shape: f32[64,128], index: 3, kind: input, shape index: {}]
  %s4 = inlined_call_operand.vmem [shape: f32[64,1], index: 4, kind: input, shape index: {}]
  %s5 = inlined_call_operand.vmem [shape: f32[128,128], index: 5, kind: input, shape index: {}]
  %s6 = inlined_call_operand.hbm [shape: f32[2,1,128], index: 6, kind: input, shape index: {}]
  %s7 = inlined_call_operand.hbm [shape: f32[2,1,128], index: 7, kind: input, shape index: {}]
  %s8 = inlined_call_operand.hbm [shape: bf16[2,128,384], index: 8, kind: input, shape index: {}]
  %s9 = inlined_call_operand.vmem [shape: bf16[2,128,128], index: 9, kind: input, shape index: {}]
  %s10 = inlined_call_operand.hbm [shape: f32[2,1,128], index: 10, kind: input, shape index: {}]
  %s11 = inlined_call_operand.hbm [shape: f32[2,1,128], index: 11, kind: input, shape index: {}]
  %s12 = inlined_call_operand.hbm [shape: f32[2,1,128], index: 12, kind: input, shape index: {}]
  %s13 = inlined_call_operand.hbm [shape: bf16[2,128,512], index: 13, kind: input, shape index: {}]
  %s14 = inlined_call_operand.hbm [shape: f32[2,1,512], index: 14, kind: input, shape index: {}]
  %s15 = inlined_call_operand.hbm [shape: bf16[2,512,128], index: 15, kind: input, shape index: {}]
  %s16 = inlined_call_operand.hbm [shape: f32[2,1,128], index: 16, kind: input, shape index: {}]
  %s17 = inlined_call_operand.vmem [shape: bf16[128,64], index: 17, kind: input, shape index: {}]
  %s18 = inlined_call_operand.vmem [shape: f32[1,64], index: 18, kind: input, shape index: {}]
  %s19 = inlined_call_operand.vmem [shape: bf16[64,128], index: 19, kind: input, shape index: {}]
  %s20 = inlined_call_operand.vmem [shape: f32[1,128], index: 20, kind: input, shape index: {}]
  %s21 = inlined_call_operand.hbm [shape: bf16[128,128], index: 21, kind: input, shape index: {}]
  %s22 = inlined_call_operand.vmem [shape: f32[1,128], index: 22, kind: input, shape index: {}]
  %s23 = inlined_call_operand.hbm [shape: f32[2,1,128], index: 23, kind: output, shape index: {}]
  %s24 = sld [smem:[#allocation0]]
  $region192: #{tpu_custom_call.1} parent=0
    _
  %s26 = ssub.s32 1, %s24
  %s27 = scalar_select 0, %s26, %s24
  $region1: #{tpu_custom_call.1} parent=0
    #allocation3 [shape = 'u8[1024]{0}', space=vmem, size = 0x400, scoped, tag = 'input window, operand 1, single buffered']
    #allocation4 [shape = 's32[2]{0}', space=sflag, size = 0x8, scoped, tag = 'scoped memory for tpu_custom_call.1']
    #allocation5 [shape = 's32[2]{0}', space=sflag, size = 0x8, scoped, tag = 'scoped memory for tpu_custom_call.1']
    #allocation6 [shape = 'u8[32768]{0}', space=vmem, size = 0x8000, scoped, tag = 'input window, operand 3, single buffered']
    #allocation7 [shape = 's32[1]{0}', space=sflag, size = 0x4, scoped, tag = 'scoped memory for tpu_custom_call.1']
    #allocation8 [shape = 'u8[1024]{0}', space=vmem, size = 0x400, scoped, tag = 'input window, operand 6']
    #allocation9 [shape = 'u8[1024]{0}', space=vmem, size = 0x400, scoped, tag = 'input window, operand 7']
    #allocation10 [shape = 'u8[196608]{0}', space=vmem, size = 0x30000, scoped, tag = 'input window, operand 8']
    #allocation11 [shape = 'u8[1024]{0}', space=vmem, size = 0x400, scoped, tag = 'input window, operand 10']
    #allocation12 [shape = 'u8[1024]{0}', space=vmem, size = 0x400, scoped, tag = 'input window, operand 11']
    #allocation13 [shape = 'u8[1024]{0}', space=vmem, size = 0x400, scoped, tag = 'input window, operand 12']
    #allocation14 [shape = 'u8[262144]{0}', space=vmem, size = 0x40000, scoped, tag = 'input window, operand 13']
    #allocation15 [shape = 'u8[4096]{0}', space=vmem, size = 0x1000, scoped, tag = 'input window, operand 14']
    #allocation16 [shape = 'u8[262144]{0}', space=vmem, size = 0x40000, scoped, tag = 'input window, operand 15']
    #allocation17 [shape = 'u8[1024]{0}', space=vmem, size = 0x400, scoped, tag = 'input window, operand 16']
    #allocation18 [shape = 'u8[32768]{0}', space=vmem, size = 0x8000, scoped, tag = 'input window, operand 21, single buffered']
    #allocation19 [shape = 'u8[1024]{0}', space=vmem, size = 0x400, scoped, tag = 'output window, operand 0']
    %28 = vsyncpa [#allocation4], 0
    %29 = vsyncpa [#allocation7], 0
    %30 = vsyncpa [#allocation5], 0
    %s31 = scalar_lea.sflag [#allocation5], 1
    %32 = vsyncpa %s31, 0
    loop: start=0, step=1, limit=6
    $region2: #{tpu_custom_call.1} parent=1 // loop_pre_header
      _
    $region3: #{tpu_custom_call.1} parent=1 // loop_header
      %s34 = sphi 0, %s38
      %p35 = scmp.ge.s32.totalorder %s34, 6
      %s41 = sphi 0, %s53
      %s42 = sphi 0, %s49
      %s43 = sphi 0, %s41
      %s44 = sphi 0, %s42
      %s45 = sphi 0, %s43
      %s46 = sphi 0, %s44
      %s56 = sphi 0, %s58
      %s59 = sphi 0, %s56
      %s60 = sphi 0, %s59
      %s76 = sphi 0, %s60
      %s80 = sphi 0, %s80
      %s82 = sphi 0, %s80
      %s83 = sphi 0, %s82
      %s97 = sphi 0, %s83
      %s101 = sphi 0, %s101
      %s103 = sphi 0, %s101
      %s104 = sphi 0, %s103
      %s118 = sphi 0, %s104
      %s122 = sphi 0, %s122
      %s124 = sphi 0, %s122
      %s125 = sphi 0, %s124
      %s139 = sphi 0, %s125
      %s143 = sphi 0, %s143
      %s145 = sphi 0, %s143
      %s146 = sphi 0, %s145
      %s160 = sphi 0, %s146
      %s164 = sphi 0, %s164
      %s166 = sphi 0, %s164
      %s167 = sphi 0, %s166
      %s181 = sphi 0, %s167
      %s187 = sphi 0, %s189
      %s190 = sphi 0, %s187
      %s191 = sphi 0, %s190
      %s207 = sphi 0, %s191
      %s213 = sphi 0, %s215
      %s216 = sphi 0, %s213
      %s217 = sphi 0, %s216
      %s233 = sphi 0, %s217
      %s239 = sphi 0, %s241
      %s242 = sphi 0, %s239
      %s243 = sphi 0, %s242
      %s259 = sphi 0, %s243
      %s265 = sphi 0, %s267
      %s268 = sphi 0, %s265
      %s269 = sphi 0, %s268
      %s285 = sphi 0, %s269
      %s291 = sphi 0, %s293
      %s294 = sphi 0, %s291
      %s295 = sphi 0, %s294
      %s311 = sphi 0, %s295
      %s317 = sphi 0, %s319
      %s320 = sphi 0, %s317
      %s321 = sphi 0, %s320
      %s337 = sphi 0, %s321
      %s343 = sphi 0, %s345
      %s346 = sphi 0, %s343
      %s347 = sphi 0, %s346
      %s363 = sphi 0, %s347
      %s369 = sphi 0, %s371
      %s372 = sphi 0, %s369
      %s373 = sphi 0, %s372
      %s389 = sphi 0, %s373
      %s395 = sphi 0, %s397
      %s398 = sphi 0, %s395
      %s399 = sphi 0, %s398
      %s415 = sphi 0, %s399
      %s421 = sphi 0, %s423
      %s424 = sphi 0, %s421
      %s425 = sphi 0, %s424
      %s441 = sphi 0, %s425
      %s447 = sphi 0, %s449
      %s450 = sphi 0, %s447
      %s451 = sphi 0, %s450
      %s467 = sphi 0, %s451
      %s471 = sphi 0, %s471
      %s473 = sphi 0, %s471
      %s474 = sphi 0, %s473
      %s488 = sphi 0, %s474
      %s492 = sphi 0, %s492
      %s494 = sphi 0, %s492
      %s495 = sphi 0, %s494
      %s509 = sphi 0, %s495
      %s513 = sphi 0, %s513
      %s515 = sphi 0, %s513
      %s516 = sphi 0, %s515
      %s530 = sphi 0, %s516
      %s534 = sphi 0, %s534
      %s536 = sphi 0, %s534
      %s537 = sphi 0, %s536
      %s551 = sphi 0, %s537
      %s555 = sphi 0, %s555
      %s557 = sphi 0, %s555
      %s558 = sphi 0, %s557
      %s572 = sphi 0, %s558
      %s576 = sphi 0, %s576
      %s578 = sphi 0, %s576
      %s579 = sphi 0, %s578
      %s593 = sphi 0, %s579
      %s599 = sphi 0, %s601
      %s602 = sphi 0, %s599
      %s603 = sphi 0, %s602
      %s619 = sphi 0, %s603
    $region4: #{tpu_custom_call.1} parent=1 // loop_header_branch
      %37 = sbr.rel (%p35) target = $region8
    $region5: #{tpu_custom_call.1} parent=1 // loop_body
      %s39 = ssub.s32 %s34, 1
      %s40 = ssub.s32 %s34, 2
      %s47 = sadd.s32 1, %s42
      %p48 = scmp.ge.s32.totalorder %s47, 2
      %s49 = scalar_select %p48, 0, %s47
      %s50 = sadd.s32 1, %s41
      %s51 = scalar_select %p48, %s50, %s41
      %p52 = scmp.ge.s32.totalorder %s51, 2
      %s53 = scalar_select %p52, 0, %s51
      %s54 = ssub.s32 %s41, %s53
      %p55 = scmp.eq.s32.totalorder %s54, 0
      %s57 = sadd.s32 %s56, 1
      %s58 = scalar_select %p55, %s56, %s57
      %p61 = pneg %p55
      %p62 = scmp.eq.s32.totalorder %s34, 3
      %p63 = por %p61, %p62
      %p64 = scmp.ne.s32.totalorder %s56, %s59
      %p65 = scmp.eq.s32.totalorder %s34, 0
      %p66 = por %p64, %p65
      %p67 = scmp.ne.s32.totalorder %s56, %s59
      %p68 = scmp.eq.s32.totalorder %s39, 3
      %p69 = por %p67, %p68
      %p70 = scmp.ne.s32.totalorder %s59, %s60
      %p71 = scmp.eq.s32.totalorder %s39, 0
      %p72 = por %p70, %p71
      %p73 = scmp.ne.s32.totalorder %s59, %s60
      %p74 = scmp.eq.s32.totalorder %s40, 3
      %p75 = por %p73, %p74
      %p77 = scmp.ne.s32.totalorder %s60, %s76
      %p78 = scmp.eq.s32.totalorder %s40, 0
      %p79 = por %p77, %p78
      %s81 = sadd.s32 %s80, 1
      %p84 = scmp.eq.s32.totalorder %s34, 3
      %p85 = scmp.ne.s32.totalorder %s80, %s82
      %p86 = scmp.eq.s32.totalorder %s34, 0
      %p87 = por %p85, %p86
      %p88 = scmp.ne.s32.totalorder %s80, %s82
      %p89 = scmp.eq.s32.totalorder %s39, 3
      %p90 = por %p88, %p89
      %p91 = scmp.ne.s32.totalorder %s82, %s83
      %p92 = scmp.eq.s32.totalorder %s39, 0
      %p93 = por %p91, %p92
      %p94 = scmp.ne.s32.totalorder %s82, %s83
      %p95 = scmp.eq.s32.totalorder %s40, 3
      %p96 = por %p94, %p95
      %p98 = scmp.ne.s32.totalorder %s83, %s97
      %p99 = scmp.eq.s32.totalorder %s40, 0
      %p100 = por %p98, %p99
      %s102 = sadd.s32 %s101, 1
      %p105 = scmp.eq.s32.totalorder %s34, 3
      %p106 = scmp.ne.s32.totalorder %s101, %s103
      %p107 = scmp.eq.s32.totalorder %s34, 0
      %p108 = por %p106, %p107
      %p109 = scmp.ne.s32.totalorder %s101, %s103
      %p110 = scmp.eq.s32.totalorder %s39, 3
      %p111 = por %p109, %p110
      %p112 = scmp.ne.s32.totalorder %s103, %s104
      %p113 = scmp.eq.s32.totalorder %s39, 0
      %p114 = por %p112, %p113
      %p115 = scmp.ne.s32.totalorder %s103, %s104
      %p116 = scmp.eq.s32.totalorder %s40, 3
      %p117 = por %p115, %p116
      %p119 = scmp.ne.s32.totalorder %s104, %s118
      %p120 = scmp.eq.s32.totalorder %s40, 0
      %p121 = por %p119, %p120
      %s123 = sadd.s32 %s122, 1
      %p126 = scmp.eq.s32.totalorder %s34, 3
      %p127 = scmp.ne.s32.totalorder %s122, %s124
      %p128 = scmp.eq.s32.totalorder %s34, 0
      %p129 = por %p127, %p128
      %p130 = scmp.ne.s32.totalorder %s122, %s124
      %p131 = scmp.eq.s32.totalorder %s39, 3
      %p132 = por %p130, %p131
      %p133 = scmp.ne.s32.totalorder %s124, %s125
      %p134 = scmp.eq.s32.totalorder %s39, 0
      %p135 = por %p133, %p134
      %p136 = scmp.ne.s32.totalorder %s124, %s125
      %p137 = scmp.eq.s32.totalorder %s40, 3
      %p138 = por %p136, %p137
      %p140 = scmp.ne.s32.totalorder %s125, %s139
      %p141 = scmp.eq.s32.totalorder %s40, 0
      %p142 = por %p140, %p141
      %s144 = sadd.s32 %s143, 1
      %p147 = scmp.eq.s32.totalorder %s34, 3
      %p148 = scmp.ne.s32.totalorder %s143, %s145
      %p149 = scmp.eq.s32.totalorder %s34, 0
      %p150 = por %p148, %p149
      %p151 = scmp.ne.s32.totalorder %s143, %s145
      %p152 = scmp.eq.s32.totalorder %s39, 3
      %p153 = por %p151, %p152
      %p154 = scmp.ne.s32.totalorder %s145, %s146
      %p155 = scmp.eq.s32.totalorder %s39, 0
      %p156 = por %p154, %p155
      %p157 = scmp.ne.s32.totalorder %s145, %s146
      %p158 = scmp.eq.s32.totalorder %s40, 3
      %p159 = por %p157, %p158
      %p161 = scmp.ne.s32.totalorder %s146, %s160
      %p162 = scmp.eq.s32.totalorder %s40, 0
      %p163 = por %p161, %p162
      %s165 = sadd.s32 %s164, 1
      %p168 = scmp.eq.s32.totalorder %s34, 3
      %p169 = scmp.ne.s32.totalorder %s164, %s166
      %p170 = scmp.eq.s32.totalorder %s34, 0
      %p171 = por %p169, %p170
      %p172 = scmp.ne.s32.totalorder %s164, %s166
      %p173 = scmp.eq.s32.totalorder %s39, 3
      %p174 = por %p172, %p173
      %p175 = scmp.ne.s32.totalorder %s166, %s167
      %p176 = scmp.eq.s32.totalorder %s39, 0
      %p177 = por %p175, %p176
      %p178 = scmp.ne.s32.totalorder %s166, %s167
      %p179 = scmp.eq.s32.totalorder %s40, 3
      %p180 = por %p178, %p179
      %p182 = scmp.ne.s32.totalorder %s167, %s181
      %p183 = scmp.eq.s32.totalorder %s40, 0
      %p184 = por %p182, %p183
      %s185 = ssub.s32 %s42, %s49
      %p186 = scmp.eq.s32.totalorder %s185, 0
      %s188 = sadd.s32 %s187, 1
      %s189 = scalar_select %p186, %s187, %s188
      %p192 = pneg %p186
      %p193 = scmp.eq.s32.totalorder %s34, 3
      %p194 = por %p192, %p193
      %p195 = scmp.ne.s32.totalorder %s187, %s190
      %p196 = scmp.eq.s32.totalorder %s34, 0
      %p197 = por %p195, %p196
      %p198 = scmp.ne.s32.totalorder %s187, %s190
      %p199 = scmp.eq.s32.totalorder %s39, 3
      %p200 = por %p198, %p199
      %p201 = scmp.ne.s32.totalorder %s190, %s191
      %p202 = scmp.eq.s32.totalorder %s39, 0
      %p203 = por %p201, %p202
      %p204 = scmp.ne.s32.totalorder %s190, %s191
      %p205 = scmp.eq.s32.totalorder %s40, 3
      %p206 = por %p204, %p205
      %p208 = scmp.ne.s32.totalorder %s191, %s207
      %p209 = scmp.eq.s32.totalorder %s40, 0
      %p210 = por %p208, %p209
      %s211 = ssub.s32 %s42, %s49
      %p212 = scmp.eq.s32.totalorder %s211, 0
      %s214 = sadd.s32 %s213, 1
      %s215 = scalar_select %p212, %s213, %s214
      %p218 = pneg %p212
      %p219 = scmp.eq.s32.totalorder %s34, 3
      %p220 = por %p218, %p219
      %p221 = scmp.ne.s32.totalorder %s213, %s216
      %p222 = scmp.eq.s32.totalorder %s34, 0
      %p223 = por %p221, %p222
      %p224 = scmp.ne.s32.totalorder %s213, %s216
      %p225 = scmp.eq.s32.totalorder %s39, 3
      %p226 = por %p224, %p225
      %p227 = scmp.ne.s32.totalorder %s216, %s217
      %p228 = scmp.eq.s32.totalorder %s39, 0
      %p229 = por %p227, %p228
      %p230 = scmp.ne.s32.totalorder %s216, %s217
      %p231 = scmp.eq.s32.totalorder %s40, 3
      %p232 = por %p230, %p231
      %p234 = scmp.ne.s32.totalorder %s217, %s233
      %p235 = scmp.eq.s32.totalorder %s40, 0
      %p236 = por %p234, %p235
      %s237 = ssub.s32 %s42, %s49
      %p238 = scmp.eq.s32.totalorder %s237, 0
      %s240 = sadd.s32 %s239, 1
      %s241 = scalar_select %p238, %s239, %s240
      %p244 = pneg %p238
      %p245 = scmp.eq.s32.totalorder %s34, 3
      %p246 = por %p244, %p245
      %p247 = scmp.ne.s32.totalorder %s239, %s242
      %p248 = scmp.eq.s32.totalorder %s34, 0
      %p249 = por %p247, %p248
      %p250 = scmp.ne.s32.totalorder %s239, %s242
      %p251 = scmp.eq.s32.totalorder %s39, 3
      %p252 = por %p250, %p251
      %p253 = scmp.ne.s32.totalorder %s242, %s243
      %p254 = scmp.eq.s32.totalorder %s39, 0
      %p255 = por %p253, %p254
      %p256 = scmp.ne.s32.totalorder %s242, %s243
      %p257 = scmp.eq.s32.totalorder %s40, 3
      %p258 = por %p256, %p257
      %p260 = scmp.ne.s32.totalorder %s243, %s259
      %p261 = scmp.eq.s32.totalorder %s40, 0
      %p262 = por %p260, %p261
      %s263 = ssub.s32 %s42, %s49
      %p264 = scmp.eq.s32.totalorder %s263, 0
      %s266 = sadd.s32 %s265, 1
      %s267 = scalar_select %p264, %s265, %s266
      %p270 = pneg %p264
      %p271 = scmp.eq.s32.totalorder %s34, 3
      %p272 = por %p270, %p271
      %p273 = scmp.ne.s32.totalorder %s265, %s268
      %p274 = scmp.eq.s32.totalorder %s34, 0
      %p275 = por %p273, %p274
      %p276 = scmp.ne.s32.totalorder %s265, %s268
      %p277 = scmp.eq.s32.totalorder %s39, 3
      %p278 = por %p276, %p277
      %p279 = scmp.ne.s32.totalorder %s268, %s269
      %p280 = scmp.eq.s32.totalorder %s39, 0
      %p281 = por %p279, %p280
      %p282 = scmp.ne.s32.totalorder %s268, %s269
      %p283 = scmp.eq.s32.totalorder %s40, 3
      %p284 = por %p282, %p283
      %p286 = scmp.ne.s32.totalorder %s269, %s285
      %p287 = scmp.eq.s32.totalorder %s40, 0
      %p288 = por %p286, %p287
      %s289 = ssub.s32 %s42, %s49
      %p290 = scmp.eq.s32.totalorder %s289, 0
      %s292 = sadd.s32 %s291, 1
      %s293 = scalar_select %p290, %s291, %s292
      %p296 = pneg %p290
      %p297 = scmp.eq.s32.totalorder %s34, 3
      %p298 = por %p296, %p297
      %p299 = scmp.ne.s32.totalorder %s291, %s294
      %p300 = scmp.eq.s32.totalorder %s34, 0
      %p301 = por %p299, %p300
      %p302 = scmp.ne.s32.totalorder %s291, %s294
      %p303 = scmp.eq.s32.totalorder %s39, 3
      %p304 = por %p302, %p303
      %p305 = scmp.ne.s32.totalorder %s294, %s295
      %p306 = scmp.eq.s32.totalorder %s39, 0
      %p307 = por %p305, %p306
      %p308 = scmp.ne.s32.totalorder %s294, %s295
      %p309 = scmp.eq.s32.totalorder %s40, 3
      %p310 = por %p308, %p309
      %p312 = scmp.ne.s32.totalorder %s295, %s311
      %p313 = scmp.eq.s32.totalorder %s40, 0
      %p314 = por %p312, %p313
      %s315 = ssub.s32 %s42, %s49
      %p316 = scmp.eq.s32.totalorder %s315, 0
      %s318 = sadd.s32 %s317, 1
      %s319 = scalar_select %p316, %s317, %s318
      %p322 = pneg %p316
      %p323 = scmp.eq.s32.totalorder %s34, 3
      %p324 = por %p322, %p323
      %p325 = scmp.ne.s32.totalorder %s317, %s320
      %p326 = scmp.eq.s32.totalorder %s34, 0
      %p327 = por %p325, %p326
      %p328 = scmp.ne.s32.totalorder %s317, %s320
      %p329 = scmp.eq.s32.totalorder %s39, 3
      %p330 = por %p328, %p329
      %p331 = scmp.ne.s32.totalorder %s320, %s321
      %p332 = scmp.eq.s32.totalorder %s39, 0
      %p333 = por %p331, %p332
      %p334 = scmp.ne.s32.totalorder %s320, %s321
      %p335 = scmp.eq.s32.totalorder %s40, 3
      %p336 = por %p334, %p335
      %p338 = scmp.ne.s32.totalorder %s321, %s337
      %p339 = scmp.eq.s32.totalorder %s40, 0
      %p340 = por %p338, %p339
      %s341 = ssub.s32 %s42, %s49
      %p342 = scmp.eq.s32.totalorder %s341, 0
      %s344 = sadd.s32 %s343, 1
      %s345 = scalar_select %p342, %s343, %s344
      %p348 = pneg %p342
      %p349 = scmp.eq.s32.totalorder %s34, 3
      %p350 = por %p348, %p349
      %p351 = scmp.ne.s32.totalorder %s343, %s346
      %p352 = scmp.eq.s32.totalorder %s34, 0
      %p353 = por %p351, %p352
      %p354 = scmp.ne.s32.totalorder %s343, %s346
      %p355 = scmp.eq.s32.totalorder %s39, 3
      %p356 = por %p354, %p355
      %p357 = scmp.ne.s32.totalorder %s346, %s347
      %p358 = scmp.eq.s32.totalorder %s39, 0
      %p359 = por %p357, %p358
      %p360 = scmp.ne.s32.totalorder %s346, %s347
      %p361 = scmp.eq.s32.totalorder %s40, 3
      %p362 = por %p360, %p361
      %p364 = scmp.ne.s32.totalorder %s347, %s363
      %p365 = scmp.eq.s32.totalorder %s40, 0
      %p366 = por %p364, %p365
      %s367 = ssub.s32 %s42, %s49
      %p368 = scmp.eq.s32.totalorder %s367, 0
      %s370 = sadd.s32 %s369, 1
      %s371 = scalar_select %p368, %s369, %s370
      %p374 = pneg %p368
      %p375 = scmp.eq.s32.totalorder %s34, 3
      %p376 = por %p374, %p375
      %p377 = scmp.ne.s32.totalorder %s369, %s372
      %p378 = scmp.eq.s32.totalorder %s34, 0
      %p379 = por %p377, %p378
      %p380 = scmp.ne.s32.totalorder %s369, %s372
      %p381 = scmp.eq.s32.totalorder %s39, 3
      %p382 = por %p380, %p381
      %p383 = scmp.ne.s32.totalorder %s372, %s373
      %p384 = scmp.eq.s32.totalorder %s39, 0
      %p385 = por %p383, %p384
      %p386 = scmp.ne.s32.totalorder %s372, %s373
      %p387 = scmp.eq.s32.totalorder %s40, 3
      %p388 = por %p386, %p387
      %p390 = scmp.ne.s32.totalorder %s373, %s389
      %p391 = scmp.eq.s32.totalorder %s40, 0
      %p392 = por %p390, %p391
      %s393 = ssub.s32 %s42, %s49
      %p394 = scmp.eq.s32.totalorder %s393, 0
      %s396 = sadd.s32 %s395, 1
      %s397 = scalar_select %p394, %s395, %s396
      %p400 = pneg %p394
      %p401 = scmp.eq.s32.totalorder %s34, 3
      %p402 = por %p400, %p401
      %p403 = scmp.ne.s32.totalorder %s395, %s398
      %p404 = scmp.eq.s32.totalorder %s34, 0
      %p405 = por %p403, %p404
      %p406 = scmp.ne.s32.totalorder %s395, %s398
      %p407 = scmp.eq.s32.totalorder %s39, 3
      %p408 = por %p406, %p407
      %p409 = scmp.ne.s32.totalorder %s398, %s399
      %p410 = scmp.eq.s32.totalorder %s39, 0
      %p411 = por %p409, %p410
      %p412 = scmp.ne.s32.totalorder %s398, %s399
      %p413 = scmp.eq.s32.totalorder %s40, 3
      %p414 = por %p412, %p413
      %p416 = scmp.ne.s32.totalorder %s399, %s415
      %p417 = scmp.eq.s32.totalorder %s40, 0
      %p418 = por %p416, %p417
      %s419 = ssub.s32 %s42, %s49
      %p420 = scmp.eq.s32.totalorder %s419, 0
      %s422 = sadd.s32 %s421, 1
      %s423 = scalar_select %p420, %s421, %s422
      %p426 = pneg %p420
      %p427 = scmp.eq.s32.totalorder %s34, 3
      %p428 = por %p426, %p427
      %p429 = scmp.ne.s32.totalorder %s421, %s424
      %p430 = scmp.eq.s32.totalorder %s34, 0
      %p431 = por %p429, %p430
      %p432 = scmp.ne.s32.totalorder %s421, %s424
      %p433 = scmp.eq.s32.totalorder %s39, 3
      %p434 = por %p432, %p433
      %p435 = scmp.ne.s32.totalorder %s424, %s425
      %p436 = scmp.eq.s32.totalorder %s39, 0
      %p437 = por %p435, %p436
      %p438 = scmp.ne.s32.totalorder %s424, %s425
      %p439 = scmp.eq.s32.totalorder %s40, 3
      %p440 = por %p438, %p439
      %p442 = scmp.ne.s32.totalorder %s425, %s441
      %p443 = scmp.eq.s32.totalorder %s40, 0
      %p444 = por %p442, %p443
      %s445 = ssub.s32 %s42, %s49
      %p446 = scmp.eq.s32.totalorder %s445, 0
      %s448 = sadd.s32 %s447, 1
      %s449 = scalar_select %p446, %s447, %s448
      %p452 = pneg %p446
      %p453 = scmp.eq.s32.totalorder %s34, 3
      %p454 = por %p452, %p453
      %p455 = scmp.ne.s32.totalorder %s447, %s450
      %p456 = scmp.eq.s32.totalorder %s34, 0
      %p457 = por %p455, %p456
      %p458 = scmp.ne.s32.totalorder %s447, %s450
      %p459 = scmp.eq.s32.totalorder %s39, 3
      %p460 = por %p458, %p459
      %p461 = scmp.ne.s32.totalorder %s450, %s451
      %p462 = scmp.eq.s32.totalorder %s39, 0
      %p463 = por %p461, %p462
      %p464 = scmp.ne.s32.totalorder %s450, %s451
      %p465 = scmp.eq.s32.totalorder %s40, 3
      %p466 = por %p464, %p465
      %p468 = scmp.ne.s32.totalorder %s451, %s467
      %p469 = scmp.eq.s32.totalorder %s40, 0
      %p470 = por %p468, %p469
      %s472 = sadd.s32 %s471, 1
      %p475 = scmp.eq.s32.totalorder %s34, 3
      %p476 = scmp.ne.s32.totalorder %s471, %s473
      %p477 = scmp.eq.s32.totalorder %s34, 0
      %p478 = por %p476, %p477
      %p479 = scmp.ne.s32.totalorder %s471, %s473
      %p480 = scmp.eq.s32.totalorder %s39, 3
      %p481 = por %p479, %p480
      %p482 = scmp.ne.s32.totalorder %s473, %s474
      %p483 = scmp.eq.s32.totalorder %s39, 0
      %p484 = por %p482, %p483
      %p485 = scmp.ne.s32.totalorder %s473, %s474
      %p486 = scmp.eq.s32.totalorder %s40, 3
      %p487 = por %p485, %p486
      %p489 = scmp.ne.s32.totalorder %s474, %s488
      %p490 = scmp.eq.s32.totalorder %s40, 0
      %p491 = por %p489, %p490
      %s493 = sadd.s32 %s492, 1
      %p496 = scmp.eq.s32.totalorder %s34, 3
      %p497 = scmp.ne.s32.totalorder %s492, %s494
      %p498 = scmp.eq.s32.totalorder %s34, 0
      %p499 = por %p497, %p498
      %p500 = scmp.ne.s32.totalorder %s492, %s494
      %p501 = scmp.eq.s32.totalorder %s39, 3
      %p502 = por %p500, %p501
      %p503 = scmp.ne.s32.totalorder %s494, %s495
      %p504 = scmp.eq.s32.totalorder %s39, 0
      %p505 = por %p503, %p504
      %p506 = scmp.ne.s32.totalorder %s494, %s495
      %p507 = scmp.eq.s32.totalorder %s40, 3
      %p508 = por %p506, %p507
      %p510 = scmp.ne.s32.totalorder %s495, %s509
      %p511 = scmp.eq.s32.totalorder %s40, 0
      %p512 = por %p510, %p511
      %s514 = sadd.s32 %s513, 1
      %p517 = scmp.eq.s32.totalorder %s34, 3
      %p518 = scmp.ne.s32.totalorder %s513, %s515
      %p519 = scmp.eq.s32.totalorder %s34, 0
      %p520 = por %p518, %p519
      %p521 = scmp.ne.s32.totalorder %s513, %s515
      %p522 = scmp.eq.s32.totalorder %s39, 3
      %p523 = por %p521, %p522
      %p524 = scmp.ne.s32.totalorder %s515, %s516
      %p525 = scmp.eq.s32.totalorder %s39, 0
      %p526 = por %p524, %p525
      %p527 = scmp.ne.s32.totalorder %s515, %s516
      %p528 = scmp.eq.s32.totalorder %s40, 3
      %p529 = por %p527, %p528
      %p531 = scmp.ne.s32.totalorder %s516, %s530
      %p532 = scmp.eq.s32.totalorder %s40, 0
      %p533 = por %p531, %p532
      %s535 = sadd.s32 %s534, 1
      %p538 = scmp.eq.s32.totalorder %s34, 3
      %p539 = scmp.ne.s32.totalorder %s534, %s536
      %p540 = scmp.eq.s32.totalorder %s34, 0
      %p541 = por %p539, %p540
      %p542 = scmp.ne.s32.totalorder %s534, %s536
      %p543 = scmp.eq.s32.totalorder %s39, 3
      %p544 = por %p542, %p543
      %p545 = scmp.ne.s32.totalorder %s536, %s537
      %p546 = scmp.eq.s32.totalorder %s39, 0
      %p547 = por %p545, %p546
      %p548 = scmp.ne.s32.totalorder %s536, %s537
      %p549 = scmp.eq.s32.totalorder %s40, 3
      %p550 = por %p548, %p549
      %p552 = scmp.ne.s32.totalorder %s537, %s551
      %p553 = scmp.eq.s32.totalorder %s40, 0
      %p554 = por %p552, %p553
      %s556 = sadd.s32 %s555, 1
      %p559 = scmp.eq.s32.totalorder %s34, 3
      %p560 = scmp.ne.s32.totalorder %s555, %s557
      %p561 = scmp.eq.s32.totalorder %s34, 0
      %p562 = por %p560, %p561
      %p563 = scmp.ne.s32.totalorder %s555, %s557
      %p564 = scmp.eq.s32.totalorder %s39, 3
      %p565 = por %p563, %p564
      %p566 = scmp.ne.s32.totalorder %s557, %s558
      %p567 = scmp.eq.s32.totalorder %s39, 0
      %p568 = por %p566, %p567
      %p569 = scmp.ne.s32.totalorder %s557, %s558
      %p570 = scmp.eq.s32.totalorder %s40, 3
      %p571 = por %p569, %p570
      %p573 = scmp.ne.s32.totalorder %s558, %s572
      %p574 = scmp.eq.s32.totalorder %s40, 0
      %p575 = por %p573, %p574
      %s577 = sadd.s32 %s576, 1
      %p580 = scmp.eq.s32.totalorder %s34, 3
      %p581 = scmp.ne.s32.totalorder %s576, %s578
      %p582 = scmp.eq.s32.totalorder %s34, 0
      %p583 = por %p581, %p582
      %p584 = scmp.ne.s32.totalorder %s576, %s578
      %p585 = scmp.eq.s32.totalorder %s39, 3
      %p586 = por %p584, %p585
      %p587 = scmp.ne.s32.totalorder %s578, %s579
      %p588 = scmp.eq.s32.totalorder %s39, 0
      %p589 = por %p587, %p588
      %p590 = scmp.ne.s32.totalorder %s578, %s579
      %p591 = scmp.eq.s32.totalorder %s40, 3
      %p592 = por %p590, %p591
      %p594 = scmp.ne.s32.totalorder %s579, %s593
      %p595 = scmp.eq.s32.totalorder %s40, 0
      %p596 = por %p594, %p595
      %s597 = ssub.s32 %s41, %s53
      %p598 = scmp.eq.s32.totalorder %s597, 0
      %s600 = sadd.s32 %s599, 1
      %s601 = scalar_select %p598, %s599, %s600
      %p604 = pneg %p598
      %p605 = scmp.eq.s32.totalorder %s34, 3
      %p606 = por %p604, %p605
      %p607 = scmp.ne.s32.totalorder %s599, %s602
      %p608 = scmp.eq.s32.totalorder %s34, 0
      %p609 = por %p607, %p608
      %p610 = scmp.ne.s32.totalorder %s599, %s602
      %p611 = scmp.eq.s32.totalorder %s39, 3
      %p612 = por %p610, %p611
      %p613 = scmp.ne.s32.totalorder %s602, %s603
      %p614 = scmp.eq.s32.totalorder %s39, 0
      %p615 = por %p613, %p614
      %p616 = scmp.ne.s32.totalorder %s602, %s603
      %p617 = scmp.eq.s32.totalorder %s40, 3
      %p618 = por %p616, %p617
      %p620 = scmp.ne.s32.totalorder %s603, %s619
      %p621 = scmp.eq.s32.totalorder %s40, 0
      %p622 = por %p620, %p621
      %p623 = scmp.le.s32.totalorder 1, %s34
      %p624 = scmp.lt.s32.totalorder %s34, 5
      %p625 = pnand %p623, %p624
      %p626 = pneg %p625
      // Predicated region
      $region9: #{tpu_custom_call.1} parent=5 // pred_check
        _
      $region10: #{tpu_custom_call.1} parent=5 // pred_check_branch
        %628 = sbr.rel (%p625) target = $region12
      $region11: #{tpu_custom_call.1} parent=5 // pred_region
        %s629 = ssub.s32 %s34, 1
        // Predicated region
        $region13: #{tpu_custom_call.1} parent=11 // pred_check
          %p630 = pneg %p93
        $region14: #{tpu_custom_call.1} parent=11 // pred_check_branch
          %632 = sbr.rel (%p630) target = $region16
        $region15: #{tpu_custom_call.1} parent=11 // pred_region
          %s634 = ssub.s32 32, 32
          %635 = vsyncadd [#allocation4], %s634
          %s637 = sshll.u32 [#allocation3], 4
          %s638 = int_to_ptr.vmem [resolvable:$true] %s637
          %640 = dma.hbm_to_vmem [thread:$0]  %s1, 32, %s638, [#allocation4]
        $region16: #{tpu_custom_call.1} parent=11 // pred_fallthru
          _
        // Predicated region
        $region17: #{tpu_custom_call.1} parent=11 // pred_check
          %p641 = pneg %p114
        $region18: #{tpu_custom_call.1} parent=11 // pred_check_branch
          %643 = sbr.rel (%p641) target = $region20
        $region19: #{tpu_custom_call.1} parent=11 // pred_region
          _
        $region20: #{tpu_custom_call.1} parent=11 // pred_fallthru
          _
        // Predicated region
        $region21: #{tpu_custom_call.1} parent=11 // pred_check
          %p644 = pneg %p135
        $region22: #{tpu_custom_call.1} parent=11 // pred_check_branch
          %646 = sbr.rel (%p644) target = $region24
        $region23: #{tpu_custom_call.1} parent=11 // pred_region
          %s648 = ssub.s32 1024, 1024
          %649 = vsyncadd [#allocation7], %s648
          %s650 = sshll.u32 [#allocation6], 4
          %s651 = int_to_ptr.vmem [resolvable:$true] %s650
          %656 = dma.hbm_to_vmem [thread:$0]  %s3, 1024, %s651, [#allocation7], 128, 128, 8
        $region24: #{tpu_custom_call.1} parent=11 // pred_fallthru
          _
        // Predicated region
        $region25: #{tpu_custom_call.1} parent=11 // pred_check
          %p657 = pneg %p156
        $region26: #{tpu_custom_call.1} parent=11 // pred_check_branch
          %659 = sbr.rel (%p657) target = $region28
        $region27: #{tpu_custom_call.1} parent=11 // pred_region
          _
        $region28: #{tpu_custom_call.1} parent=11 // pred_fallthru
          _
        // Predicated region
        $region29: #{tpu_custom_call.1} parent=11 // pred_check
          %p660 = pneg %p177
        $region30: #{tpu_custom_call.1} parent=11 // pred_check_branch
          %662 = sbr.rel (%p660) target = $region32
        $region31: #{tpu_custom_call.1} parent=11 // pred_region
          _
        $region32: #{tpu_custom_call.1} parent=11 // pred_fallthru
          _
        // Predicated region
        $region33: #{tpu_custom_call.1} parent=11 // pred_check
          %p663 = pneg %p484
        $region34: #{tpu_custom_call.1} parent=11 // pred_check_branch
          %665 = sbr.rel (%p663) target = $region36
        $region35: #{tpu_custom_call.1} parent=11 // pred_region
          _
        $region36: #{tpu_custom_call.1} parent=11 // pred_fallthru
          _
        // Predicated region
        $region37: #{tpu_custom_call.1} parent=11 // pred_check
          %p666 = pneg %p505
        $region38: #{tpu_custom_call.1} parent=11 // pred_check_branch
          %668 = sbr.rel (%p666) target = $region40
        $region39: #{tpu_custom_call.1} parent=11 // pred_region
          _
        $region40: #{tpu_custom_call.1} parent=11 // pred_fallthru
          _
        // Predicated region
        $region41: #{tpu_custom_call.1} parent=11 // pred_check
          %p669 = pneg %p526
        $region42: #{tpu_custom_call.1} parent=11 // pred_check_branch
          %671 = sbr.rel (%p669) target = $region44
        $region43: #{tpu_custom_call.1} parent=11 // pred_region
          _
        $region44: #{tpu_custom_call.1} parent=11 // pred_fallthru
          _
        // Predicated region
        $region45: #{tpu_custom_call.1} parent=11 // pred_check
          %p672 = pneg %p547
        $region46: #{tpu_custom_call.1} parent=11 // pred_check_branch
          %674 = sbr.rel (%p672) target = $region48
        $region47: #{tpu_custom_call.1} parent=11 // pred_region
          _
        $region48: #{tpu_custom_call.1} parent=11 // pred_fallthru
          _
        // Predicated region
        $region49: #{tpu_custom_call.1} parent=11 // pred_check
          %p675 = pneg %p568
        $region50: #{tpu_custom_call.1} parent=11 // pred_check_branch
          %677 = sbr.rel (%p675) target = $region52
        $region51: #{tpu_custom_call.1} parent=11 // pred_region
          %s679 = ssub.s32 1024, 1024
          %680 = vsyncadd [#allocation7], %s679
          %s681 = sshll.u32 [#allocation18], 4
          %s682 = int_to_ptr.vmem [resolvable:$true] %s681
          %687 = dma.hbm_to_vmem [thread:$0]  %s21, 1024, %s682, [#allocation7], 64, 64, 4
        $region52: #{tpu_custom_call.1} parent=11 // pred_fallthru
          _
        // Predicated region
        $region53: #{tpu_custom_call.1} parent=11 // pred_check
          %p688 = pneg %p589
        $region54: #{tpu_custom_call.1} parent=11 // pred_check_branch
          %690 = sbr.rel (%p688) target = $region56
        $region55: #{tpu_custom_call.1} parent=11 // pred_region
          _
        $region56: #{tpu_custom_call.1} parent=11 // pred_fallthru
          _
      $region12: #{tpu_custom_call.1} parent=5 // pred_fallthru
        _
      %p691 = scmp.lt.s32.totalorder %s34, 4
      // Predicated region
      $region57: #{tpu_custom_call.1} parent=5 // pred_check
        %p692 = pneg %p691
      $region58: #{tpu_custom_call.1} parent=5 // pred_check_branch
        %694 = sbr.rel (%p692) target = $region60
      $region59: #{tpu_custom_call.1} parent=5 // pred_region
        // Predicated region
        $region61: #{tpu_custom_call.1} parent=59 // pred_check
          %p695 = pneg %p66
        $region62: #{tpu_custom_call.1} parent=59 // pred_check_branch
          %697 = sbr.rel (%p695) target = $region64
        $region63: #{tpu_custom_call.1} parent=59 // pred_region
          %p698 = scmp.lt.s32.totalorder %s41, 1
          %s699 = scalar_select %p698, %s41, 1
          %s700 = smul.addr %s699, 8
          %s701 = smul.addr %s700, 4
          %s702 = scalar_lea.vmem %s0, %s701
        $region64: #{tpu_custom_call.1} parent=59 // pred_fallthru
          _
        // Predicated region
        $region65: #{tpu_custom_call.1} parent=59 // pred_check
          %p703 = pneg %p197
        $region66: #{tpu_custom_call.1} parent=59 // pred_check_branch
          %705 = sbr.rel (%p703) target = $region68
        $region67: #{tpu_custom_call.1} parent=59 // pred_region
          %s706 = sand.u32 %s34, 1
          %s707 = scalar_lea.sflag [#allocation4], %s706
          %s708 = sand.u32 %s187, 1
          %s709 = scalar_lea.vmem [#allocation8], %s708
          %s711 = ssub.s32 16, 16
          %712 = vsyncadd %s707, %s711
          %s713 = smul.addr %s42, 16
          %s714 = scalar_lea.hbm %s6, %s713
          %s716 = sshll.u32 %s709, 4
          %s717 = int_to_ptr.vmem [resolvable:$true] %s716
          %719 = dma.hbm_to_vmem [thread:$0]  %s714, 16, %s717, %s707
        $region68: #{tpu_custom_call.1} parent=59 // pred_fallthru
          _
        // Predicated region
        $region69: #{tpu_custom_call.1} parent=59 // pred_check
          %p720 = pneg %p223
        $region70: #{tpu_custom_call.1} parent=59 // pred_check_branch
          %722 = sbr.rel (%p720) target = $region72
        $region71: #{tpu_custom_call.1} parent=59 // pred_region
          %s723 = sand.u32 %s34, 1
          %s724 = scalar_lea.sflag [#allocation4], %s723
          %s725 = sand.u32 %s213, 1
          %s726 = scalar_lea.vmem [#allocation9], %s725
          %s728 = ssub.s32 16, 16
          %729 = vsyncadd %s724, %s728
          %s730 = smul.addr %s42, 16
          %s731 = scalar_lea.hbm %s7, %s730
          %s733 = sshll.u32 %s726, 4
          %s734 = int_to_ptr.vmem [resolvable:$true] %s733
          %736 = dma.hbm_to_vmem [thread:$0]  %s731, 16, %s734, %s724
        $region72: #{tpu_custom_call.1} parent=59 // pred_fallthru
          _
        // Predicated region
        $region73: #{tpu_custom_call.1} parent=59 // pred_check
          %p737 = pneg %p249
        $region74: #{tpu_custom_call.1} parent=59 // pred_check_branch
          %739 = sbr.rel (%p737) target = $region76
        $region75: #{tpu_custom_call.1} parent=59 // pred_region
          %s740 = sand.u32 %s34, 1
          %s741 = scalar_lea.sflag [#allocation4], %s740
          %s742 = sand.u32 %s239, 1
          %s743 = smul.addr %s742, 192
          %s744 = scalar_lea.vmem [#allocation10], %s743
          %s746 = ssub.s32 3072, 3072
          %747 = vsyncadd %s741, %s746
          %s748 = smul.addr %s42, 48
          %s749 = smul.addr %s748, 64
          %s750 = scalar_lea.hbm %s8, %s749
          %s751 = sshll.u32 %s744, 4
          %s752 = int_to_ptr.vmem [resolvable:$true] %s751
          %757 = dma.hbm_to_vmem [thread:$0]  %s750, 3072, %s752, %s741, 192, 192, 12
        $region76: #{tpu_custom_call.1} parent=59 // pred_fallthru
          _
        // Predicated region
        $region77: #{tpu_custom_call.1} parent=59 // pred_check
          %p758 = pneg %p275
        $region78: #{tpu_custom_call.1} parent=59 // pred_check_branch
          %760 = sbr.rel (%p758) target = $region80
        $region79: #{tpu_custom_call.1} parent=59 // pred_region
          %p761 = scmp.lt.s32.totalorder %s42, 1
          %s762 = scalar_select %p761, %s42, 1
          %s763 = smul.addr %s762, 16
          %s764 = smul.addr %s763, 4
          %s765 = scalar_lea.vmem %s9, %s764
        $region80: #{tpu_custom_call.1} parent=59 // pred_fallthru
          _
        // Predicated region
        $region81: #{tpu_custom_call.1} parent=59 // pred_check
          %p766 = pneg %p301
        $region82: #{tpu_custom_call.1} parent=59 // pred_check_branch
          %768 = sbr.rel (%p766) target = $region84
        $region83: #{tpu_custom_call.1} parent=59 // pred_region
          %s769 = sand.u32 %s34, 1
          %s770 = scalar_lea.sflag [#allocation4], %s769
          %s771 = sand.u32 %s291, 1
          %s772 = scalar_lea.vmem [#allocation11], %s771
          %s774 = ssub.s32 16, 16
          %775 = vsyncadd %s770, %s774
          %s776 = smul.addr %s42, 16
          %s777 = scalar_lea.hbm %s10, %s776
          %s779 = sshll.u32 %s772, 4
          %s780 = int_to_ptr.vmem [resolvable:$true] %s779
          %782 = dma.hbm_to_vmem [thread:$0]  %s777, 16, %s780, %s770
        $region84: #{tpu_custom_call.1} parent=59 // pred_fallthru
          _
        // Predicated region
        $region85: #{tpu_custom_call.1} parent=59 // pred_check
          %p783 = pneg %p327
        $region86: #{tpu_custom_call.1} parent=59 // pred_check_branch
          %785 = sbr.rel (%p783) target = $region88
        $region87: #{tpu_custom_call.1} parent=59 // pred_region
          %s786 = sand.u32 %s34, 1
          %s787 = scalar_lea.sflag [#allocation4], %s786
          %s788 = sand.u32 %s317, 1
          %s789 = scalar_lea.vmem [#allocation12], %s788
          %s791 = ssub.s32 16, 16
          %792 = vsyncadd %s787, %s791
          %s793 = smul.addr %s42, 16
          %s794 = scalar_lea.hbm %s11, %s793
          %s796 = sshll.u32 %s789, 4
          %s797 = int_to_ptr.vmem [resolvable:$true] %s796
          %799 = dma.hbm_to_vmem [thread:$0]  %s794, 16, %s797, %s787
        $region88: #{tpu_custom_call.1} parent=59 // pred_fallthru
          _
        // Predicated region
        $region89: #{tpu_custom_call.1} parent=59 // pred_check
          %p800 = pneg %p353
        $region90: #{tpu_custom_call.1} parent=59 // pred_check_branch
          %802 = sbr.rel (%p800) target = $region92
        $region91: #{tpu_custom_call.1} parent=59 // pred_region
          %s803 = sand.u32 %s34, 1
          %s804 = scalar_lea.sflag [#allocation4], %s803
          %s805 = sand.u32 %s343, 1
          %s806 = scalar_lea.vmem [#allocation13], %s805
          %s808 = ssub.s32 16, 16
          %809 = vsyncadd %s804, %s808
          %s810 = smul.addr %s42, 16
          %s811 = scalar_lea.hbm %s12, %s810
          %s813 = sshll.u32 %s806, 4
          %s814 = int_to_ptr.vmem [resolvable:$true] %s813
          %816 = dma.hbm_to_vmem [thread:$0]  %s811, 16, %s814, %s804
        $region92: #{tpu_custom_call.1} parent=59 // pred_fallthru
          _
        // Predicated region
        $region93: #{tpu_custom_call.1} parent=59 // pred_check
          %p817 = pneg %p379
        $region94: #{tpu_custom_call.1} parent=59 // pred_check_branch
          %819 = sbr.rel (%p817) target = $region96
        $region95: #{tpu_custom_call.1} parent=59 // pred_region
          %s820 = sand.u32 %s34, 1
          %s821 = scalar_lea.sflag [#allocation4], %s820
          %s822 = sand.u32 %s369, 1
          %s823 = smul.addr %s822, 256
          %s824 = scalar_lea.vmem [#allocation14], %s823
          %s826 = ssub.s32 4096, 4096
          %827 = vsyncadd %s821, %s826
          %s828 = smul.addr %s42, 64
          %s829 = smul.addr %s828, 64
          %s830 = scalar_lea.hbm %s13, %s829
          %s831 = sshll.u32 %s824, 4
          %s832 = int_to_ptr.vmem [resolvable:$true] %s831
          %837 = dma.hbm_to_vmem [thread:$0]  %s830, 4096, %s832, %s821, 256, 256, 16
        $region96: #{tpu_custom_call.1} parent=59 // pred_fallthru
          _
        // Predicated region
        $region97: #{tpu_custom_call.1} parent=59 // pred_check
          %p838 = pneg %p405
        $region98: #{tpu_custom_call.1} parent=59 // pred_check_branch
          %840 = sbr.rel (%p838) target = $region100
        $region99: #{tpu_custom_call.1} parent=59 // pred_region
          %s841 = sand.u32 %s34, 1
          %s842 = scalar_lea.sflag [#allocation4], %s841
          %s843 = sand.u32 %s395, 1
          %s844 = smul.addr %s843, 4
          %s845 = scalar_lea.vmem [#allocation15], %s844
          %s847 = ssub.s32 64, 64
          %848 = vsyncadd %s842, %s847
          %s849 = smul.addr %s42, 4
          %s850 = smul.addr %s849, 16
          %s851 = scalar_lea.hbm %s14, %s850
          %s853 = sshll.u32 %s845, 4
          %s854 = int_to_ptr.vmem [resolvable:$true] %s853
          %856 = dma.hbm_to_vmem [thread:$0]  %s851, 64, %s854, %s842
        $region100: #{tpu_custom_call.1} parent=59 // pred_fallthru
          _
        // Predicated region
        $region101: #{tpu_custom_call.1} parent=59 // pred_check
          %p857 = pneg %p431
        $region102: #{tpu_custom_call.1} parent=59 // pred_check_branch
          %859 = sbr.rel (%p857) target = $region104
        $region103: #{tpu_custom_call.1} parent=59 // pred_region
          %s860 = sand.u32 %s34, 1
          %s861 = scalar_lea.sflag [#allocation4], %s860
          %s862 = sand.u32 %s421, 1
          %s863 = smul.addr %s862, 256
          %s864 = scalar_lea.vmem [#allocation16], %s863
          %s866 = ssub.s32 4096, 4096
          %867 = vsyncadd %s861, %s866
          %s868 = smul.addr %s42, 64
          %s869 = smul.addr %s868, 64
          %s870 = scalar_lea.hbm %s15, %s869
          %s871 = sshll.u32 %s864, 4
          %s872 = int_to_ptr.vmem [resolvable:$true] %s871
          %877 = dma.hbm_to_vmem [thread:$0]  %s870, 4096, %s872, %s861, 64, 64, 4
        $region104: #{tpu_custom_call.1} parent=59 // pred_fallthru
          _
        // Predicated region
        $region105: #{tpu_custom_call.1} parent=59 // pred_check
          %p878 = pneg %p457
        $region106: #{tpu_custom_call.1} parent=59 // pred_check_branch
          %880 = sbr.rel (%p878) target = $region108
        $region107: #{tpu_custom_call.1} parent=59 // pred_region
          %s881 = sand.u32 %s34, 1
          %s882 = scalar_lea.sflag [#allocation4], %s881
          %s883 = sand.u32 %s447, 1
          %s884 = scalar_lea.vmem [#allocation17], %s883
          %s886 = ssub.s32 16, 16
          %887 = vsyncadd %s882, %s886
          %s888 = smul.addr %s42, 16
          %s889 = scalar_lea.hbm %s16, %s888
          %s891 = sshll.u32 %s884, 4
          %s892 = int_to_ptr.vmem [resolvable:$true] %s891
          %894 = dma.hbm_to_vmem [thread:$0]  %s889, 16, %s892, %s882
        $region108: #{tpu_custom_call.1} parent=59 // pred_fallthru
          _
      $region60: #{tpu_custom_call.1} parent=5 // pred_fallthru
        _
      %p895 = scmp.le.s32.totalorder 1, %s34
      %p896 = scmp.lt.s32.totalorder %s34, 5
      %p897 = pnand %p895, %p896
      %p898 = pneg %p897
      // Predicated region
      $region109: #{tpu_custom_call.1} parent=5 // pred_check
        _
      $region110: #{tpu_custom_call.1} parent=5 // pred_check_branch
        %900 = sbr.rel (%p897) target = $region112
      $region111: #{tpu_custom_call.1} parent=5 // pred_region
        %s901 = ssub.s32 %s34, 1
        // Predicated region
        $region113: #{tpu_custom_call.1} parent=111 // pred_check
          %p902 = pneg %p93
        $region114: #{tpu_custom_call.1} parent=111 // pred_check_branch
          %904 = sbr.rel (%p902) target = $region116
        $region115: #{tpu_custom_call.1} parent=111 // pred_region
          %905 = dma.done [#allocation4], 32
        $region116: #{tpu_custom_call.1} parent=111 // pred_fallthru
          _
        // Predicated region
        $region117: #{tpu_custom_call.1} parent=111 // pred_check
          %p906 = pneg %p135
        $region118: #{tpu_custom_call.1} parent=111 // pred_check_branch
          %908 = sbr.rel (%p906) target = $region120
        $region119: #{tpu_custom_call.1} parent=111 // pred_region
          %909 = dma.done [#allocation7], 1024
        $region120: #{tpu_custom_call.1} parent=111 // pred_fallthru
          _
        %s910 = sand.u32 %s39, 1
        %s911 = scalar_lea.sflag [#allocation4], %s910
        %s912 = sand.u32 %s190, 1
        %s913 = scalar_lea.vmem [#allocation8], %s912
        // Predicated region
        $region121: #{tpu_custom_call.1} parent=111 // pred_check
          %p914 = pneg %p203
        $region122: #{tpu_custom_call.1} parent=111 // pred_check_branch
          %916 = sbr.rel (%p914) target = $region124
        $region123: #{tpu_custom_call.1} parent=111 // pred_region
          %917 = dma.done %s911, 16
        $region124: #{tpu_custom_call.1} parent=111 // pred_fallthru
          _
        %s918 = sand.u32 %s39, 1
        %s919 = scalar_lea.sflag [#allocation4], %s918
        %s920 = sand.u32 %s216, 1
        %s921 = scalar_lea.vmem [#allocation9], %s920
        // Predicated region
        $region125: #{tpu_custom_call.1} parent=111 // pred_check
          %p922 = pneg %p229
        $region126: #{tpu_custom_call.1} parent=111 // pred_check_branch
          %924 = sbr.rel (%p922) target = $region128
        $region127: #{tpu_custom_call.1} parent=111 // pred_region
          %925 = dma.done %s919, 16
        $region128: #{tpu_custom_call.1} parent=111 // pred_fallthru
          _
        %s926 = sand.u32 %s39, 1
        %s927 = scalar_lea.sflag [#allocation4], %s926
        %s928 = sand.u32 %s242, 1
        %s929 = smul.addr %s928, 192
        %s930 = scalar_lea.vmem [#allocation10], %s929
        // Predicated region
        $region129: #{tpu_custom_call.1} parent=111 // pred_check
          %p931 = pneg %p255
        $region130: #{tpu_custom_call.1} parent=111 // pred_check_branch
          %933 = sbr.rel (%p931) target = $region132
        $region131: #{tpu_custom_call.1} parent=111 // pred_region
          %934 = dma.done %s927, 3072
        $region132: #{tpu_custom_call.1} parent=111 // pred_fallthru
          _
        %s935 = sand.u32 %s39, 1
        %s936 = scalar_lea.sflag [#allocation4], %s935
        %s937 = sand.u32 %s294, 1
        %s938 = scalar_lea.vmem [#allocation11], %s937
        // Predicated region
        $region133: #{tpu_custom_call.1} parent=111 // pred_check
          %p939 = pneg %p307
        $region134: #{tpu_custom_call.1} parent=111 // pred_check_branch
          %941 = sbr.rel (%p939) target = $region136
        $region135: #{tpu_custom_call.1} parent=111 // pred_region
          %942 = dma.done %s936, 16
        $region136: #{tpu_custom_call.1} parent=111 // pred_fallthru
          _
        %s943 = sand.u32 %s39, 1
        %s944 = scalar_lea.sflag [#allocation4], %s943
        %s945 = sand.u32 %s320, 1
        %s946 = scalar_lea.vmem [#allocation12], %s945
        // Predicated region
        $region137: #{tpu_custom_call.1} parent=111 // pred_check
          %p947 = pneg %p333
        $region138: #{tpu_custom_call.1} parent=111 // pred_check_branch
          %949 = sbr.rel (%p947) target = $region140
        $region139: #{tpu_custom_call.1} parent=111 // pred_region
          %950 = dma.done %s944, 16
        $region140: #{tpu_custom_call.1} parent=111 // pred_fallthru
          _
        %s951 = sand.u32 %s39, 1
        %s952 = scalar_lea.sflag [#allocation4], %s951
        %s953 = sand.u32 %s346, 1
        %s954 = scalar_lea.vmem [#allocation13], %s953
        // Predicated region
        $region141: #{tpu_custom_call.1} parent=111 // pred_check
          %p955 = pneg %p359
        $region142: #{tpu_custom_call.1} parent=111 // pred_check_branch
          %957 = sbr.rel (%p955) target = $region144
        $region143: #{tpu_custom_call.1} parent=111 // pred_region
          %958 = dma.done %s952, 16
        $region144: #{tpu_custom_call.1} parent=111 // pred_fallthru
          _
        %s959 = sand.u32 %s39, 1
        %s960 = scalar_lea.sflag [#allocation4], %s959
        %s961 = sand.u32 %s372, 1
        %s962 = smul.addr %s961, 256
        %s963 = scalar_lea.vmem [#allocation14], %s962
        // Predicated region
        $region145: #{tpu_custom_call.1} parent=111 // pred_check
          %p964 = pneg %p385
        $region146: #{tpu_custom_call.1} parent=111 // pred_check_branch
          %966 = sbr.rel (%p964) target = $region148
        $region147: #{tpu_custom_call.1} parent=111 // pred_region
          %967 = dma.done %s960, 4096
        $region148: #{tpu_custom_call.1} parent=111 // pred_fallthru
          _
        %s968 = sand.u32 %s39, 1
        %s969 = scalar_lea.sflag [#allocation4], %s968
        %s970 = sand.u32 %s398, 1
        %s971 = smul.addr %s970, 4
        %s972 = scalar_lea.vmem [#allocation15], %s971
        // Predicated region
        $region149: #{tpu_custom_call.1} parent=111 // pred_check
          %p973 = pneg %p411
        $region150: #{tpu_custom_call.1} parent=111 // pred_check_branch
          %975 = sbr.rel (%p973) target = $region152
        $region151: #{tpu_custom_call.1} parent=111 // pred_region
          %976 = dma.done %s969, 64
        $region152: #{tpu_custom_call.1} parent=111 // pred_fallthru
          _
        %s977 = sand.u32 %s39, 1
        %s978 = scalar_lea.sflag [#allocation4], %s977
        %s979 = sand.u32 %s424, 1
        %s980 = smul.addr %s979, 256
        %s981 = scalar_lea.vmem [#allocation16], %s980
        // Predicated region
        $region153: #{tpu_custom_call.1} parent=111 // pred_check
          %p982 = pneg %p437
        $region154: #{tpu_custom_call.1} parent=111 // pred_check_branch
          %984 = sbr.rel (%p982) target = $region156
        $region155: #{tpu_custom_call.1} parent=111 // pred_region
          %985 = dma.done %s978, 4096
        $region156: #{tpu_custom_call.1} parent=111 // pred_fallthru
          _
        %s986 = sand.u32 %s39, 1
        %s987 = scalar_lea.sflag [#allocation4], %s986
        %s988 = sand.u32 %s450, 1
        %s989 = scalar_lea.vmem [#allocation17], %s988
        // Predicated region
        $region157: #{tpu_custom_call.1} parent=111 // pred_check
          %p990 = pneg %p463
        $region158: #{tpu_custom_call.1} parent=111 // pred_check_branch
          %992 = sbr.rel (%p990) target = $region160
        $region159: #{tpu_custom_call.1} parent=111 // pred_region
          %993 = dma.done %s987, 16
        $region160: #{tpu_custom_call.1} parent=111 // pred_fallthru
          _
        // Predicated region
        $region161: #{tpu_custom_call.1} parent=111 // pred_check
          %p994 = pneg %p568
        $region162: #{tpu_custom_call.1} parent=111 // pred_check_branch
          %996 = sbr.rel (%p994) target = $region164
        $region163: #{tpu_custom_call.1} parent=111 // pred_region
          %997 = dma.done [#allocation7], 1024
        $region164: #{tpu_custom_call.1} parent=111 // pred_fallthru
          _
        %p998 = scmp.lt.s32.totalorder %s43, 1
        %s999 = scalar_select %p998, %s43, 1
        %s1000 = smul.addr %s999, 8
        %s1001 = smul.addr %s1000, 4
        %s1002 = scalar_lea.vmem %s0, %s1001
        %p1003 = pneg %p72
        %p1004 = pneg %p69
        %p1005 = pneg %p93
        %p1006 = pneg %p90
        %p1007 = pneg %p114
        %p1008 = pneg %p111
        %p1009 = pneg %p135
        %p1010 = pneg %p132
        %p1011 = pneg %p156
        %p1012 = pneg %p153
        %p1013 = pneg %p177
        %p1014 = pneg %p174
        %s1015 = sand.u32 %s39, 1
        %s1016 = scalar_lea.sflag [#allocation4], %s1015
        %s1017 = sand.u32 %s190, 1
        %s1018 = scalar_lea.vmem [#allocation8], %s1017
        %p1019 = pneg %p203
        %p1020 = pneg %p200
        %s1021 = sand.u32 %s39, 1
        %s1022 = scalar_lea.sflag [#allocation4], %s1021
        %s1023 = sand.u32 %s216, 1
        %s1024 = scalar_lea.vmem [#allocation9], %s1023
        %p1025 = pneg %p229
        %p1026 = pneg %p226
        %s1027 = sand.u32 %s39, 1
        %s1028 = scalar_lea.sflag [#allocation4], %s1027
        %s1029 = sand.u32 %s242, 1
        %s1030 = smul.addr %s1029, 192
        %s1031 = scalar_lea.vmem [#allocation10], %s1030
        %p1032 = pneg %p255
        %p1033 = pneg %p252
        %p1034 = scmp.lt.s32.totalorder %s44, 1
        %s1035 = scalar_select %p1034, %s44, 1
        %s1036 = smul.addr %s1035, 16
        %s1037 = smul.addr %s1036, 4
        %s1038 = scalar_lea.vmem %s9, %s1037
        %p1039 = pneg %p281
        %p1040 = pneg %p278
        %s1041 = sand.u32 %s39, 1
        %s1042 = scalar_lea.sflag [#allocation4], %s1041
        %s1043 = sand.u32 %s294, 1
        %s1044 = scalar_lea.vmem [#allocation11], %s1043
        %p1045 = pneg %p307
        %p1046 = pneg %p304
        %s1047 = sand.u32 %s39, 1
        %s1048 = scalar_lea.sflag [#allocation4], %s1047
        %s1049 = sand.u32 %s320, 1
        %s1050 = scalar_lea.vmem [#allocation12], %s1049
        %p1051 = pneg %p333
        %p1052 = pneg %p330
        %s1053 = sand.u32 %s39, 1
        %s1054 = scalar_lea.sflag [#allocation4], %s1053
        %s1055 = sand.u32 %s346, 1
        %s1056 = scalar_lea.vmem [#allocation13], %s1055
        %p1057 = pneg %p359
        %p1058 = pneg %p356
        %s1059 = sand.u32 %s39, 1
        %s1060 = scalar_lea.sflag [#allocation4], %s1059
        %s1061 = sand.u32 %s372, 1
        %s1062 = smul.addr %s1061, 256
        %s1063 = scalar_lea.vmem [#allocation14], %s1062
        %p1064 = pneg %p385
        %p1065 = pneg %p382
        %s1066 = sand.u32 %s39, 1
        %s1067 = scalar_lea.sflag [#allocation4], %s1066
        %s1068 = sand.u32 %s398, 1
        %s1069 = smul.addr %s1068, 4
        %s1070 = scalar_lea.vmem [#allocation15], %s1069
        %p1071 = pneg %p411
        %p1072 = pneg %p408
        %s1073 = sand.u32 %s39, 1
        %s1074 = scalar_lea.sflag [#allocation4], %s1073
        %s1075 = sand.u32 %s424, 1
        %s1076 = smul.addr %s1075, 256
        %s1077 = scalar_lea.vmem [#allocation16], %s1076
        %p1078 = pneg %p437
        %p1079 = pneg %p434
        %s1080 = sand.u32 %s39, 1
        %s1081 = scalar_lea.sflag [#allocation4], %s1080
        %s1082 = sand.u32 %s450, 1
        %s1083 = scalar_lea.vmem [#allocation17], %s1082
        %p1084 = pneg %p463
        %p1085 = pneg %p460
        %p1086 = pneg %p484
        %p1087 = pneg %p481
        %p1088 = pneg %p505
        %p1089 = pneg %p502
        %p1090 = pneg %p526
        %p1091 = pneg %p523
        %p1092 = pneg %p547
        %p1093 = pneg %p544
        %p1094 = pneg %p568
        %p1095 = pneg %p565
        %p1096 = pneg %p589
        %p1097 = pneg %p586
        %p1098 = pneg %p615
        %p1099 = pneg %p612
        %s1100 = sand.u32 %s602, 1
        %s1101 = scalar_lea.sflag [#allocation5], %s1100
        %s1102 = sand.u32 %s602, 1
        %s1103 = scalar_lea.vmem [#allocation19], %s1102
        %p1104 = scmp.lt.s32.totalorder %s43, 1
        %s1105 = scalar_select %p1104, %s43, 1
        %s1106 = smul.addr %s1105, 8
        %s1107 = smul.addr %s1106, 4
        %s1108 = scalar_lea.vmem %s0, %s1107
        %p1109 = scmp.lt.s32.totalorder %s44, 1
        %s1110 = scalar_select %p1109, %s44, 1
        %s1111 = smul.addr %s1110, 16
        %s1112 = smul.addr %s1111, 4
        %s1113 = scalar_lea.vmem %s9, %s1112
        %p1115 = scmp.eq.s32.totalorder %s44, 0
        // Predicated region
        $region165: #{tpu_custom_call.1} parent=111 // pred_check
          %p1116 = pneg %p1115
        $region166: #{tpu_custom_call.1} parent=111 // pred_check_branch
          %1118 = sbr.rel (%p1116) target = $region168
        $region167: #{tpu_custom_call.1} parent=111 // pred_region
          %v1119 = vld [vmem:[%s1108] sm:$0xf]
          %v1120 = vld [vmem:[%s1108 + $0x4] sm:$0xf]
          %v1121 = vld [vmem:[%s1108 + $0x8] sm:$0xf]
          %v1122 = vld [vmem:[%s1108 + $0xc] sm:$0xf]
          %v1123 = vld [vmem:[%s1108 + $0x10] sm:$0xf]
          %v1124 = vld [vmem:[%s1108 + $0x14] sm:$0xf]
          %v1125 = vld [vmem:[%s1108 + $0x18] sm:$0xf]
          %v1126 = vld [vmem:[%s1108 + $0x1c] sm:$0xf]
          %v1127 = vld [vmem:[#allocation3] sm:$0x3]
          %v1128 = vld [vmem:[%s2] sm:$0x1]
          %v1130 = vlaneseq
          %v1131 = vshrl.u32 %v1130, 7
          %v1132 = vsub.s32 0, %v1131
          %v1133 = vrot.slane %v1128, %v1132
          %v1143 = vunpack.c.l.b16 %v1119
          %v1144 = vunpack.c.l.b16 %v1120
          %v1145 = vunpack.c.l.b16 %v1121
          %v1146 = vunpack.c.l.b16 %v1122
          %v1147 = vunpack.c.l.b16 %v1123
          %v1148 = vunpack.c.l.b16 %v1124
          %v1149 = vunpack.c.l.b16 %v1125
          %v1150 = vunpack.c.l.b16 %v1126
          %v1151 = vpack.c.b16 %v1144, %v1143
          %v1152 = vpack.c.b16 %v1146, %v1145
          %v1153 = vpack.c.b16 %v1148, %v1147
          %v1154 = vpack.c.b16 %v1150, %v1149
          %vm1155 = vcmask 31744
          %v1157 = vsel %vm1155, %v1151, 0
          %v1160 = vsel %vm1155, %v1152, 0
          %v1163 = vsel %vm1155, %v1153, 0
          %v1166 = vsel %vm1155, %v1154, 0
          %vm1168 = vcmask 1041408
          %v1170 = vsel %vm1168, %v1127, 0
          %1172 = vmatprep.subr.bf16.mxu0 0
          %1173 = vmatpush1.bf16.msra.mxu0 %v1170
          %1174 = vmatprep.subr.bf16.mxu0 0
          %1175 = vmatpush1.bf16.msra.mxu0 0
          %1176 = vmatprep.subr.bf16.mxu0 0
          %1177 = vmatpush1.bf16.msra.mxu0 0
          %1178 = vmatprep.subr.bf16.mxu0 0
          %1179 = vmatpush1.bf16.msra.mxu0 0
          %1180 = vmatprep.subr.bf16.mxu0 0
          %1181 = vmatpush1.bf16.msra.mxu0 0
          %1182 = vmatprep.subr.bf16.mxu0 0
          %1183 = vmatpush1.bf16.msra.mxu0 0
          %1184 = vmatprep.subr.bf16.mxu0 0
          %1185 = vmatpush1.bf16.msra.mxu0 0
          %1186 = vmatprep.subr.bf16.mxu0 0
          %1187 = vmatpush1.bf16.msra.mxu0 0
          %1188 = vmatprep.subr.bf16.mxu0 0
          %1189 = vmatpush1.bf16.msra.mxu0 0
          %1190 = vmatprep.subr.bf16.mxu0 0
          %1191 = vmatpush1.bf16.msra.mxu0 0
          %1192 = vmatprep.subr.bf16.mxu0 0
          %1193 = vmatpush1.bf16.msra.mxu0 0
          %1194 = vmatprep.subr.bf16.mxu0 0
          %1195 = vmatpush1.bf16.msra.mxu0 0
          %1196 = vmatprep.subr.bf16.mxu0 0
          %1197 = vmatpush1.bf16.msra.mxu0 0
          %1198 = vmatprep.subr.bf16.mxu0 0
          %1199 = vmatpush1.bf16.msra.mxu0 0
          %1200 = vmatprep.subr.bf16.mxu0 0
          %1201 = vmatpush1.bf16.msra.mxu0 0
          %1202 = vmatprep.subr.bf16.mxu0 0
          %1203 = vmatpush1.bf16.msra.mxu0 0
          %1204 = vmatprep.mubr.bf16.mxu0 0
          %1205 = vmatmul.mubr.bf16.gmra.mrb[0].mxu0 %v1157
          %v1206 = vpop.f32.mrb[0].mxu0
          %v1207 = vadd.f32 %v1133, %v1206
          %v1208 = vpop.f32.mrb[0].mxu0
          %v1209 = vpop.f32.mrb[0].mxu0
          %v1210 = vadd.f32 %v1133, %v1209
          %v1211 = vpop.f32.mrb[0].mxu0
          %1212 = vmatprep.mubr.bf16.mxu0 0
          %1213 = vmatmul.mubr.bf16.gmra.mrb[0].mxu0 %v1160
          %v1214 = vpop.f32.mrb[0].mxu0
          %v1215 = vadd.f32 %v1133, %v1214
          %v1216 = vpop.f32.mrb[0].mxu0
          %v1217 = vpop.f32.mrb[0].mxu0
          %v1218 = vadd.f32 %v1133, %v1217
          %v1219 = vpop.f32.mrb[0].mxu0
          %1220 = vmatprep.mubr.bf16.mxu0 0
          %1221 = vmatmul.mubr.bf16.gmra.mrb[0].mxu0 %v1163
          %v1222 = vpop.f32.mrb[0].mxu0
          %v1223 = vadd.f32 %v1133, %v1222
          %v1224 = vpop.f32.mrb[0].mxu0
          %v1225 = vpop.f32.mrb[0].mxu0
          %v1226 = vadd.f32 %v1133, %v1225
          %v1227 = vpop.f32.mrb[0].mxu0
          %1228 = vmatprep.mubr.bf16.mxu0 0
          %1229 = vmatmul.mubr.bf16.gmra.mrb[0].mxu0 %v1166
          %v1230 = vpop.f32.mrb[0].mxu0
          %v1231 = vadd.f32 %v1133, %v1230
          %v1232 = vpop.f32.mrb[0].mxu0
          %v1233 = vpop.f32.mrb[0].mxu0
          %v1234 = vadd.f32 %v1133, %v1233
          %v1235 = vpop.f32.mrb[0].mxu0
          %1236 = vdwg.mxu0
          %v1237 = vld [vmem:[#allocation6] sm:$0xff]
          %v1238 = vld [vmem:[#allocation6 + $0x8] sm:$0xff]
          %v1239 = vld [vmem:[#allocation6 + $0x10] sm:$0xff]
          %v1240 = vld [vmem:[#allocation6 + $0x18] sm:$0xff]
          %v1241 = vld [vmem:[#allocation6 + $0x20] sm:$0xff]
          %v1242 = vld [vmem:[#allocation6 + $0x28] sm:$0xff]
          %v1243 = vld [vmem:[#allocation6 + $0x30] sm:$0xff]
          %v1244 = vld [vmem:[#allocation6 + $0x38] sm:$0xff]
          %v1245 = vadd.f32 %v1207, %v1237
          %v1246 = vadd.f32 %v1210, %v1238
          %v1247 = vadd.f32 %v1215, %v1239
          %v1248 = vadd.f32 %v1218, %v1240
          %v1249 = vadd.f32 %v1223, %v1241
          %v1250 = vadd.f32 %v1226, %v1242
          %v1251 = vadd.f32 %v1231, %v1243
          %v1252 = vadd.f32 %v1234, %v1244
          %1253 = vst [vmem:[#allocation2] sm:$0xff] %v1245
          %1254 = vst [vmem:[#allocation2 + $0x8] sm:$0xff] %v1246
          %1255 = vst [vmem:[#allocation2 + $0x10] sm:$0xff] %v1247
          %1256 = vst [vmem:[#allocation2 + $0x18] sm:$0xff] %v1248
          %1257 = vst [vmem:[#allocation2 + $0x20] sm:$0xff] %v1249
          %1258 = vst [vmem:[#allocation2 + $0x28] sm:$0xff] %v1250
          %1259 = vst [vmem:[#allocation2 + $0x30] sm:$0xff] %v1251
          %1260 = vst [vmem:[#allocation2 + $0x38] sm:$0xff] %v1252
        $region168: #{tpu_custom_call.1} parent=111 // pred_fallthru
          _
        %v1261 = vld [vmem:[#allocation2] sm:$0xff]
        %v1262 = vld [vmem:[#allocation2 + $0x8] sm:$0xff]
        %v1263 = vld [vmem:[#allocation2 + $0x10] sm:$0xff]
        %v1264 = vld [vmem:[#allocation2 + $0x18] sm:$0xff]
        %v1265 = vld [vmem:[#allocation2 + $0x20] sm:$0xff]
        %v1266 = vld [vmem:[#allocation2 + $0x28] sm:$0xff]
        %v1267 = vld [vmem:[#allocation2 + $0x30] sm:$0xff]
        %v1268 = vld [vmem:[#allocation2 + $0x38] sm:$0xff]
        %v1269 = vld [vmem:[%s913] sm:$0x1]
        %v1270 = vld [vmem:[%s921] sm:$0x1]
        %1271 = vadd.xlane.f32.xlu0 %v1261
        %v1272 = vpop.xlane.xlu0 %1271
        %1273 = vadd.xlane.f32.xlu0 %v1262
        %v1274 = vpop.xlane.xlu0 %1273
        %1275 = vadd.xlane.f32.xlu0 %v1263
        %v1276 = vpop.xlane.xlu0 %1275
        %1277 = vadd.xlane.f32.xlu0 %v1264
        %v1278 = vpop.xlane.xlu0 %1277
        %1279 = vadd.xlane.f32.xlu0 %v1265
        %v1280 = vpop.xlane.xlu0 %1279
        %1281 = vadd.xlane.f32.xlu0 %v1266
        %v1282 = vpop.xlane.xlu0 %1281
        %1283 = vadd.xlane.f32.xlu0 %v1267
        %v1284 = vpop.xlane.xlu0 %1283
        %1285 = vadd.xlane.f32.xlu0 %v1268
        %v1286 = vpop.xlane.xlu0 %1285
        %v1287 = vrcp.pop 128.0
        %v1288 = vmul.f32 %v1272, %v1287
        %v1289 = vmul.f32 %v1274, %v1287
        %v1290 = vmul.f32 %v1276, %v1287
        %v1291 = vmul.f32 %v1278, %v1287
        %v1292 = vmul.f32 %v1280, %v1287
        %v1293 = vmul.f32 %v1282, %v1287
        %v1294 = vmul.f32 %v1284, %v1287
        %v1295 = vmul.f32 %v1286, %v1287
        %v1296 = vsub.f32 %v1261, %v1288
        %v1297 = vsub.f32 %v1262, %v1289
        %v1298 = vsub.f32 %v1263, %v1290
        %v1299 = vsub.f32 %v1264, %v1291
        %v1300 = vsub.f32 %v1265, %v1292
        %v1301 = vsub.f32 %v1266, %v1293
        %v1302 = vsub.f32 %v1267, %v1294
        %v1303 = vsub.f32 %v1268, %v1295
        %v1304 = vmul.f32 %v1296, %v1296
        %v1305 = vmul.f32 %v1297, %v1297
        %v1306 = vmul.f32 %v1298, %v1298
        %v1307 = vmul.f32 %v1299, %v1299
        %v1308 = vmul.f32 %v1300, %v1300
        %v1309 = vmul.f32 %v1301, %v1301
        %v1310 = vmul.f32 %v1302, %v1302
        %v1311 = vmul.f32 %v1303, %v1303
        %1312 = vadd.xlane.f32.xlu0 %v1304
        %v1313 = vpop.xlane.xlu0 %1312
        %1314 = vadd.xlane.f32.xlu0 %v1305
        %v1315 = vpop.xlane.xlu0 %1314
        %1316 = vadd.xlane.f32.xlu0 %v1306
        %v1317 = vpop.xlane.xlu0 %1316
        %1318 = vadd.xlane.f32.xlu0 %v1307
        %v1319 = vpop.xlane.xlu0 %1318
        %1320 = vadd.xlane.f32.xlu0 %v1308
        %v1321 = vpop.xlane.xlu0 %1320
        %1322 = vadd.xlane.f32.xlu0 %v1309
        %v1323 = vpop.xlane.xlu0 %1322
        %1324 = vadd.xlane.f32.xlu0 %v1310
        %v1325 = vpop.xlane.xlu0 %1324
        %1326 = vadd.xlane.f32.xlu0 %v1311
        %v1327 = vpop.xlane.xlu0 %1326
        %v1328 = vmul.f32 %v1313, %v1287
        %v1329 = vmul.f32 %v1315, %v1287
        %v1330 = vmul.f32 %v1317, %v1287
        %v1331 = vmul.f32 %v1319, %v1287
        %v1332 = vmul.f32 %v1321, %v1287
        %v1333 = vmul.f32 %v1323, %v1287
        %v1334 = vmul.f32 %v1325, %v1287
        %v1335 = vmul.f32 %v1327, %v1287
        %v1336 = vadd.f32 %v1328, 1e-05
        %v1337 = vadd.f32 %v1329, 1e-05
        %v1338 = vadd.f32 %v1330, 1e-05
        %v1339 = vadd.f32 %v1331, 1e-05
        %v1340 = vadd.f32 %v1332, 1e-05
        %v1341 = vadd.f32 %v1333, 1e-05
        %v1342 = vadd.f32 %v1334, 1e-05
        %v1343 = vadd.f32 %v1335, 1e-05
        %v1344 = vrsqrt.pop %v1336
        %v1345 = vrsqrt.pop %v1337
        %v1346 = vrsqrt.pop %v1338
        %v1347 = vrsqrt.pop %v1339
        %v1348 = vrsqrt.pop %v1340
        %v1349 = vrsqrt.pop %v1341
        %v1350 = vrsqrt.pop %v1342
        %v1351 = vrsqrt.pop %v1343
        %v1352 = vmul.f32 %v1296, %v1344
        %v1353 = vmul.f32 %v1297, %v1345
        %v1354 = vmul.f32 %v1298, %v1346
        %v1355 = vmul.f32 %v1299, %v1347
        %v1356 = vmul.f32 %v1300, %v1348
        %v1357 = vmul.f32 %v1301, %v1349
        %v1358 = vmul.f32 %v1302, %v1350
        %v1359 = vmul.f32 %v1303, %v1351
        %v1361 = vlaneseq
        %v1362 = vshrl.u32 %v1361, 7
        %v1363 = vsub.s32 0, %v1362
        %v1364 = vrot.slane %v1269, %v1363
        %v1366 = vmul.f32 %v1352, %v1364
        %v1367 = vmul.f32 %v1353, %v1364
        %v1368 = vmul.f32 %v1354, %v1364
        %v1369 = vmul.f32 %v1355, %v1364
        %v1370 = vmul.f32 %v1356, %v1364
        %v1371 = vmul.f32 %v1357, %v1364
        %v1372 = vmul.f32 %v1358, %v1364
        %v1373 = vmul.f32 %v1359, %v1364
        %v1375 = vlaneseq
        %v1376 = vshrl.u32 %v1375, 7
        %v1377 = vsub.s32 0, %v1376
        %v1378 = vrot.slane %v1270, %v1377
        %v1380 = vadd.f32 %v1366, %v1378
        %v1381 = vadd.f32 %v1367, %v1378
        %v1382 = vadd.f32 %v1368, %v1378
        %v1383 = vadd.f32 %v1369, %v1378
        %v1384 = vadd.f32 %v1370, %v1378
        %v1385 = vadd.f32 %v1371, %v1378
        %v1386 = vadd.f32 %v1372, %v1378
        %v1387 = vadd.f32 %v1373, %v1378
        %v1388 = vld [vmem:[%s930] sm:$0xff]
        %v1389 = vld [vmem:[%s930 + $0x8] sm:$0xf]
        %v1390 = vld [vmem:[%s930 + $0xc] sm:$0xff]
        %v1391 = vld [vmem:[%s930 + $0x14] sm:$0xf]
        %v1392 = vld [vmem:[%s930 + $0x18] sm:$0xff]
        %v1393 = vld [vmem:[%s930 + $0x20] sm:$0xf]
        %v1394 = vld [vmem:[%s930 + $0x24] sm:$0xff]
        %v1395 = vld [vmem:[%s930 + $0x2c] sm:$0xf]
        %v1396 = vld [vmem:[%s930 + $0x30] sm:$0xff]
        %v1397 = vld [vmem:[%s930 + $0x38] sm:$0xf]
        %v1398 = vld [vmem:[%s930 + $0x3c] sm:$0xff]
        %v1399 = vld [vmem:[%s930 + $0x44] sm:$0xf]
        %v1400 = vld [vmem:[%s930 + $0x48] sm:$0xff]
        %v1401 = vld [vmem:[%s930 + $0x50] sm:$0xf]
        %v1402 = vld [vmem:[%s930 + $0x54] sm:$0xff]
        %v1403 = vld [vmem:[%s930 + $0x5c] sm:$0xf]
        %v1404 = vld [vmem:[%s930 + $0x60] sm:$0xff]
        %v1405 = vld [vmem:[%s930 + $0x68] sm:$0xf]
        %v1406 = vld [vmem:[%s930 + $0x6c] sm:$0xff]
        %v1407 = vld [vmem:[%s930 + $0x74] sm:$0xf]
        %v1408 = vld [vmem:[%s930 + $0x78] sm:$0xff]
        %v1409 = vld [vmem:[%s930 + $0x80] sm:$0xf]
        %v1410 = vld [vmem:[%s930 + $0x84] sm:$0xff]
        %v1411 = vld [vmem:[%s930 + $0x8c] sm:$0xf]
        %v1412 = vld [vmem:[%s930 + $0x90] sm:$0xff]
        %v1413 = vld [vmem:[%s930 + $0x98] sm:$0xf]
        %v1414 = vld [vmem:[%s930 + $0x9c] sm:$0xff]
        %v1415 = vld [vmem:[%s930 + $0xa4] sm:$0xf]
        %v1416 = vld [vmem:[%s930 + $0xa8] sm:$0xff]
        %v1417 = vld [vmem:[%s930 + $0xb0] sm:$0xf]
        %v1418 = vld [vmem:[%s930 + $0xb4] sm:$0xff]
        %v1419 = vld [vmem:[%s930 + $0xbc] sm:$0xf]
        %v1420 = vpack.c.bf16 %v1381, %v1380
        %v1421 = vpack.c.bf16 %v1383, %v1382
        %v1422 = vpack.c.bf16 %v1385, %v1384
        %v1423 = vpack.c.bf16 %v1387, %v1386
        %v1456 = vunpack.c.l.b16 %v1388
        %v1457 = vunpack.c.h.b16 %v1388
        %v1458 = vunpack.c.l.b16 %v1389
        %v1459 = vunpack.c.l.b16 %v1390
        %v1460 = vunpack.c.h.b16 %v1390
        %v1461 = vunpack.c.l.b16 %v1391
        %v1462 = vunpack.c.l.b16 %v1392
        %v1463 = vunpack.c.h.b16 %v1392
        %v1464 = vunpack.c.l.b16 %v1393
        %v1465 = vunpack.c.l.b16 %v1394
        %v1466 = vunpack.c.h.b16 %v1394
        %v1467 = vunpack.c.l.b16 %v1395
        %v1468 = vunpack.c.l.b16 %v1396
        %v1469 = vunpack.c.h.b16 %v1396
        %v1470 = vunpack.c.l.b16 %v1397
        %v1471 = vunpack.c.l.b16 %v1398
        %v1472 = vunpack.c.h.b16 %v1398
        %v1473 = vunpack.c.l.b16 %v1399
        %v1474 = vunpack.c.l.b16 %v1400
        %v1475 = vunpack.c.h.b16 %v1400
        %v1476 = vunpack.c.l.b16 %v1401
        %v1477 = vunpack.c.l.b16 %v1402
        %v1478 = vunpack.c.h.b16 %v1402
        %v1479 = vunpack.c.l.b16 %v1403
        %v1480 = vunpack.c.l.b16 %v1404
        %v1481 = vunpack.c.h.b16 %v1404
        %v1482 = vunpack.c.l.b16 %v1405
        %v1483 = vunpack.c.l.b16 %v1406
        %v1484 = vunpack.c.h.b16 %v1406
        %v1485 = vunpack.c.l.b16 %v1407
        %v1486 = vunpack.c.l.b16 %v1408
        %v1487 = vunpack.c.h.b16 %v1408
        %v1488 = vunpack.c.l.b16 %v1409
        %v1489 = vunpack.c.l.b16 %v1410
        %v1490 = vunpack.c.h.b16 %v1410
        %v1491 = vunpack.c.l.b16 %v1411
        %v1492 = vunpack.c.l.b16 %v1412
        %v1493 = vunpack.c.h.b16 %v1412
        %v1494 = vunpack.c.l.b16 %v1413
        %v1495 = vunpack.c.l.b16 %v1414
        %v1496 = vunpack.c.h.b16 %v1414
        %v1497 = vunpack.c.l.b16 %v1415
        %v1498 = vunpack.c.l.b16 %v1416
        %v1499 = vunpack.c.h.b16 %v1416
        %v1500 = vunpack.c.l.b16 %v1417
        %v1501 = vunpack.c.l.b16 %v1418
        %v1502 = vunpack.c.h.b16 %v1418
        %v1503 = vunpack.c.l.b16 %v1419
        %v1504 = vpack.c.b16 %v1459, %v1456
        %v1505 = vpack.c.b16 %v1460, %v1457
        %v1506 = vpack.c.b16 %v1461, %v1458
        %v1507 = vpack.c.b16 %v1465, %v1462
        %v1508 = vpack.c.b16 %v1466, %v1463
        %v1509 = vpack.c.b16 %v1467, %v1464
        %v1510 = vpack.c.b16 %v1471, %v1468
        %v1511 = vpack.c.b16 %v1472, %v1469
        %v1512 = vpack.c.b16 %v1473, %v1470
        %v1513 = vpack.c.b16 %v1477, %v1474
        %v1514 = vpack.c.b16 %v1478, %v1475
        %v1515 = vpack.c.b16 %v1479, %v1476
        %v1516 = vpack.c.b16 %v1483, %v1480
        %v1517 = vpack.c.b16 %v1484, %v1481
        %v1518 = vpack.c.b16 %v1485, %v1482
        %v1519 = vpack.c.b16 %v1489, %v1486
        %v1520 = vpack.c.b16 %v1490, %v1487
        %v1521 = vpack.c.b16 %v1491, %v1488
        %v1522 = vpack.c.b16 %v1495, %v1492
        %v1523 = vpack.c.b16 %v1496, %v1493
        %v1524 = vpack.c.b16 %v1497, %v1494
        %v1525 = vpack.c.b16 %v1501, %v1498
        %v1526 = vpack.c.b16 %v1502, %v1499
        %v1527 = vpack.c.b16 %v1503, %v1500
        %1552 = vmatprep.subr.bf16.mxu0 %v1505
        %1553 = vmatpush1.bf16.msra.mxu0 %v1504
        %1554 = vmatprep.subr.bf16.mxu0 %v1508
        %1555 = vmatpush1.bf16.msra.mxu0 %v1507
        %1556 = vmatprep.subr.bf16.mxu0 %v1511
        %1557 = vmatpush1.bf16.msra.mxu0 %v1510
        %1558 = vmatprep.subr.bf16.mxu0 %v1514
        %1559 = vmatpush1.bf16.msra.mxu0 %v1513
        %1560 = vmatprep.subr.bf16.mxu0 %v1517
        %1561 = vmatpush1.bf16.msra.mxu0 %v1516
        %1562 = vmatprep.subr.bf16.mxu0 %v1520
        %1563 = vmatpush1.bf16.msra.mxu0 %v1519
        %1564 = vmatprep.subr.bf16.mxu0 %v1523
        %1565 = vmatpush1.bf16.msra.mxu0 %v1522
        %1566 = vmatprep.subr.bf16.mxu0 %v1526
        %1567 = vmatpush1.bf16.msra.mxu0 %v1525
        %1568 = vmatprep.subr.bf16.mxu0 0
        %1569 = vmatpush1.bf16.msra.mxu0 0
        %1570 = vmatprep.subr.bf16.mxu0 0
        %1571 = vmatpush1.bf16.msra.mxu0 0
        %1572 = vmatprep.subr.bf16.mxu0 0
        %1573 = vmatpush1.bf16.msra.mxu0 0
        %1574 = vmatprep.subr.bf16.mxu0 0
        %1575 = vmatpush1.bf16.msra.mxu0 0
        %1576 = vmatprep.subr.bf16.mxu0 0
        %1577 = vmatpush1.bf16.msra.mxu0 0
        %1578 = vmatprep.subr.bf16.mxu0 0
        %1579 = vmatpush1.bf16.msra.mxu0 0
        %1580 = vmatprep.subr.bf16.mxu0 0
        %1581 = vmatpush1.bf16.msra.mxu0 0
        %1582 = vmatprep.subr.bf16.mxu0 0
        %1583 = vmatpush1.bf16.msra.mxu0 0
        %1584 = vmatprep.mubr.bf16.mxu0 0
        %1585 = vmatmul.mubr.bf16.gmra.mrb[0].mxu0 %v1420
        %v1586 = vpop.f32.mrb[0].mxu0
        %v1587 = vadd.f32 0.0, %v1586
        %v1588 = vpop.f32.mrb[0].mxu0
        %v1589 = vadd.f32 0.0, %v1588
        %v1590 = vpop.f32.mrb[0].mxu0
        %v1591 = vadd.f32 0.0, %v1590
        %v1592 = vpop.f32.mrb[0].mxu0
        %v1593 = vadd.f32 0.0, %v1592
        %1594 = vmatprep.mubr.bf16.mxu0 0
        %1595 = vmatmul.mubr.bf16.gmra.mrb[0].mxu0 %v1421
        %v1596 = vpop.f32.mrb[0].mxu0
        %v1597 = vadd.f32 0.0, %v1596
        %v1598 = vpop.f32.mrb[0].mxu0
        %v1599 = vadd.f32 0.0, %v1598
        %v1600 = vpop.f32.mrb[0].mxu0
        %v1601 = vadd.f32 0.0, %v1600
        %v1602 = vpop.f32.mrb[0].mxu0
        %v1603 = vadd.f32 0.0, %v1602
        %1604 = vmatprep.mubr.bf16.mxu0 0
        %1605 = vmatmul.mubr.bf16.gmra.mrb[0].mxu0 %v1422
        %v1606 = vpop.f32.mrb[0].mxu0
        %v1607 = vadd.f32 0.0, %v1606
        %v1608 = vpop.f32.mrb[0].mxu0
        %v1609 = vadd.f32 0.0, %v1608
        %v1610 = vpop.f32.mrb[0].mxu0
        %v1611 = vadd.f32 0.0, %v1610
        %v1612 = vpop.f32.mrb[0].mxu0
        %v1613 = vadd.f32 0.0, %v1612
        %1614 = vmatprep.mubr.bf16.mxu0 0
        %1615 = vmatmul.mubr.bf16.gmra.mrb[0].mxu0 %v1423
        %v1616 = vpop.f32.mrb[0].mxu0
        %v1617 = vadd.f32 0.0, %v1616
        %v1618 = vpop.f32.mrb[0].mxu0
        %v1619 = vadd.f32 0.0, %v1618
        %v1620 = vpop.f32.mrb[0].mxu0
        %v1621 = vadd.f32 0.0, %v1620
        %v1622 = vpop.f32.mrb[0].mxu0
        %v1623 = vadd.f32 0.0, %v1622
        %1624 = vdwg.mxu0
        %1625 = vmatprep.subr.bf16.mxu0 0
        %1626 = vmatpush1.bf16.msra.mxu0 %v1506
        %1627 = vmatprep.subr.bf16.mxu0 0
        %1628 = vmatpush1.bf16.msra.mxu0 %v1509
        %1629 = vmatprep.subr.bf16.mxu0 0
        %1630 = vmatpush1.bf16.msra.mxu0 %v1512
        %1631 = vmatprep.subr.bf16.mxu0 0
        %1632 = vmatpush1.bf16.msra.mxu0 %v1515
        %1633 = vmatprep.subr.bf16.mxu0 0
        %1634 = vmatpush1.bf16.msra.mxu0 %v1518
        %1635 = vmatprep.subr.bf16.mxu0 0
        %1636 = vmatpush1.bf16.msra.mxu0 %v1521
        %1637 = vmatprep.subr.bf16.mxu0 0
        %1638 = vmatpush1.bf16.msra.mxu0 %v1524
        %1639 = vmatprep.subr.bf16.mxu0 0
        %1640 = vmatpush1.bf16.msra.mxu0 %v1527
        %1641 = vmatprep.subr.bf16.mxu0 0
        %1642 = vmatpush1.bf16.msra.mxu0 0
        %1643 = vmatprep.subr.bf16.mxu0 0
        %1644 = vmatpush1.bf16.msra.mxu0 0
        %1645 = vmatprep.subr.bf16.mxu0 0
        %1646 = vmatpush1.bf16.msra.mxu0 0
        %1647 = vmatprep.subr.bf16.mxu0 0
        %1648 = vmatpush1.bf16.msra.mxu0 0
        %1649 = vmatprep.subr.bf16.mxu0 0
        %1650 = vmatpush1.bf16.msra.mxu0 0
        %1651 = vmatprep.subr.bf16.mxu0 0
        %1652 = vmatpush1.bf16.msra.mxu0 0
        %1653 = vmatprep.subr.bf16.mxu0 0
        %1654 = vmatpush1.bf16.msra.mxu0 0
        %1655 = vmatprep.subr.bf16.mxu0 0
        %1656 = vmatpush1.bf16.msra.mxu0 0
        %1657 = vmatprep.mubr.bf16.mxu0 0
        %1658 = vmatmul.mubr.bf16.gmra.mrb[0].mxu0 %v1420
        %v1659 = vpop.f32.mrb[0].mxu0
        %v1660 = vadd.f32 0.0, %v1659
        %v1661 = vpop.f32.mrb[0].mxu0
        %v1662 = vpop.f32.mrb[0].mxu0
        %v1663 = vadd.f32 0.0, %v1662
        %v1664 = vpop.f32.mrb[0].mxu0
        %1665 = vmatprep.mubr.bf16.mxu0 0
        %1666 = vmatmul.mubr.bf16.gmra.mrb[0].mxu0 %v1421
        %v1667 = vpop.f32.mrb[0].mxu0
        %v1668 = vadd.f32 0.0, %v1667
        %v1669 = vpop.f32.mrb[0].mxu0
        %v1670 = vpop.f32.mrb[0].mxu0
        %v1671 = vadd.f32 0.0, %v1670
        %v1672 = vpop.f32.mrb[0].mxu0
        %1673 = vmatprep.mubr.bf16.mxu0 0
        %1674 = vmatmul.mubr.bf16.gmra.mrb[0].mxu0 %v1422
        %v1675 = vpop.f32.mrb[0].mxu0
        %v1676 = vadd.f32 0.0, %v1675
        %v1677 = vpop.f32.mrb[0].mxu0
        %v1678 = vpop.f32.mrb[0].mxu0
        %v1679 = vadd.f32 0.0, %v1678
        %v1680 = vpop.f32.mrb[0].mxu0
        %1681 = vmatprep.mubr.bf16.mxu0 0
        %1682 = vmatmul.mubr.bf16.gmra.mrb[0].mxu0 %v1423
        %v1683 = vpop.f32.mrb[0].mxu0
        %v1684 = vadd.f32 0.0, %v1683
        %v1685 = vpop.f32.mrb[0].mxu0
        %v1686 = vpop.f32.mrb[0].mxu0
        %v1687 = vadd.f32 0.0, %v1686
        %v1688 = vpop.f32.mrb[0].mxu0
        %1689 = vdwg.mxu0
        %v1690 = vmax.f32 %v1589, %v1609
        %v1691 = vmax.f32 %v1593, %v1613
        %v1692 = vmax.f32 %v1599, %v1619
        %v1693 = vmax.f32 %v1603, %v1623
        %v1694 = vmax.f32 %v1690, %v1691
        %v1695 = vmax.f32 %v1692, %v1693
        %v1696 = vmax.f32 %v1694, %v1695
        %v1697 = vrot.slane %v1696, 4
        %v1698 = vmax.f32 %v1696, %v1697
        %v1699 = vrot.slane %v1698, 2
        %v1700 = vmax.f32 %v1698, %v1699
        %v1701 = vrot.slane %v1700, 1
        %v1702 = vmax.f32 %v1700, %v1701
        %v1703 = vsub.f32 %v1589, %v1702
        %v1704 = vsub.f32 %v1593, %v1702
        %v1705 = vsub.f32 %v1599, %v1702
        %v1706 = vsub.f32 %v1603, %v1702
        %v1707 = vsub.f32 %v1609, %v1702
        %v1708 = vsub.f32 %v1613, %v1702
        %v1709 = vsub.f32 %v1619, %v1702
        %v1710 = vsub.f32 %v1623, %v1702
        %v1711 = vmul.f32 %v1703, 1.442695
        %v1712 = vpow.pop %v1711
        %v1713 = vmul.f32 %v1704, 1.442695
        %v1714 = vpow.pop %v1713
        %v1715 = vmul.f32 %v1705, 1.442695
        %v1716 = vpow.pop %v1715
        %v1717 = vmul.f32 %v1706, 1.442695
        %v1718 = vpow.pop %v1717
        %v1719 = vmul.f32 %v1707, 1.442695
        %v1720 = vpow.pop %v1719
        %v1721 = vmul.f32 %v1708, 1.442695
        %v1722 = vpow.pop %v1721
        %v1723 = vmul.f32 %v1709, 1.442695
        %v1724 = vpow.pop %v1723
        %v1725 = vmul.f32 %v1710, 1.442695
        %v1726 = vpow.pop %v1725
        %v1727 = vadd.f32 %v1712, %v1714
        %v1728 = vadd.f32 %v1727, %v1716
        %v1729 = vadd.f32 %v1728, %v1718
        %v1730 = vadd.f32 %v1729, %v1720
        %v1731 = vadd.f32 %v1730, %v1722
        %v1732 = vadd.f32 %v1731, %v1724
        %v1733 = vadd.f32 %v1732, %v1726
        %v1734 = vrot.slane %v1733, 4
        %v1735 = vadd.f32 %v1733, %v1734
        %v1736 = vrot.slane %v1735, 2
        %v1737 = vadd.f32 %v1735, %v1736
        %v1738 = vrot.slane %v1737, 1
        %v1739 = vadd.f32 %v1737, %v1738
        %v1740 = vrcp.pop %v1739
        %v1741 = vmul.f32 %v1712, %v1740
        %v1742 = vmul.f32 %v1714, %v1740
        %v1743 = vmul.f32 %v1716, %v1740
        %v1744 = vmul.f32 %v1718, %v1740
        %v1745 = vmul.f32 %v1720, %v1740
        %v1746 = vmul.f32 %v1722, %v1740
        %v1747 = vmul.f32 %v1724, %v1740
        %v1748 = vmul.f32 %v1726, %v1740
        %1749 = vxpose.xlu0.b32.start [1/16] %v1741, 128
        %1750 = vxpose.xlu0.b32.cont [2/16] %v1742, 128
        %1751 = vxpose.xlu0.b32.cont [3/16] %v1743, 128
        %1752 = vxpose.xlu0.b32.cont [4/16] %v1744, 128
        %1753 = vxpose.xlu0.b32.cont [5/16] %v1745, 128
        %1754 = vxpose.xlu0.b32.cont [6/16] %v1746, 128
        %1755 = vxpose.xlu0.b32.cont [7/16] %v1747, 128
        %1756 = vxpose.xlu0.b32.cont [8/16] %v1748, 128
        %1757 = vxpose.xlu0.b32.cont [9/16] 0.0, 128
        %1758 = vxpose.xlu0.b32.cont [10/16] 0.0, 128
        %1759 = vxpose.xlu0.b32.cont [11/16] 0.0, 128
        %1760 = vxpose.xlu0.b32.cont [12/16] 0.0, 128
        %1761 = vxpose.xlu0.b32.cont [13/16] 0.0, 128
        %1762 = vxpose.xlu0.b32.cont [14/16] 0.0, 128
        %1763 = vxpose.xlu0.b32.cont [15/16] 0.0, 128
        %1764 = vxpose.xlu0.b32.end [16/16] 0.0, 128
        %v1765 = vpop.trf.xlu0
        %v1766 = vpop.trf.xlu0
        %v1767 = vpop.trf.xlu0
        %v1768 = vpop.trf.xlu0
        %v1769 = vpop.trf.xlu0
        %v1770 = vpop.trf.xlu0
        %v1771 = vpop.trf.xlu0
        %v1772 = vpop.trf.xlu0
        %v1773 = vpop.trf.xlu0
        %v1774 = vpop.trf.xlu0
        %v1775 = vpop.trf.xlu0
        %v1776 = vpop.trf.xlu0
        %v1777 = vpop.trf.xlu0
        %v1778 = vpop.trf.xlu0
        %v1779 = vpop.trf.xlu0
        %v1780 = vpop.trf.xlu0
        %v1781 = vpack.c.bf16 %v1766, %v1765
        %v1782 = vpack.c.bf16 %v1768, %v1767
        %v1783 = vpack.c.bf16 %v1770, %v1769
        %v1784 = vpack.c.bf16 %v1772, %v1771
        %v1785 = vpack.c.bf16 %v1774, %v1773
        %v1786 = vpack.c.bf16 %v1776, %v1775
        %v1787 = vpack.c.bf16 %v1778, %v1777
        %v1788 = vpack.c.bf16 %v1780, %v1779
        %v1789 = vpack.c.bf16 %v1663, %v1660
        %v1790 = vpack.c.bf16 %v1671, %v1668
        %v1791 = vpack.c.bf16 %v1679, %v1676
        %v1792 = vpack.c.bf16 %v1687, %v1684
        %vm1793 = vcmask 523264
        %v1795 = vsel %vm1793, %v1781, 0
        %v1798 = vsel %vm1793, %v1782, 0
        %v1801 = vsel %vm1793, %v1783, 0
        %v1804 = vsel %vm1793, %v1784, 0
        %v1807 = vsel %vm1793, %v1785, 0
        %v1810 = vsel %vm1793, %v1786, 0
        %v1813 = vsel %vm1793, %v1787, 0
        %v1816 = vsel %vm1793, %v1788, 0
        %1818 = vmatprep.subr.bf16.mxu0 0
        %1819 = vmatpush1.bf16.msra.mxu0 %v1789
        %1820 = vmatprep.subr.bf16.mxu0 0
        %1821 = vmatpush1.bf16.msra.mxu0 %v1790
        %1822 = vmatprep.subr.bf16.mxu0 0
        %1823 = vmatpush1.bf16.msra.mxu0 %v1791
        %1824 = vmatprep.subr.bf16.mxu0 0
        %1825 = vmatpush1.bf16.msra.mxu0 %v1792
        %1826 = vmatprep.subr.bf16.mxu0 0
        %1827 = vmatpush1.bf16.msra.mxu0 0
        %1828 = vmatprep.subr.bf16.mxu0 0
        %1829 = vmatpush1.bf16.msra.mxu0 0
        %1830 = vmatprep.subr.bf16.mxu0 0
        %1831 = vmatpush1.bf16.msra.mxu0 0
        %1832 = vmatprep.subr.bf16.mxu0 0
        %1833 = vmatpush1.bf16.msra.mxu0 0
        %1834 = vmatprep.subr.bf16.mxu0 0
        %1835 = vmatpush1.bf16.msra.mxu0 0
        %1836 = vmatprep.subr.bf16.mxu0 0
        %1837 = vmatpush1.bf16.msra.mxu0 0
        %1838 = vmatprep.subr.bf16.mxu0 0
        %1839 = vmatpush1.bf16.msra.mxu0 0
        %1840 = vmatprep.subr.bf16.mxu0 0
        %1841 = vmatpush1.bf16.msra.mxu0 0
        %1842 = vmatprep.subr.bf16.mxu0 0
        %1843 = vmatpush1.bf16.msra.mxu0 0
        %1844 = vmatprep.subr.bf16.mxu0 0
        %1845 = vmatpush1.bf16.msra.mxu0 0
        %1846 = vmatprep.subr.bf16.mxu0 0
        %1847 = vmatpush1.bf16.msra.mxu0 0
        %1848 = vmatprep.subr.bf16.mxu0 0
        %1849 = vmatpush1.bf16.msra.mxu0 0
        %1850 = vmatprep.mubr.bf16.mxu0 0
        %1851 = vmatmul.mubr.bf16.gmra.mrb[0].mxu0 %v1795
        %v1852 = vpop.f32.mrb[0].mxu0
        %v1853 = vadd.f32 0.0, %v1852
        %v1854 = vpop.f32.mrb[0].mxu0
        %v1855 = vpop.f32.mrb[0].mxu0
        %v1856 = vadd.f32 0.0, %v1855
        %v1857 = vpop.f32.mrb[0].mxu0
        %1858 = vmatprep.mubr.bf16.mxu0 0
        %1859 = vmatmul.mubr.bf16.gmra.mrb[0].mxu0 %v1798
        %v1860 = vpop.f32.mrb[0].mxu0
        %v1861 = vadd.f32 0.0, %v1860
        %v1862 = vpop.f32.mrb[0].mxu0
        %v1863 = vpop.f32.mrb[0].mxu0
        %v1864 = vadd.f32 0.0, %v1863
        %v1865 = vpop.f32.mrb[0].mxu0
        %1866 = vmatprep.mubr.bf16.mxu0 0
        %1867 = vmatmul.mubr.bf16.gmra.mrb[0].mxu0 %v1801
        %v1868 = vpop.f32.mrb[0].mxu0
        %v1869 = vadd.f32 0.0, %v1868
        %v1870 = vpop.f32.mrb[0].mxu0
        %v1871 = vpop.f32.mrb[0].mxu0
        %v1872 = vadd.f32 0.0, %v1871
        %v1873 = vpop.f32.mrb[0].mxu0
        %1874 = vmatprep.mubr.bf16.mxu0 0
        %1875 = vmatmul.mubr.bf16.gmra.mrb[0].mxu0 %v1804
        %v1876 = vpop.f32.mrb[0].mxu0
        %v1877 = vadd.f32 0.0, %v1876
        %v1878 = vpop.f32.mrb[0].mxu0
        %v1879 = vpop.f32.mrb[0].mxu0
        %v1880 = vadd.f32 0.0, %v1879
        %v1881 = vpop.f32.mrb[0].mxu0
        %1882 = vmatprep.mubr.bf16.mxu0 0
        %1883 = vmatmul.mubr.bf16.gmra.mrb[0].mxu0 %v1807
        %v1884 = vpop.f32.mrb[0].mxu0
        %v1885 = vadd.f32 0.0, %v1884
        %v1886 = vpop.f32.mrb[0].mxu0
        %v1887 = vpop.f32.mrb[0].mxu0
        %v1888 = vadd.f32 0.0, %v1887
        %v1889 = vpop.f32.mrb[0].mxu0
        %1890 = vmatprep.mubr.bf16.mxu0 0
        %1891 = vmatmul.mubr.bf16.gmra.mrb[0].mxu0 %v1810
        %v1892 = vpop.f32.mrb[0].mxu0
        %v1893 = vadd.f32 0.0, %v1892
        %v1894 = vpop.f32.mrb[0].mxu0
        %v1895 = vpop.f32.mrb[0].mxu0
        %v1896 = vadd.f32 0.0, %v1895
        %v1897 = vpop.f32.mrb[0].mxu0
        %1898 = vmatprep.mubr.bf16.mxu0 0
        %1899 = vmatmul.mubr.bf16.gmra.mrb[0].mxu0 %v1813
        %v1900 = vpop.f32.mrb[0].mxu0
        %v1901 = vadd.f32 0.0, %v1900
        %v1902 = vpop.f32.mrb[0].mxu0
        %v1903 = vpop.f32.mrb[0].mxu0
        %v1904 = vadd.f32 0.0, %v1903
        %v1905 = vpop.f32.mrb[0].mxu0
        %1906 = vmatprep.mubr.bf16.mxu0 0
        %1907 = vmatmul.mubr.bf16.gmra.mrb[0].mxu0 %v1816
        %v1908 = vpop.f32.mrb[0].mxu0
        %v1909 = vadd.f32 0.0, %v1908
        %v1910 = vpop.f32.mrb[0].mxu0
        %v1911 = vpop.f32.mrb[0].mxu0
        %v1912 = vadd.f32 0.0, %v1911
        %v1913 = vpop.f32.mrb[0].mxu0
        %1914 = vdwg.mxu0
        %v1915 = vld [vmem:[%s5] sm:$0xff]
        %v1916 = vld [vmem:[%s5 + $0x8] sm:$0xff]
        %v1917 = vld [vmem:[%s5 + $0x10] sm:$0xff]
        %v1918 = vld [vmem:[%s5 + $0x18] sm:$0xff]
        %v1919 = vld [vmem:[%s5 + $0x20] sm:$0xff]
        %v1920 = vld [vmem:[%s5 + $0x28] sm:$0xff]
        %v1921 = vld [vmem:[%s5 + $0x30] sm:$0xff]
        %v1922 = vld [vmem:[%s5 + $0x38] sm:$0xff]
        %v1923 = vld [vmem:[%s5 + $0x40] sm:$0xff]
        %v1924 = vld [vmem:[%s5 + $0x48] sm:$0xff]
        %v1925 = vld [vmem:[%s5 + $0x50] sm:$0xff]
        %v1926 = vld [vmem:[%s5 + $0x58] sm:$0xff]
        %v1927 = vld [vmem:[%s5 + $0x60] sm:$0xff]
        %v1928 = vld [vmem:[%s5 + $0x68] sm:$0xff]
        %v1929 = vld [vmem:[%s5 + $0x70] sm:$0xff]
        %v1930 = vld [vmem:[%s5 + $0x78] sm:$0xff]
        %v1931 = vmul.f32 %v1853, %v1915
        %v1932 = vmul.f32 %v1856, %v1916
        %v1933 = vmul.f32 %v1861, %v1917
        %v1934 = vmul.f32 %v1864, %v1918
        %v1935 = vmul.f32 %v1869, %v1919
        %v1936 = vmul.f32 %v1872, %v1920
        %v1937 = vmul.f32 %v1877, %v1921
        %v1938 = vmul.f32 %v1880, %v1922
        %v1939 = vmul.f32 %v1885, %v1923
        %v1940 = vmul.f32 %v1888, %v1924
        %v1941 = vmul.f32 %v1893, %v1925
        %v1942 = vmul.f32 %v1896, %v1926
        %v1943 = vmul.f32 %v1901, %v1927
        %v1944 = vmul.f32 %v1904, %v1928
        %v1945 = vmul.f32 %v1909, %v1929
        %v1946 = vmul.f32 %v1912, %v1930
        %v1947 = vpack.c.bf16 %v1591, %v1587
        %v1948 = vpack.c.bf16 %v1601, %v1597
        %v1949 = vpack.c.bf16 %v1611, %v1607
        %v1950 = vpack.c.bf16 %v1621, %v1617
        %v1951 = vpack.c.bf16 %v1932, %v1931
        %v1952 = vpack.c.bf16 %v1934, %v1933
        %v1953 = vpack.c.bf16 %v1936, %v1935
        %v1954 = vpack.c.bf16 %v1938, %v1937
        %v1955 = vpack.c.bf16 %v1940, %v1939
        %v1956 = vpack.c.bf16 %v1942, %v1941
        %v1957 = vpack.c.bf16 %v1944, %v1943
        %v1958 = vpack.c.bf16 %v1946, %v1945
        %1959 = vmatprep.subr.bf16.mxu0 0
        %1960 = vmatpush1.bf16.msra.mxu0 %v1951
        %1961 = vmatprep.subr.bf16.mxu0 0
        %1962 = vmatpush1.bf16.msra.mxu0 %v1952
        %1963 = vmatprep.subr.bf16.mxu0 0
        %1964 = vmatpush1.bf16.msra.mxu0 %v1953
        %1965 = vmatprep.subr.bf16.mxu0 0
        %1966 = vmatpush1.bf16.msra.mxu0 %v1954
        %1967 = vmatprep.subr.bf16.mxu0 0
        %1968 = vmatpush1.bf16.msra.mxu0 %v1955
        %1969 = vmatprep.subr.bf16.mxu0 0
        %1970 = vmatpush1.bf16.msra.mxu0 %v1956
        %1971 = vmatprep.subr.bf16.mxu0 0
        %1972 = vmatpush1.bf16.msra.mxu0 %v1957
        %1973 = vmatprep.subr.bf16.mxu0 0
        %1974 = vmatpush1.bf16.msra.mxu0 %v1958
        %1975 = vmatprep.subr.bf16.mxu0 0
        %1976 = vmatpush1.bf16.msra.mxu0 0
        %1977 = vmatprep.subr.bf16.mxu0 0
        %1978 = vmatpush1.bf16.msra.mxu0 0
        %1979 = vmatprep.subr.bf16.mxu0 0
        %1980 = vmatpush1.bf16.msra.mxu0 0
        %1981 = vmatprep.subr.bf16.mxu0 0
        %1982 = vmatpush1.bf16.msra.mxu0 0
        %1983 = vmatprep.subr.bf16.mxu0 0
        %1984 = vmatpush1.bf16.msra.mxu0 0
        %1985 = vmatprep.subr.bf16.mxu0 0
        %1986 = vmatpush1.bf16.msra.mxu0 0
        %1987 = vmatprep.subr.bf16.mxu0 0
        %1988 = vmatpush1.bf16.msra.mxu0 0
        %1989 = vmatprep.subr.bf16.mxu0 0
        %1990 = vmatpush1.bf16.msra.mxu0 0
        %1991 = vmatprep.mubr.bf16.mxu0 0
        %1992 = vmatmul.mubr.bf16.gmra.mrb[0].mxu0 %v1947
        %v1993 = vpop.f32.mrb[0].mxu0
        %v1994 = vadd.f32 0.0, %v1993
        %v1995 = vpop.f32.mrb[0].mxu0
        %v1996 = vpop.f32.mrb[0].mxu0
        %v1997 = vadd.f32 0.0, %v1996
        %v1998 = vpop.f32.mrb[0].mxu0
        %1999 = vmatprep.mubr.bf16.mxu0 0
        %2000 = vmatmul.mubr.bf16.gmra.mrb[0].mxu0 %v1948
        %v2001 = vpop.f32.mrb[0].mxu0
        %v2002 = vadd.f32 0.0, %v2001
        %v2003 = vpop.f32.mrb[0].mxu0
        %v2004 = vpop.f32.mrb[0].mxu0
        %v2005 = vadd.f32 0.0, %v2004
        %v2006 = vpop.f32.mrb[0].mxu0
        %2007 = vmatprep.mubr.bf16.mxu0 0
        %2008 = vmatmul.mubr.bf16.gmra.mrb[0].mxu0 %v1949
        %v2009 = vpop.f32.mrb[0].mxu0
        %v2010 = vadd.f32 0.0, %v2009
        %v2011 = vpop.f32.mrb[0].mxu0
        %v2012 = vpop.f32.mrb[0].mxu0
        %v2013 = vadd.f32 0.0, %v2012
        %v2014 = vpop.f32.mrb[0].mxu0
        %2015 = vmatprep.mubr.bf16.mxu0 0
        %2016 = vmatmul.mubr.bf16.gmra.mrb[0].mxu0 %v1950
        %v2017 = vpop.f32.mrb[0].mxu0
        %v2018 = vadd.f32 0.0, %v2017
        %v2019 = vpop.f32.mrb[0].mxu0
        %v2020 = vpop.f32.mrb[0].mxu0
        %v2021 = vadd.f32 0.0, %v2020
        %v2022 = vpop.f32.mrb[0].mxu0
        %2023 = vdwg.mxu0
        %v2024 = vld [vmem:[%s1113] sm:$0xf]
        %v2025 = vld [vmem:[%s1113 + $0x4] sm:$0xf]
        %v2026 = vld [vmem:[%s1113 + $0x8] sm:$0xf]
        %v2027 = vld [vmem:[%s1113 + $0xc] sm:$0xf]
        %v2028 = vld [vmem:[%s1113 + $0x10] sm:$0xf]
        %v2029 = vld [vmem:[%s1113 + $0x14] sm:$0xf]
        %v2030 = vld [vmem:[%s1113 + $0x18] sm:$0xf]
        %v2031 = vld [vmem:[%s1113 + $0x1c] sm:$0xf]
        %v2032 = vld [vmem:[%s1113 + $0x20] sm:$0xf]
        %v2033 = vld [vmem:[%s1113 + $0x24] sm:$0xf]
        %v2034 = vld [vmem:[%s1113 + $0x28] sm:$0xf]
        %v2035 = vld [vmem:[%s1113 + $0x2c] sm:$0xf]
        %v2036 = vld [vmem:[%s1113 + $0x30] sm:$0xf]
        %v2037 = vld [vmem:[%s1113 + $0x34] sm:$0xf]
        %v2038 = vld [vmem:[%s1113 + $0x38] sm:$0xf]
        %v2039 = vld [vmem:[%s1113 + $0x3c] sm:$0xf]
        %v2040 = vpack.c.bf16 %v1997, %v1994
        %v2041 = vpack.c.bf16 %v2005, %v2002
        %v2042 = vpack.c.bf16 %v2013, %v2010
        %v2043 = vpack.c.bf16 %v2021, %v2018
        %v2044 = vld [vmem:[%s938] sm:$0x1]
        %v2046 = vlaneseq
        %v2047 = vshrl.u32 %v2046, 7
        %v2048 = vsub.s32 0, %v2047
        %v2049 = vrot.slane %v2044, %v2048
        %v2067 = vunpack.c.l.b16 %v2024
        %v2068 = vunpack.c.l.b16 %v2025
        %v2069 = vunpack.c.l.b16 %v2026
        %v2070 = vunpack.c.l.b16 %v2027
        %v2071 = vunpack.c.l.b16 %v2028
        %v2072 = vunpack.c.l.b16 %v2029
        %v2073 = vunpack.c.l.b16 %v2030
        %v2074 = vunpack.c.l.b16 %v2031
        %v2075 = vunpack.c.l.b16 %v2032
        %v2076 = vunpack.c.l.b16 %v2033
        %v2077 = vunpack.c.l.b16 %v2034
        %v2078 = vunpack.c.l.b16 %v2035
        %v2079 = vunpack.c.l.b16 %v2036
        %v2080 = vunpack.c.l.b16 %v2037
        %v2081 = vunpack.c.l.b16 %v2038
        %v2082 = vunpack.c.l.b16 %v2039
        %v2083 = vpack.c.b16 %v2068, %v2067
        %v2084 = vpack.c.b16 %v2070, %v2069
        %v2085 = vpack.c.b16 %v2072, %v2071
        %v2086 = vpack.c.b16 %v2074, %v2073
        %v2087 = vpack.c.b16 %v2076, %v2075
        %v2088 = vpack.c.b16 %v2078, %v2077
        %v2089 = vpack.c.b16 %v2080, %v2079
        %v2090 = vpack.c.b16 %v2082, %v2081
        %2099 = vmatprep.subr.bf16.mxu0 0
        %2100 = vmatpush1.bf16.msra.mxu0 %v2083
        %2101 = vmatprep.subr.bf16.mxu0 0
        %2102 = vmatpush1.bf16.msra.mxu0 %v2084
        %2103 = vmatprep.subr.bf16.mxu0 0
        %2104 = vmatpush1.bf16.msra.mxu0 %v2085
        %2105 = vmatprep.subr.bf16.mxu0 0
        %2106 = vmatpush1.bf16.msra.mxu0 %v2086
        %2107 = vmatprep.subr.bf16.mxu0 0
        %2108 = vmatpush1.bf16.msra.mxu0 %v2087
        %2109 = vmatprep.subr.bf16.mxu0 0
        %2110 = vmatpush1.bf16.msra.mxu0 %v2088
        %2111 = vmatprep.subr.bf16.mxu0 0
        %2112 = vmatpush1.bf16.msra.mxu0 %v2089
        %2113 = vmatprep.subr.bf16.mxu0 0
        %2114 = vmatpush1.bf16.msra.mxu0 %v2090
        %2115 = vmatprep.subr.bf16.mxu0 0
        %2116 = vmatpush1.bf16.msra.mxu0 0
        %2117 = vmatprep.subr.bf16.mxu0 0
        %2118 = vmatpush1.bf16.msra.mxu0 0
        %2119 = vmatprep.subr.bf16.mxu0 0
        %2120 = vmatpush1.bf16.msra.mxu0 0
        %2121 = vmatprep.subr.bf16.mxu0 0
        %2122 = vmatpush1.bf16.msra.mxu0 0
        %2123 = vmatprep.subr.bf16.mxu0 0
        %2124 = vmatpush1.bf16.msra.mxu0 0
        %2125 = vmatprep.subr.bf16.mxu0 0
        %2126 = vmatpush1.bf16.msra.mxu0 0
        %2127 = vmatprep.subr.bf16.mxu0 0
        %2128 = vmatpush1.bf16.msra.mxu0 0
        %2129 = vmatprep.subr.bf16.mxu0 0
        %2130 = vmatpush1.bf16.msra.mxu0 0
        %2131 = vmatprep.mubr.bf16.mxu0 0
        %2132 = vmatmul.mubr.bf16.gmra.mrb[0].mxu0 %v2040
        %v2133 = vpop.f32.mrb[0].mxu0
        %v2134 = vadd.f32 %v2049, %v2133
        %v2135 = vpop.f32.mrb[0].mxu0
        %v2136 = vpop.f32.mrb[0].mxu0
        %v2137 = vadd.f32 %v2049, %v2136
        %v2138 = vpop.f32.mrb[0].mxu0
        %2139 = vmatprep.mubr.bf16.mxu0 0
        %2140 = vmatmul.mubr.bf16.gmra.mrb[0].mxu0 %v2041
        %v2141 = vpop.f32.mrb[0].mxu0
        %v2142 = vadd.f32 %v2049, %v2141
        %v2143 = vpop.f32.mrb[0].mxu0
        %v2144 = vpop.f32.mrb[0].mxu0
        %v2145 = vadd.f32 %v2049, %v2144
        %v2146 = vpop.f32.mrb[0].mxu0
        %2147 = vmatprep.mubr.bf16.mxu0 0
        %2148 = vmatmul.mubr.bf16.gmra.mrb[0].mxu0 %v2042
        %v2149 = vpop.f32.mrb[0].mxu0
        %v2150 = vadd.f32 %v2049, %v2149
        %v2151 = vpop.f32.mrb[0].mxu0
        %v2152 = vpop.f32.mrb[0].mxu0
        %v2153 = vadd.f32 %v2049, %v2152
        %v2154 = vpop.f32.mrb[0].mxu0
        %2155 = vmatprep.mubr.bf16.mxu0 0
        %2156 = vmatmul.mubr.bf16.gmra.mrb[0].mxu0 %v2043
        %v2157 = vpop.f32.mrb[0].mxu0
        %v2158 = vadd.f32 %v2049, %v2157
        %v2159 = vpop.f32.mrb[0].mxu0
        %v2160 = vpop.f32.mrb[0].mxu0
        %v2161 = vadd.f32 %v2049, %v2160
        %v2162 = vpop.f32.mrb[0].mxu0
        %2163 = vdwg.mxu0
        %v2164 = vadd.f32 %v1261, %v2134
        %v2165 = vadd.f32 %v1262, %v2137
        %v2166 = vadd.f32 %v1263, %v2142
        %v2167 = vadd.f32 %v1264, %v2145
        %v2168 = vadd.f32 %v1265, %v2150
        %v2169 = vadd.f32 %v1266, %v2153
        %v2170 = vadd.f32 %v1267, %v2158
        %v2171 = vadd.f32 %v1268, %v2161
        %v2172 = vld [vmem:[%s946] sm:$0x1]
        %v2173 = vld [vmem:[%s954] sm:$0x1]
        %2174 = vadd.xlane.f32.xlu0 %v2164
        %v2175 = vpop.xlane.xlu0 %2174
        %2176 = vadd.xlane.f32.xlu0 %v2165
        %v2177 = vpop.xlane.xlu0 %2176
        %2178 = vadd.xlane.f32.xlu0 %v2166
        %v2179 = vpop.xlane.xlu0 %2178
        %2180 = vadd.xlane.f32.xlu0 %v2167
        %v2181 = vpop.xlane.xlu0 %2180
        %2182 = vadd.xlane.f32.xlu0 %v2168
        %v2183 = vpop.xlane.xlu0 %2182
        %2184 = vadd.xlane.f32.xlu0 %v2169
        %v2185 = vpop.xlane.xlu0 %2184
        %2186 = vadd.xlane.f32.xlu0 %v2170
        %v2187 = vpop.xlane.xlu0 %2186
        %2188 = vadd.xlane.f32.xlu0 %v2171
        %v2189 = vpop.xlane.xlu0 %2188
        %v2190 = vmul.f32 %v2175, %v1287
        %v2191 = vmul.f32 %v2177, %v1287
        %v2192 = vmul.f32 %v2179, %v1287
        %v2193 = vmul.f32 %v2181, %v1287
        %v2194 = vmul.f32 %v2183, %v1287
        %v2195 = vmul.f32 %v2185, %v1287
        %v2196 = vmul.f32 %v2187, %v1287
        %v2197 = vmul.f32 %v2189, %v1287
        %v2198 = vsub.f32 %v2164, %v2190
        %v2199 = vsub.f32 %v2165, %v2191
        %v2200 = vsub.f32 %v2166, %v2192
        %v2201 = vsub.f32 %v2167, %v2193
        %v2202 = vsub.f32 %v2168, %v2194
        %v2203 = vsub.f32 %v2169, %v2195
        %v2204 = vsub.f32 %v2170, %v2196
        %v2205 = vsub.f32 %v2171, %v2197
        %v2206 = vmul.f32 %v2198, %v2198
        %v2207 = vmul.f32 %v2199, %v2199
        %v2208 = vmul.f32 %v2200, %v2200
        %v2209 = vmul.f32 %v2201, %v2201
        %v2210 = vmul.f32 %v2202, %v2202
        %v2211 = vmul.f32 %v2203, %v2203
        %v2212 = vmul.f32 %v2204, %v2204
        %v2213 = vmul.f32 %v2205, %v2205
        %2214 = vadd.xlane.f32.xlu0 %v2206
        %v2215 = vpop.xlane.xlu0 %2214
        %2216 = vadd.xlane.f32.xlu0 %v2207
        %v2217 = vpop.xlane.xlu0 %2216
        %2218 = vadd.xlane.f32.xlu0 %v2208
        %v2219 = vpop.xlane.xlu0 %2218
        %2220 = vadd.xlane.f32.xlu0 %v2209
        %v2221 = vpop.xlane.xlu0 %2220
        %2222 = vadd.xlane.f32.xlu0 %v2210
        %v2223 = vpop.xlane.xlu0 %2222
        %2224 = vadd.xlane.f32.xlu0 %v2211
        %v2225 = vpop.xlane.xlu0 %2224
        %2226 = vadd.xlane.f32.xlu0 %v2212
        %v2227 = vpop.xlane.xlu0 %2226
        %2228 = vadd.xlane.f32.xlu0 %v2213
        %v2229 = vpop.xlane.xlu0 %2228
        %v2230 = vmul.f32 %v2215, %v1287
        %v2231 = vmul.f32 %v2217, %v1287
        %v2232 = vmul.f32 %v2219, %v1287
        %v2233 = vmul.f32 %v2221, %v1287
        %v2234 = vmul.f32 %v2223, %v1287
        %v2235 = vmul.f32 %v2225, %v1287
        %v2236 = vmul.f32 %v2227, %v1287
        %v2237 = vmul.f32 %v2229, %v1287
        %v2238 = vadd.f32 %v2230, 1e-05
        %v2239 = vadd.f32 %v2231, 1e-05
        %v2240 = vadd.f32 %v2232, 1e-05
        %v2241 = vadd.f32 %v2233, 1e-05
        %v2242 = vadd.f32 %v2234, 1e-05
        %v2243 = vadd.f32 %v2235, 1e-05
        %v2244 = vadd.f32 %v2236, 1e-05
        %v2245 = vadd.f32 %v2237, 1e-05
        %v2246 = vrsqrt.pop %v2238
        %v2247 = vrsqrt.pop %v2239
        %v2248 = vrsqrt.pop %v2240
        %v2249 = vrsqrt.pop %v2241
        %v2250 = vrsqrt.pop %v2242
        %v2251 = vrsqrt.pop %v2243
        %v2252 = vrsqrt.pop %v2244
        %v2253 = vrsqrt.pop %v2245
        %v2254 = vmul.f32 %v2198, %v2246
        %v2255 = vmul.f32 %v2199, %v2247
        %v2256 = vmul.f32 %v2200, %v2248
        %v2257 = vmul.f32 %v2201, %v2249
        %v2258 = vmul.f32 %v2202, %v2250
        %v2259 = vmul.f32 %v2203, %v2251
        %v2260 = vmul.f32 %v2204, %v2252
        %v2261 = vmul.f32 %v2205, %v2253
        %v2263 = vlaneseq
        %v2264 = vshrl.u32 %v2263, 7
        %v2265 = vsub.s32 0, %v2264
        %v2266 = vrot.slane %v2172, %v2265
        %v2268 = vmul.f32 %v2254, %v2266
        %v2269 = vmul.f32 %v2255, %v2266
        %v2270 = vmul.f32 %v2256, %v2266
        %v2271 = vmul.f32 %v2257, %v2266
        %v2272 = vmul.f32 %v2258, %v2266
        %v2273 = vmul.f32 %v2259, %v2266
        %v2274 = vmul.f32 %v2260, %v2266
        %v2275 = vmul.f32 %v2261, %v2266
        %v2277 = vlaneseq
        %v2278 = vshrl.u32 %v2277, 7
        %v2279 = vsub.s32 0, %v2278
        %v2280 = vrot.slane %v2173, %v2279
        %v2282 = vadd.f32 %v2268, %v2280
        %v2283 = vadd.f32 %v2269, %v2280
        %v2284 = vadd.f32 %v2270, %v2280
        %v2285 = vadd.f32 %v2271, %v2280
        %v2286 = vadd.f32 %v2272, %v2280
        %v2287 = vadd.f32 %v2273, %v2280
        %v2288 = vadd.f32 %v2274, %v2280
        %v2289 = vadd.f32 %v2275, %v2280
        %v2290 = vld [vmem:[%s989] sm:$0x1]
        %v2292 = vlaneseq
        %v2293 = vshrl.u32 %v2292, 7
        %v2294 = vsub.s32 0, %v2293
        %v2295 = vrot.slane %v2290, %v2294
        %v2297 = vadd.f32 %v2295, 0.0
        loop: start=0, step=1, limit=4
        $region169: #{tpu_custom_call.1} parent=111 // loop_pre_header
          _
        $region170: #{tpu_custom_call.1} parent=111 // loop_header
          %s2299 = sphi 0, %s2303
          %p2300 = scmp.ge.s32.totalorder %s2299, 4
          %v2304 = vphi %v2297, %v2803
          %v2305 = vphi %v2297, %v2804
          %v2306 = vphi %v2297, %v2805
          %v2307 = vphi %v2297, %v2806
          %v2308 = vphi %v2297, %v2807
          %v2309 = vphi %v2297, %v2808
          %v2310 = vphi %v2297, %v2809
          %v2311 = vphi %v2297, %v2810
        $region171: #{tpu_custom_call.1} parent=111 // loop_header_branch
          %2302 = sbr.rel (%p2300) target = $region175
        $region172: #{tpu_custom_call.1} parent=111 // loop_body
          %s2312 = smul.u32 %s2299, 128
          %s2313 = sshra.s32 %s2312, 7
          %s2314 = sand.u32 %s2312, 127
          %s2315 = smul.addr %s2313, 4
          %s2316 = scalar_lea.vmem %s963, %s2315 [#allocation14]
          %v2317 = vld [vmem:[%s2316] sm:$0xf]
          %v2318 = vld [vmem:[%s2316 + $0x10] sm:$0xf]
          %v2319 = vld [vmem:[%s2316 + $0x20] sm:$0xf]
          %v2320 = vld [vmem:[%s2316 + $0x30] sm:$0xf]
          %v2321 = vld [vmem:[%s2316 + $0x40] sm:$0xf]
          %v2322 = vld [vmem:[%s2316 + $0x50] sm:$0xf]
          %v2323 = vld [vmem:[%s2316 + $0x60] sm:$0xf]
          %v2324 = vld [vmem:[%s2316 + $0x70] sm:$0xf]
          %v2325 = vld [vmem:[%s2316 + $0x80] sm:$0xf]
          %v2326 = vld [vmem:[%s2316 + $0x90] sm:$0xf]
          %v2327 = vld [vmem:[%s2316 + $0xa0] sm:$0xf]
          %v2328 = vld [vmem:[%s2316 + $0xb0] sm:$0xf]
          %v2329 = vld [vmem:[%s2316 + $0xc0] sm:$0xf]
          %v2330 = vld [vmem:[%s2316 + $0xd0] sm:$0xf]
          %v2331 = vld [vmem:[%s2316 + $0xe0] sm:$0xf]
          %v2332 = vld [vmem:[%s2316 + $0xf0] sm:$0xf]
          %s2333 = scalar_lea.vmem %s972, %s2313 [#allocation15]
          %v2334 = vld [vmem:[%s2333] sm:$0x1]
          %s2335 = sshra.s32 %s2312, 3
          %s2336 = sand.u32 %s2312, 7
          %s2337 = smul.addr %s2335, 4
          %s2338 = scalar_lea.vmem %s981, %s2337 [#allocation16]
          %v2339 = vld [vmem:[%s2338] sm:$0xf]
          %v2340 = vld [vmem:[%s2338 + $0x4] sm:$0xf]
          %v2341 = vld [vmem:[%s2338 + $0x8] sm:$0xf]
          %v2342 = vld [vmem:[%s2338 + $0xc] sm:$0xf]
          %v2343 = vld [vmem:[%s2338 + $0x10] sm:$0xf]
          %v2344 = vld [vmem:[%s2338 + $0x14] sm:$0xf]
          %v2345 = vld [vmem:[%s2338 + $0x18] sm:$0xf]
          %v2346 = vld [vmem:[%s2338 + $0x1c] sm:$0xf]
          %v2347 = vld [vmem:[%s2338 + $0x20] sm:$0xf]
          %v2348 = vld [vmem:[%s2338 + $0x24] sm:$0xf]
          %v2349 = vld [vmem:[%s2338 + $0x28] sm:$0xf]
          %v2350 = vld [vmem:[%s2338 + $0x2c] sm:$0xf]
          %v2351 = vld [vmem:[%s2338 + $0x30] sm:$0xf]
          %v2352 = vld [vmem:[%s2338 + $0x34] sm:$0xf]
          %v2353 = vld [vmem:[%s2338 + $0x38] sm:$0xf]
          %v2354 = vld [vmem:[%s2338 + $0x3c] sm:$0xf]
          %v2355 = vpack.c.bf16 %v2283, %v2282
          %v2356 = vpack.c.bf16 %v2285, %v2284
          %v2357 = vpack.c.bf16 %v2287, %v2286
          %v2358 = vpack.c.bf16 %v2289, %v2288
          %v2360 = vlaneseq
          %v2361 = vshrl.u32 %v2360, 7
          %v2362 = vsub.s32 0, %v2361
          %v2363 = vrot.slane %v2334, %v2362
          %v2381 = vunpack.c.l.b16 %v2317
          %v2382 = vunpack.c.l.b16 %v2318
          %v2383 = vunpack.c.l.b16 %v2319
          %v2384 = vunpack.c.l.b16 %v2320
          %v2385 = vunpack.c.l.b16 %v2321
          %v2386 = vunpack.c.l.b16 %v2322
          %v2387 = vunpack.c.l.b16 %v2323
          %v2388 = vunpack.c.l.b16 %v2324
          %v2389 = vunpack.c.l.b16 %v2325
          %v2390 = vunpack.c.l.b16 %v2326
          %v2391 = vunpack.c.l.b16 %v2327
          %v2392 = vunpack.c.l.b16 %v2328
          %v2393 = vunpack.c.l.b16 %v2329
          %v2394 = vunpack.c.l.b16 %v2330
          %v2395 = vunpack.c.l.b16 %v2331
          %v2396 = vunpack.c.l.b16 %v2332
          %v2397 = vpack.c.b16 %v2382, %v2381
          %v2398 = vpack.c.b16 %v2384, %v2383
          %v2399 = vpack.c.b16 %v2386, %v2385
          %v2400 = vpack.c.b16 %v2388, %v2387
          %v2401 = vpack.c.b16 %v2390, %v2389
          %v2402 = vpack.c.b16 %v2392, %v2391
          %v2403 = vpack.c.b16 %v2394, %v2393
          %v2404 = vpack.c.b16 %v2396, %v2395
          %2413 = vmatprep.subr.bf16.mxu0 0
          %2414 = vmatpush1.bf16.msra.mxu0 %v2397
          %2415 = vmatprep.subr.bf16.mxu0 0
          %2416 = vmatpush1.bf16.msra.mxu0 %v2398
          %2417 = vmatprep.subr.bf16.mxu0 0
          %2418 = vmatpush1.bf16.msra.mxu0 %v2399
          %2419 = vmatprep.subr.bf16.mxu0 0
          %2420 = vmatpush1.bf16.msra.mxu0 %v2400
          %2421 = vmatprep.subr.bf16.mxu0 0
          %2422 = vmatpush1.bf16.msra.mxu0 %v2401
          %2423 = vmatprep.subr.bf16.mxu0 0
          %2424 = vmatpush1.bf16.msra.mxu0 %v2402
          %2425 = vmatprep.subr.bf16.mxu0 0
          %2426 = vmatpush1.bf16.msra.mxu0 %v2403
          %2427 = vmatprep.subr.bf16.mxu0 0
          %2428 = vmatpush1.bf16.msra.mxu0 %v2404
          %2429 = vmatprep.subr.bf16.mxu0 0
          %2430 = vmatpush1.bf16.msra.mxu0 0
          %2431 = vmatprep.subr.bf16.mxu0 0
          %2432 = vmatpush1.bf16.msra.mxu0 0
          %2433 = vmatprep.subr.bf16.mxu0 0
          %2434 = vmatpush1.bf16.msra.mxu0 0
          %2435 = vmatprep.subr.bf16.mxu0 0
          %2436 = vmatpush1.bf16.msra.mxu0 0
          %2437 = vmatprep.subr.bf16.mxu0 0
          %2438 = vmatpush1.bf16.msra.mxu0 0
          %2439 = vmatprep.subr.bf16.mxu0 0
          %2440 = vmatpush1.bf16.msra.mxu0 0
          %2441 = vmatprep.subr.bf16.mxu0 0
          %2442 = vmatpush1.bf16.msra.mxu0 0
          %2443 = vmatprep.subr.bf16.mxu0 0
          %2444 = vmatpush1.bf16.msra.mxu0 0
          %2445 = vmatprep.mubr.bf16.mxu0 0
          %2446 = vmatmul.mubr.bf16.gmra.mrb[0].mxu0 %v2355
          %v2447 = vpop.f32.mrb[0].mxu0
          %v2448 = vadd.f32 %v2363, %v2447
          %v2449 = vpop.f32.mrb[0].mxu0
          %v2450 = vpop.f32.mrb[0].mxu0
          %v2451 = vadd.f32 %v2363, %v2450
          %v2452 = vpop.f32.mrb[0].mxu0
          %2453 = vmatprep.mubr.bf16.mxu0 0
          %2454 = vmatmul.mubr.bf16.gmra.mrb[0].mxu0 %v2356
          %v2455 = vpop.f32.mrb[0].mxu0
          %v2456 = vadd.f32 %v2363, %v2455
          %v2457 = vpop.f32.mrb[0].mxu0
          %v2458 = vpop.f32.mrb[0].mxu0
          %v2459 = vadd.f32 %v2363, %v2458
          %v2460 = vpop.f32.mrb[0].mxu0
          %2461 = vmatprep.mubr.bf16.mxu0 0
          %2462 = vmatmul.mubr.bf16.gmra.mrb[0].mxu0 %v2357
          %v2463 = vpop.f32.mrb[0].mxu0
          %v2464 = vadd.f32 %v2363, %v2463
          %v2465 = vpop.f32.mrb[0].mxu0
          %v2466 = vpop.f32.mrb[0].mxu0
          %v2467 = vadd.f32 %v2363, %v2466
          %v2468 = vpop.f32.mrb[0].mxu0
          %2469 = vmatprep.mubr.bf16.mxu0 0
          %2470 = vmatmul.mubr.bf16.gmra.mrb[0].mxu0 %v2358
          %v2471 = vpop.f32.mrb[0].mxu0
          %v2472 = vadd.f32 %v2363, %v2471
          %v2473 = vpop.f32.mrb[0].mxu0
          %v2474 = vpop.f32.mrb[0].mxu0
          %v2475 = vadd.f32 %v2363, %v2474
          %v2476 = vpop.f32.mrb[0].mxu0
          %2477 = vdwg.mxu0
          %v2478 = vmul.f32 %v2448, 0.5
          %v2479 = vmul.f32 %v2451, 0.5
          %v2480 = vmul.f32 %v2456, 0.5
          %v2481 = vmul.f32 %v2459, 0.5
          %v2482 = vmul.f32 %v2464, 0.5
          %v2483 = vmul.f32 %v2467, 0.5
          %v2484 = vmul.f32 %v2472, 0.5
          %v2485 = vmul.f32 %v2475, 0.5
          %v2486 = vmul.f32 %v2448, 0.70710677
          %v2487 = vmul.f32 %v2451, 0.70710677
          %v2488 = vmul.f32 %v2456, 0.70710677
          %v2489 = vmul.f32 %v2459, 0.70710677
          %v2490 = vmul.f32 %v2464, 0.70710677
          %v2491 = vmul.f32 %v2467, 0.70710677
          %v2492 = vmul.f32 %v2472, 0.70710677
          %v2493 = vmul.f32 %v2475, 0.70710677
          %v2494 = vand.u32 2147483647, %v2486
          %v2495 = vand.u32 2147483647, %v2487
          %v2496 = vand.u32 2147483647, %v2488
          %v2497 = vand.u32 2147483647, %v2489
          %v2498 = vand.u32 2147483647, %v2490
          %v2499 = vand.u32 2147483647, %v2491
          %v2500 = vand.u32 2147483647, %v2492
          %v2501 = vand.u32 2147483647, %v2493
          %v2502 = vmul.f32 %v2494, 0.3275911
          %v2503 = vmul.f32 %v2495, 0.3275911
          %v2504 = vmul.f32 %v2496, 0.3275911
          %v2505 = vmul.f32 %v2497, 0.3275911
          %v2506 = vmul.f32 %v2498, 0.3275911
          %v2507 = vmul.f32 %v2499, 0.3275911
          %v2508 = vmul.f32 %v2500, 0.3275911
          %v2509 = vmul.f32 %v2501, 0.3275911
          %v2510 = vadd.f32 %v2502, 1.0
          %v2511 = vadd.f32 %v2503, 1.0
          %v2512 = vadd.f32 %v2504, 1.0
          %v2513 = vadd.f32 %v2505, 1.0
          %v2514 = vadd.f32 %v2506, 1.0
          %v2515 = vadd.f32 %v2507, 1.0
          %v2516 = vadd.f32 %v2508, 1.0
          %v2517 = vadd.f32 %v2509, 1.0
          %v2518 = vrcp.pop %v2510
          %v2519 = vrcp.pop %v2511
          %v2520 = vrcp.pop %v2512
          %v2521 = vrcp.pop %v2513
          %v2522 = vrcp.pop %v2514
          %v2523 = vrcp.pop %v2515
          %v2524 = vrcp.pop %v2516
          %v2525 = vrcp.pop %v2517
          %v2526 = vmul.f32 %v2518, 1.0614054
          %v2527 = vmul.f32 %v2519, 1.0614054
          %v2528 = vmul.f32 %v2520, 1.0614054
          %v2529 = vmul.f32 %v2521, 1.0614054
          %v2530 = vmul.f32 %v2522, 1.0614054
          %v2531 = vmul.f32 %v2523, 1.0614054
          %v2532 = vmul.f32 %v2524, 1.0614054
          %v2533 = vmul.f32 %v2525, 1.0614054
          %v2534 = vadd.f32 %v2526, -1.4531521
          %v2535 = vadd.f32 %v2527, -1.4531521
          %v2536 = vadd.f32 %v2528, -1.4531521
          %v2537 = vadd.f32 %v2529, -1.4531521
          %v2538 = vadd.f32 %v2530, -1.4531521
          %v2539 = vadd.f32 %v2531, -1.4531521
          %v2540 = vadd.f32 %v2532, -1.4531521
          %v2541 = vadd.f32 %v2533, -1.4531521
          %v2542 = vmul.f32 %v2534, %v2518
          %v2543 = vmul.f32 %v2535, %v2519
          %v2544 = vmul.f32 %v2536, %v2520
          %v2545 = vmul.f32 %v2537, %v2521
          %v2546 = vmul.f32 %v2538, %v2522
          %v2547 = vmul.f32 %v2539, %v2523
          %v2548 = vmul.f32 %v2540, %v2524
          %v2549 = vmul.f32 %v2541, %v2525
          %v2550 = vadd.f32 %v2542, 1.4214138
          %v2551 = vadd.f32 %v2543, 1.4214138
          %v2552 = vadd.f32 %v2544, 1.4214138
          %v2553 = vadd.f32 %v2545, 1.4214138
          %v2554 = vadd.f32 %v2546, 1.4214138
          %v2555 = vadd.f32 %v2547, 1.4214138
          %v2556 = vadd.f32 %v2548, 1.4214138
          %v2557 = vadd.f32 %v2549, 1.4214138
          %v2558 = vmul.f32 %v2550, %v2518
          %v2559 = vmul.f32 %v2551, %v2519
          %v2560 = vmul.f32 %v2552, %v2520
          %v2561 = vmul.f32 %v2553, %v2521
          %v2562 = vmul.f32 %v2554, %v2522
          %v2563 = vmul.f32 %v2555, %v2523
          %v2564 = vmul.f32 %v2556, %v2524
          %v2565 = vmul.f32 %v2557, %v2525
          %v2566 = vadd.f32 %v2558, -0.28449672
          %v2567 = vadd.f32 %v2559, -0.28449672
          %v2568 = vadd.f32 %v2560, -0.28449672
          %v2569 = vadd.f32 %v2561, -0.28449672
          %v2570 = vadd.f32 %v2562, -0.28449672
          %v2571 = vadd.f32 %v2563, -0.28449672
          %v2572 = vadd.f32 %v2564, -0.28449672
          %v2573 = vadd.f32 %v2565, -0.28449672
          %v2574 = vmul.f32 %v2566, %v2518
          %v2575 = vmul.f32 %v2567, %v2519
          %v2576 = vmul.f32 %v2568, %v2520
          %v2577 = vmul.f32 %v2569, %v2521
          %v2578 = vmul.f32 %v2570, %v2522
          %v2579 = vmul.f32 %v2571, %v2523
          %v2580 = vmul.f32 %v2572, %v2524
          %v2581 = vmul.f32 %v2573, %v2525
          %v2582 = vadd.f32 %v2574, 0.2548296
          %v2583 = vadd.f32 %v2575, 0.2548296
          %v2584 = vadd.f32 %v2576, 0.2548296
          %v2585 = vadd.f32 %v2577, 0.2548296
          %v2586 = vadd.f32 %v2578, 0.2548296
          %v2587 = vadd.f32 %v2579, 0.2548296
          %v2588 = vadd.f32 %v2580, 0.2548296
          %v2589 = vadd.f32 %v2581, 0.2548296
          %v2590 = vmul.f32 %v2582, %v2518
          %v2591 = vmul.f32 %v2583, %v2519
          %v2592 = vmul.f32 %v2584, %v2520
          %v2593 = vmul.f32 %v2585, %v2521
          %v2594 = vmul.f32 %v2586, %v2522
          %v2595 = vmul.f32 %v2587, %v2523
          %v2596 = vmul.f32 %v2588, %v2524
          %v2597 = vmul.f32 %v2589, %v2525
          %v2598 = vsub.f32 0.0, %v2494
          %v2599 = vsub.f32 0.0, %v2495
          %v2600 = vsub.f32 0.0, %v2496
          %v2601 = vsub.f32 0.0, %v2497
          %v2602 = vsub.f32 0.0, %v2498
          %v2603 = vsub.f32 0.0, %v2499
          %v2604 = vsub.f32 0.0, %v2500
          %v2605 = vsub.f32 0.0, %v2501
          %v2606 = vmul.f32 %v2598, %v2494
          %v2607 = vmul.f32 %v2599, %v2495
          %v2608 = vmul.f32 %v2600, %v2496
          %v2609 = vmul.f32 %v2601, %v2497
          %v2610 = vmul.f32 %v2602, %v2498
          %v2611 = vmul.f32 %v2603, %v2499
          %v2612 = vmul.f32 %v2604, %v2500
          %v2613 = vmul.f32 %v2605, %v2501
          %v2614 = vmul.f32 %v2606, 1.442695
          %v2615 = vpow.pop %v2614
          %v2616 = vmul.f32 %v2607, 1.442695
          %v2617 = vpow.pop %v2616
          %v2618 = vmul.f32 %v2608, 1.442695
          %v2619 = vpow.pop %v2618
          %v2620 = vmul.f32 %v2609, 1.442695
          %v2621 = vpow.pop %v2620
          %v2622 = vmul.f32 %v2610, 1.442695
          %v2623 = vpow.pop %v2622
          %v2624 = vmul.f32 %v2611, 1.442695
          %v2625 = vpow.pop %v2624
          %v2626 = vmul.f32 %v2612, 1.442695
          %v2627 = vpow.pop %v2626
          %v2628 = vmul.f32 %v2613, 1.442695
          %v2629 = vpow.pop %v2628
          %v2630 = vmul.f32 %v2590, %v2615
          %v2631 = vmul.f32 %v2591, %v2617
          %v2632 = vmul.f32 %v2592, %v2619
          %v2633 = vmul.f32 %v2593, %v2621
          %v2634 = vmul.f32 %v2594, %v2623
          %v2635 = vmul.f32 %v2595, %v2625
          %v2636 = vmul.f32 %v2596, %v2627
          %v2637 = vmul.f32 %v2597, %v2629
          %v2638 = vsub.f32 1.0, %v2630
          %v2639 = vsub.f32 1.0, %v2631
          %v2640 = vsub.f32 1.0, %v2632
          %v2641 = vsub.f32 1.0, %v2633
          %v2642 = vsub.f32 1.0, %v2634
          %v2643 = vsub.f32 1.0, %v2635
          %v2644 = vsub.f32 1.0, %v2636
          %v2645 = vsub.f32 1.0, %v2637
          %vm2646 = vcmp.ge.f32.partialorder %v2486, 0.0
          %vm2647 = vcmp.ge.f32.partialorder %v2487, 0.0
          %vm2648 = vcmp.ge.f32.partialorder %v2488, 0.0
          %vm2649 = vcmp.ge.f32.partialorder %v2489, 0.0
          %vm2650 = vcmp.ge.f32.partialorder %v2490, 0.0
          %vm2651 = vcmp.ge.f32.partialorder %v2491, 0.0
          %vm2652 = vcmp.ge.f32.partialorder %v2492, 0.0
          %vm2653 = vcmp.ge.f32.partialorder %v2493, 0.0
          %v2654 = vsub.f32 0.0, %v2638
          %v2655 = vsub.f32 0.0, %v2639
          %v2656 = vsub.f32 0.0, %v2640
          %v2657 = vsub.f32 0.0, %v2641
          %v2658 = vsub.f32 0.0, %v2642
          %v2659 = vsub.f32 0.0, %v2643
          %v2660 = vsub.f32 0.0, %v2644
          %v2661 = vsub.f32 0.0, %v2645
          %v2662 = vsel %vm2646, %v2638, %v2654
          %v2663 = vsel %vm2647, %v2639, %v2655
          %v2664 = vsel %vm2648, %v2640, %v2656
          %v2665 = vsel %vm2649, %v2641, %v2657
          %v2666 = vsel %vm2650, %v2642, %v2658
          %v2667 = vsel %vm2651, %v2643, %v2659
          %v2668 = vsel %vm2652, %v2644, %v2660
          %v2669 = vsel %vm2653, %v2645, %v2661
          %v2670 = vadd.f32 %v2662, 1.0
          %v2671 = vadd.f32 %v2663, 1.0
          %v2672 = vadd.f32 %v2664, 1.0
          %v2673 = vadd.f32 %v2665, 1.0
          %v2674 = vadd.f32 %v2666, 1.0
          %v2675 = vadd.f32 %v2667, 1.0
          %v2676 = vadd.f32 %v2668, 1.0
          %v2677 = vadd.f32 %v2669, 1.0
          %v2678 = vmul.f32 %v2478, %v2670
          %v2679 = vmul.f32 %v2479, %v2671
          %v2680 = vmul.f32 %v2480, %v2672
          %v2681 = vmul.f32 %v2481, %v2673
          %v2682 = vmul.f32 %v2482, %v2674
          %v2683 = vmul.f32 %v2483, %v2675
          %v2684 = vmul.f32 %v2484, %v2676
          %v2685 = vmul.f32 %v2485, %v2677
          %v2686 = vpack.c.bf16 %v2679, %v2678
          %v2687 = vpack.c.bf16 %v2681, %v2680
          %v2688 = vpack.c.bf16 %v2683, %v2682
          %v2689 = vpack.c.bf16 %v2685, %v2684
          %v2706 = vunpack.c.l.b16 %v2339
          %v2707 = vunpack.c.l.b16 %v2340
          %v2708 = vunpack.c.l.b16 %v2341
          %v2709 = vunpack.c.l.b16 %v2342
          %v2710 = vunpack.c.l.b16 %v2343
          %v2711 = vunpack.c.l.b16 %v2344
          %v2712 = vunpack.c.l.b16 %v2345
          %v2713 = vunpack.c.l.b16 %v2346
          %v2714 = vunpack.c.l.b16 %v2347
          %v2715 = vunpack.c.l.b16 %v2348
          %v2716 = vunpack.c.l.b16 %v2349
          %v2717 = vunpack.c.l.b16 %v2350
          %v2718 = vunpack.c.l.b16 %v2351
          %v2719 = vunpack.c.l.b16 %v2352
          %v2720 = vunpack.c.l.b16 %v2353
          %v2721 = vunpack.c.l.b16 %v2354
          %v2722 = vpack.c.b16 %v2707, %v2706
          %v2723 = vpack.c.b16 %v2709, %v2708
          %v2724 = vpack.c.b16 %v2711, %v2710
          %v2725 = vpack.c.b16 %v2713, %v2712
          %v2726 = vpack.c.b16 %v2715, %v2714
          %v2727 = vpack.c.b16 %v2717, %v2716
          %v2728 = vpack.c.b16 %v2719, %v2718
          %v2729 = vpack.c.b16 %v2721, %v2720
          %2738 = vmatprep.subr.bf16.mxu0 0
          %2739 = vmatpush1.bf16.msra.mxu0 %v2722
          %2740 = vmatprep.subr.bf16.mxu0 0
          %2741 = vmatpush1.bf16.msra.mxu0 %v2723
          %2742 = vmatprep.subr.bf16.mxu0 0
          %2743 = vmatpush1.bf16.msra.mxu0 %v2724
          %2744 = vmatprep.subr.bf16.mxu0 0
          %2745 = vmatpush1.bf16.msra.mxu0 %v2725
          %2746 = vmatprep.subr.bf16.mxu0 0
          %2747 = vmatpush1.bf16.msra.mxu0 %v2726
          %2748 = vmatprep.subr.bf16.mxu0 0
          %2749 = vmatpush1.bf16.msra.mxu0 %v2727
          %2750 = vmatprep.subr.bf16.mxu0 0
          %2751 = vmatpush1.bf16.msra.mxu0 %v2728
          %2752 = vmatprep.subr.bf16.mxu0 0
          %2753 = vmatpush1.bf16.msra.mxu0 %v2729
          %2754 = vmatprep.subr.bf16.mxu0 0
          %2755 = vmatpush1.bf16.msra.mxu0 0
          %2756 = vmatprep.subr.bf16.mxu0 0
          %2757 = vmatpush1.bf16.msra.mxu0 0
          %2758 = vmatprep.subr.bf16.mxu0 0
          %2759 = vmatpush1.bf16.msra.mxu0 0
          %2760 = vmatprep.subr.bf16.mxu0 0
          %2761 = vmatpush1.bf16.msra.mxu0 0
          %2762 = vmatprep.subr.bf16.mxu0 0
          %2763 = vmatpush1.bf16.msra.mxu0 0
          %2764 = vmatprep.subr.bf16.mxu0 0
          %2765 = vmatpush1.bf16.msra.mxu0 0
          %2766 = vmatprep.subr.bf16.mxu0 0
          %2767 = vmatpush1.bf16.msra.mxu0 0
          %2768 = vmatprep.subr.bf16.mxu0 0
          %2769 = vmatpush1.bf16.msra.mxu0 0
          %2770 = vmatprep.mubr.bf16.mxu0 0
          %2771 = vmatmul.mubr.bf16.gmra.mrb[0].mxu0 %v2686
          %v2772 = vpop.f32.mrb[0].mxu0
          %v2773 = vadd.f32 0.0, %v2772
          %v2774 = vpop.f32.mrb[0].mxu0
          %v2775 = vpop.f32.mrb[0].mxu0
          %v2776 = vadd.f32 0.0, %v2775
          %v2777 = vpop.f32.mrb[0].mxu0
          %2778 = vmatprep.mubr.bf16.mxu0 0
          %2779 = vmatmul.mubr.bf16.gmra.mrb[0].mxu0 %v2687
          %v2780 = vpop.f32.mrb[0].mxu0
          %v2781 = vadd.f32 0.0, %v2780
          %v2782 = vpop.f32.mrb[0].mxu0
          %v2783 = vpop.f32.mrb[0].mxu0
          %v2784 = vadd.f32 0.0, %v2783
          %v2785 = vpop.f32.mrb[0].mxu0
          %2786 = vmatprep.mubr.bf16.mxu0 0
          %2787 = vmatmul.mubr.bf16.gmra.mrb[0].mxu0 %v2688
          %v2788 = vpop.f32.mrb[0].mxu0
          %v2789 = vadd.f32 0.0, %v2788
          %v2790 = vpop.f32.mrb[0].mxu0
          %v2791 = vpop.f32.mrb[0].mxu0
          %v2792 = vadd.f32 0.0, %v2791
          %v2793 = vpop.f32.mrb[0].mxu0
          %2794 = vmatprep.mubr.bf16.mxu0 0
          %2795 = vmatmul.mubr.bf16.gmra.mrb[0].mxu0 %v2689
          %v2796 = vpop.f32.mrb[0].mxu0
          %v2797 = vadd.f32 0.0, %v2796
          %v2798 = vpop.f32.mrb[0].mxu0
          %v2799 = vpop.f32.mrb[0].mxu0
          %v2800 = vadd.f32 0.0, %v2799
          %v2801 = vpop.f32.mrb[0].mxu0
          %2802 = vdwg.mxu0
          %v2803 = vadd.f32 %v2304, %v2773
          %v2804 = vadd.f32 %v2305, %v2776
          %v2805 = vadd.f32 %v2306, %v2781
          %v2806 = vadd.f32 %v2307, %v2784
          %v2807 = vadd.f32 %v2308, %v2789
          %v2808 = vadd.f32 %v2309, %v2792
          %v2809 = vadd.f32 %v2310, %v2797
          %v2810 = vadd.f32 %v2311, %v2800
        $region173: #{tpu_custom_call.1} parent=111 // loop_footer
          %s2303 = sadd.s32 1, %s2299
        $region174: #{tpu_custom_call.1} parent=111 // loop_footer_branch
          %2298 = sbr.rel target = $region170
        $region175: #{tpu_custom_call.1} parent=111 // loop_exit
          _
        %v2811 = vadd.f32 %v2164, %v2304
        %v2812 = vadd.f32 %v2165, %v2305
        %v2813 = vadd.f32 %v2166, %v2306
        %v2814 = vadd.f32 %v2167, %v2307
        %v2815 = vadd.f32 %v2168, %v2308
        %v2816 = vadd.f32 %v2169, %v2309
        %v2817 = vadd.f32 %v2170, %v2310
        %v2818 = vadd.f32 %v2171, %v2311
        %2819 = vst [vmem:[#allocation2] sm:$0xff] %v2811
        %2820 = vst [vmem:[#allocation2 + $0x8] sm:$0xff] %v2812
        %2821 = vst [vmem:[#allocation2 + $0x10] sm:$0xff] %v2813
        %2822 = vst [vmem:[#allocation2 + $0x18] sm:$0xff] %v2814
        %2823 = vst [vmem:[#allocation2 + $0x20] sm:$0xff] %v2815
        %2824 = vst [vmem:[#allocation2 + $0x28] sm:$0xff] %v2816
        %2825 = vst [vmem:[#allocation2 + $0x30] sm:$0xff] %v2817
        %2826 = vst [vmem:[#allocation2 + $0x38] sm:$0xff] %v2818
        %p2827 = scmp.eq.s32.totalorder %s44, 1
        // Predicated region
        $region176: #{tpu_custom_call.1} parent=111 // pred_check
          %p2828 = pneg %p2827
        $region177: #{tpu_custom_call.1} parent=111 // pred_check_branch
          %2830 = sbr.rel (%p2828) target = $region179
        $region178: #{tpu_custom_call.1} parent=111 // pred_region
          %v2831 = vadd.f32 %v2811, %v2812
          %v2832 = vadd.f32 %v2831, %v2813
          %v2833 = vadd.f32 %v2832, %v2814
          %v2834 = vadd.f32 %v2833, %v2815
          %v2835 = vadd.f32 %v2834, %v2816
          %v2836 = vadd.f32 %v2835, %v2817
          %v2837 = vadd.f32 %v2836, %v2818
          %v2838 = vrot.slane %v2837, 4
          %v2839 = vadd.f32 %v2837, %v2838
          %v2840 = vrot.slane %v2839, 2
          %v2841 = vadd.f32 %v2839, %v2840
          %v2842 = vrot.slane %v2841, 1
          %v2843 = vadd.f32 %v2841, %v2842
          %v2844 = vmul.f32 %v2843, 0.015625
          %v2845 = vld [vmem:[%s17] sm:$0xf]
          %v2846 = vld [vmem:[%s17 + $0x4] sm:$0xf]
          %v2847 = vld [vmem:[%s17 + $0x8] sm:$0xf]
          %v2848 = vld [vmem:[%s17 + $0xc] sm:$0xf]
          %v2849 = vld [vmem:[%s17 + $0x10] sm:$0xf]
          %v2850 = vld [vmem:[%s17 + $0x14] sm:$0xf]
          %v2851 = vld [vmem:[%s17 + $0x18] sm:$0xf]
          %v2852 = vld [vmem:[%s17 + $0x1c] sm:$0xf]
          %v2853 = vld [vmem:[%s17 + $0x20] sm:$0xf]
          %v2854 = vld [vmem:[%s17 + $0x24] sm:$0xf]
          %v2855 = vld [vmem:[%s17 + $0x28] sm:$0xf]
          %v2856 = vld [vmem:[%s17 + $0x2c] sm:$0xf]
          %v2857 = vld [vmem:[%s17 + $0x30] sm:$0xf]
          %v2858 = vld [vmem:[%s17 + $0x34] sm:$0xf]
          %v2859 = vld [vmem:[%s17 + $0x38] sm:$0xf]
          %v2860 = vld [vmem:[%s17 + $0x3c] sm:$0xf]
          %v2861 = vpack.c.bf16 %v2844, %v2844
          %v2862 = vld [vmem:[%s18] sm:$0x1]
          %v2879 = vunpack.c.l.b16 %v2845
          %v2880 = vunpack.c.l.b16 %v2846
          %v2881 = vunpack.c.l.b16 %v2847
          %v2882 = vunpack.c.l.b16 %v2848
          %v2883 = vunpack.c.l.b16 %v2849
          %v2884 = vunpack.c.l.b16 %v2850
          %v2885 = vunpack.c.l.b16 %v2851
          %v2886 = vunpack.c.l.b16 %v2852
          %v2887 = vunpack.c.l.b16 %v2853
          %v2888 = vunpack.c.l.b16 %v2854
          %v2889 = vunpack.c.l.b16 %v2855
          %v2890 = vunpack.c.l.b16 %v2856
          %v2891 = vunpack.c.l.b16 %v2857
          %v2892 = vunpack.c.l.b16 %v2858
          %v2893 = vunpack.c.l.b16 %v2859
          %v2894 = vunpack.c.l.b16 %v2860
          %v2895 = vpack.c.b16 %v2880, %v2879
          %v2896 = vpack.c.b16 %v2882, %v2881
          %v2897 = vpack.c.b16 %v2884, %v2883
          %v2898 = vpack.c.b16 %v2886, %v2885
          %v2899 = vpack.c.b16 %v2888, %v2887
          %v2900 = vpack.c.b16 %v2890, %v2889
          %v2901 = vpack.c.b16 %v2892, %v2891
          %v2902 = vpack.c.b16 %v2894, %v2893
          %2911 = vmatprep.subr.bf16.mxu0 0
          %2912 = vmatpush1.bf16.msra.mxu0 %v2895
          %2913 = vmatprep.subr.bf16.mxu0 0
          %2914 = vmatpush1.bf16.msra.mxu0 %v2896
          %2915 = vmatprep.subr.bf16.mxu0 0
          %2916 = vmatpush1.bf16.msra.mxu0 %v2897
          %2917 = vmatprep.subr.bf16.mxu0 0
          %2918 = vmatpush1.bf16.msra.mxu0 %v2898
          %2919 = vmatprep.subr.bf16.mxu0 0
          %2920 = vmatpush1.bf16.msra.mxu0 %v2899
          %2921 = vmatprep.subr.bf16.mxu0 0
          %2922 = vmatpush1.bf16.msra.mxu0 %v2900
          %2923 = vmatprep.subr.bf16.mxu0 0
          %2924 = vmatpush1.bf16.msra.mxu0 %v2901
          %2925 = vmatprep.subr.bf16.mxu0 0
          %2926 = vmatpush1.bf16.msra.mxu0 %v2902
          %2927 = vmatprep.subr.bf16.mxu0 0
          %2928 = vmatpush1.bf16.msra.mxu0 0
          %2929 = vmatprep.subr.bf16.mxu0 0
          %2930 = vmatpush1.bf16.msra.mxu0 0
          %2931 = vmatprep.subr.bf16.mxu0 0
          %2932 = vmatpush1.bf16.msra.mxu0 0
          %2933 = vmatprep.subr.bf16.mxu0 0
          %2934 = vmatpush1.bf16.msra.mxu0 0
          %2935 = vmatprep.subr.bf16.mxu0 0
          %2936 = vmatpush1.bf16.msra.mxu0 0
          %2937 = vmatprep.subr.bf16.mxu0 0
          %2938 = vmatpush1.bf16.msra.mxu0 0
          %2939 = vmatprep.subr.bf16.mxu0 0
          %2940 = vmatpush1.bf16.msra.mxu0 0
          %2941 = vmatprep.subr.bf16.mxu0 0
          %2942 = vmatpush1.bf16.msra.mxu0 0
          %2943 = vmatprep.mubr.bf16.mxu0 0
          %2944 = vmatmul.mubr.bf16.gmra.mrb[0].mxu0 %v2861
          %v2945 = vpop.f32.mrb[0].mxu0
          %v2946 = vadd.f32 %v2862, %v2945
          %v2947 = vpop.f32.mrb[0].mxu0
          %v2948 = vpop.f32.mrb[0].mxu0
          %v2949 = vpop.f32.mrb[0].mxu0
          %2950 = vdwg.mxu0
          %v2951 = vmul.f32 %v2946, 0.5
          %v2952 = vmul.f32 %v2946, 0.70710677
          %v2953 = vand.u32 2147483647, %v2952
          %v2954 = vmul.f32 %v2953, 0.3275911
          %v2955 = vadd.f32 %v2954, 1.0
          %v2956 = vrcp.pop %v2955
          %v2957 = vmul.f32 %v2956, 1.0614054
          %v2958 = vadd.f32 %v2957, -1.4531521
          %v2959 = vmul.f32 %v2958, %v2956
          %v2960 = vadd.f32 %v2959, 1.4214138
          %v2961 = vmul.f32 %v2960, %v2956
          %v2962 = vadd.f32 %v2961, -0.28449672
          %v2963 = vmul.f32 %v2962, %v2956
          %v2964 = vadd.f32 %v2963, 0.2548296
          %v2965 = vmul.f32 %v2964, %v2956
          %v2966 = vsub.f32 0.0, %v2953
          %v2967 = vmul.f32 %v2966, %v2953
          %v2968 = vmul.f32 %v2967, 1.442695
          %v2969 = vpow.pop %v2968
          %v2970 = vmul.f32 %v2965, %v2969
          %v2971 = vsub.f32 1.0, %v2970
          %vm2972 = vcmp.ge.f32.partialorder %v2952, 0.0
          %v2973 = vsub.f32 0.0, %v2971
          %v2974 = vsel %vm2972, %v2971, %v2973
          %v2975 = vadd.f32 %v2974, 1.0
          %v2976 = vmul.f32 %v2951, %v2975
          %v2977 = vld [vmem:[%s19] sm:$0xf]
          %v2978 = vld [vmem:[%s19 + $0x4] sm:$0xf]
          %v2979 = vld [vmem:[%s19 + $0x8] sm:$0xf]
          %v2980 = vld [vmem:[%s19 + $0xc] sm:$0xf]
          %v2981 = vld [vmem:[%s19 + $0x10] sm:$0xf]
          %v2982 = vld [vmem:[%s19 + $0x14] sm:$0xf]
          %v2983 = vld [vmem:[%s19 + $0x18] sm:$0xf]
          %v2984 = vld [vmem:[%s19 + $0x1c] sm:$0xf]
          %v2985 = vpack.c.bf16 %v2976, %v2976
          %v2986 = vld [vmem:[%s20] sm:$0x1]
          %v2995 = vunpack.c.l.b16 %v2977
          %v2996 = vunpack.c.l.b16 %v2978
          %v2997 = vunpack.c.l.b16 %v2979
          %v2998 = vunpack.c.l.b16 %v2980
          %v2999 = vunpack.c.l.b16 %v2981
          %v3000 = vunpack.c.l.b16 %v2982
          %v3001 = vunpack.c.l.b16 %v2983
          %v3002 = vunpack.c.l.b16 %v2984
          %v3003 = vpack.c.b16 %v2996, %v2995
          %v3004 = vpack.c.b16 %v2998, %v2997
          %v3005 = vpack.c.b16 %v3000, %v2999
          %v3006 = vpack.c.b16 %v3002, %v3001
          %v3012 = vsel %vm1793, %v2985, 0
          %3014 = vmatprep.subr.bf16.mxu0 0
          %3015 = vmatpush1.bf16.msra.mxu0 %v3003
          %3016 = vmatprep.subr.bf16.mxu0 0
          %3017 = vmatpush1.bf16.msra.mxu0 %v3004
          %3018 = vmatprep.subr.bf16.mxu0 0
          %3019 = vmatpush1.bf16.msra.mxu0 %v3005
          %3020 = vmatprep.subr.bf16.mxu0 0
          %3021 = vmatpush1.bf16.msra.mxu0 %v3006
          %3022 = vmatprep.subr.bf16.mxu0 0
          %3023 = vmatpush1.bf16.msra.mxu0 0
          %3024 = vmatprep.subr.bf16.mxu0 0
          %3025 = vmatpush1.bf16.msra.mxu0 0
          %3026 = vmatprep.subr.bf16.mxu0 0
          %3027 = vmatpush1.bf16.msra.mxu0 0
          %3028 = vmatprep.subr.bf16.mxu0 0
          %3029 = vmatpush1.bf16.msra.mxu0 0
          %3030 = vmatprep.subr.bf16.mxu0 0
          %3031 = vmatpush1.bf16.msra.mxu0 0
          %3032 = vmatprep.subr.bf16.mxu0 0
          %3033 = vmatpush1.bf16.msra.mxu0 0
          %3034 = vmatprep.subr.bf16.mxu0 0
          %3035 = vmatpush1.bf16.msra.mxu0 0
          %3036 = vmatprep.subr.bf16.mxu0 0
          %3037 = vmatpush1.bf16.msra.mxu0 0
          %3038 = vmatprep.subr.bf16.mxu0 0
          %3039 = vmatpush1.bf16.msra.mxu0 0
          %3040 = vmatprep.subr.bf16.mxu0 0
          %3041 = vmatpush1.bf16.msra.mxu0 0
          %3042 = vmatprep.subr.bf16.mxu0 0
          %3043 = vmatpush1.bf16.msra.mxu0 0
          %3044 = vmatprep.subr.bf16.mxu0 0
          %3045 = vmatpush1.bf16.msra.mxu0 0
          %3046 = vmatprep.mubr.bf16.mxu0 0
          %3047 = vmatmul.mubr.bf16.gmra.mrb[0].mxu0 %v3012
          %v3048 = vpop.f32.mrb[0].mxu0
          %v3049 = vadd.f32 %v2986, %v3048
          %v3050 = vpop.f32.mrb[0].mxu0
          %v3051 = vpop.f32.mrb[0].mxu0
          %v3052 = vpop.f32.mrb[0].mxu0
          %3053 = vdwg.mxu0
          %v3054 = vld [vmem:[#allocation18] sm:$0xf]
          %v3055 = vld [vmem:[#allocation18 + $0x4] sm:$0xf]
          %v3056 = vld [vmem:[#allocation18 + $0x8] sm:$0xf]
          %v3057 = vld [vmem:[#allocation18 + $0xc] sm:$0xf]
          %v3058 = vld [vmem:[#allocation18 + $0x10] sm:$0xf]
          %v3059 = vld [vmem:[#allocation18 + $0x14] sm:$0xf]
          %v3060 = vld [vmem:[#allocation18 + $0x18] sm:$0xf]
          %v3061 = vld [vmem:[#allocation18 + $0x1c] sm:$0xf]
          %v3062 = vld [vmem:[#allocation18 + $0x20] sm:$0xf]
          %v3063 = vld [vmem:[#allocation18 + $0x24] sm:$0xf]
          %v3064 = vld [vmem:[#allocation18 + $0x28] sm:$0xf]
          %v3065 = vld [vmem:[#allocation18 + $0x2c] sm:$0xf]
          %v3066 = vld [vmem:[#allocation18 + $0x30] sm:$0xf]
          %v3067 = vld [vmem:[#allocation18 + $0x34] sm:$0xf]
          %v3068 = vld [vmem:[#allocation18 + $0x38] sm:$0xf]
          %v3069 = vld [vmem:[#allocation18 + $0x3c] sm:$0xf]
          %v3070 = vpack.c.bf16 %v3049, %v3049
          %v3071 = vld [vmem:[%s22] sm:$0x1]
          %v3088 = vunpack.c.l.b16 %v3054
          %v3089 = vunpack.c.l.b16 %v3055
          %v3090 = vunpack.c.l.b16 %v3056
          %v3091 = vunpack.c.l.b16 %v3057
          %v3092 = vunpack.c.l.b16 %v3058
          %v3093 = vunpack.c.l.b16 %v3059
          %v3094 = vunpack.c.l.b16 %v3060
          %v3095 = vunpack.c.l.b16 %v3061
          %v3096 = vunpack.c.l.b16 %v3062
          %v3097 = vunpack.c.l.b16 %v3063
          %v3098 = vunpack.c.l.b16 %v3064
          %v3099 = vunpack.c.l.b16 %v3065
          %v3100 = vunpack.c.l.b16 %v3066
          %v3101 = vunpack.c.l.b16 %v3067
          %v3102 = vunpack.c.l.b16 %v3068
          %v3103 = vunpack.c.l.b16 %v3069
          %v3104 = vpack.c.b16 %v3089, %v3088
          %v3105 = vpack.c.b16 %v3091, %v3090
          %v3106 = vpack.c.b16 %v3093, %v3092
          %v3107 = vpack.c.b16 %v3095, %v3094
          %v3108 = vpack.c.b16 %v3097, %v3096
          %v3109 = vpack.c.b16 %v3099, %v3098
          %v3110 = vpack.c.b16 %v3101, %v3100
          %v3111 = vpack.c.b16 %v3103, %v3102
          %3120 = vmatprep.subr.bf16.mxu0 0
          %3121 = vmatpush1.bf16.msra.mxu0 %v3104
          %3122 = vmatprep.subr.bf16.mxu0 0
          %3123 = vmatpush1.bf16.msra.mxu0 %v3105
          %3124 = vmatprep.subr.bf16.mxu0 0
          %3125 = vmatpush1.bf16.msra.mxu0 %v3106
          %3126 = vmatprep.subr.bf16.mxu0 0
          %3127 = vmatpush1.bf16.msra.mxu0 %v3107
          %3128 = vmatprep.subr.bf16.mxu0 0
          %3129 = vmatpush1.bf16.msra.mxu0 %v3108
          %3130 = vmatprep.subr.bf16.mxu0 0
          %3131 = vmatpush1.bf16.msra.mxu0 %v3109
          %3132 = vmatprep.subr.bf16.mxu0 0
          %3133 = vmatpush1.bf16.msra.mxu0 %v3110
          %3134 = vmatprep.subr.bf16.mxu0 0
          %3135 = vmatpush1.bf16.msra.mxu0 %v3111
          %3136 = vmatprep.subr.bf16.mxu0 0
          %3137 = vmatpush1.bf16.msra.mxu0 0
          %3138 = vmatprep.subr.bf16.mxu0 0
          %3139 = vmatpush1.bf16.msra.mxu0 0
          %3140 = vmatprep.subr.bf16.mxu0 0
          %3141 = vmatpush1.bf16.msra.mxu0 0
          %3142 = vmatprep.subr.bf16.mxu0 0
          %3143 = vmatpush1.bf16.msra.mxu0 0
          %3144 = vmatprep.subr.bf16.mxu0 0
          %3145 = vmatpush1.bf16.msra.mxu0 0
          %3146 = vmatprep.subr.bf16.mxu0 0
          %3147 = vmatpush1.bf16.msra.mxu0 0
          %3148 = vmatprep.subr.bf16.mxu0 0
          %3149 = vmatpush1.bf16.msra.mxu0 0
          %3150 = vmatprep.subr.bf16.mxu0 0
          %3151 = vmatpush1.bf16.msra.mxu0 0
          %3152 = vmatprep.mubr.bf16.mxu0 0
          %3153 = vmatmul.mubr.bf16.gmra.mrb[0].mxu0 %v3070
          %v3154 = vpop.f32.mrb[0].mxu0
          %v3155 = vadd.f32 %v3071, %v3154
          %v3156 = vpop.f32.mrb[0].mxu0
          %v3157 = vpop.f32.mrb[0].mxu0
          %v3158 = vpop.f32.mrb[0].mxu0
          %3159 = vdwg.mxu0
          %3160 = vst [vmem:[%s1103] sm:$0x1] %v3155
        $region179: #{tpu_custom_call.1} parent=111 // pred_fallthru
          _
        %s3161 = sand.u32 %s602, 1
        %s3162 = scalar_lea.sflag [#allocation5], %s3161
        %s3163 = sand.u32 %s602, 1
        %s3164 = scalar_lea.vmem [#allocation19], %s3163
        // Predicated region
        $region180: #{tpu_custom_call.1} parent=111 // pred_check
          %p3165 = pneg %p612
        $region181: #{tpu_custom_call.1} parent=111 // pred_check_branch
          %3167 = sbr.rel (%p3165) target = $region183
        $region182: #{tpu_custom_call.1} parent=111 // pred_region
          %s3169 = ssub.s32 16, 16
          %3170 = vsyncadd %s3162, %s3169
          %s3171 = smul.addr %s43, 16
          %s3172 = scalar_lea.hbm %s23, %s3171
          %s3174 = sshll.u32 %s3164, 4
          %s3175 = int_to_ptr.vmem [resolvable:$true] %s3174
          %3177 = dma.vmem_to_hbm [thread:$0]  %s3175, 16, %s3172, %s3162
        $region183: #{tpu_custom_call.1} parent=111 // pred_fallthru
          _
      $region112: #{tpu_custom_call.1} parent=5 // pred_fallthru
        _
      %p3178 = scmp.le.s32.totalorder 2, %s34
      // Predicated region
      $region184: #{tpu_custom_call.1} parent=5 // pred_check
        %p3179 = pneg %p3178
      $region185: #{tpu_custom_call.1} parent=5 // pred_check_branch
        %3181 = sbr.rel (%p3179) target = $region187
      $region186: #{tpu_custom_call.1} parent=5 // pred_region
        %s3182 = ssub.s32 %s34, 2
        // Predicated region
        $region188: #{tpu_custom_call.1} parent=186 // pred_check
          %p3183 = pneg %p618
        $region189: #{tpu_custom_call.1} parent=186 // pred_check_branch
          %3185 = sbr.rel (%p3183) target = $region191
        $region190: #{tpu_custom_call.1} parent=186 // pred_region
          %s3186 = sand.u32 %s603, 1
          %s3187 = scalar_lea.sflag [#allocation5], %s3186
          %s3188 = sand.u32 %s603, 1
          %s3189 = scalar_lea.vmem [#allocation19], %s3188
          %3190 = dma.done %s3187, 16
        $region191: #{tpu_custom_call.1} parent=186 // pred_fallthru
          _
      $region187: #{tpu_custom_call.1} parent=5 // pred_fallthru
        _
    $region6: #{tpu_custom_call.1} parent=1 // loop_footer
      %s38 = sadd.s32 1, %s34
    $region7: #{tpu_custom_call.1} parent=1 // loop_footer_branch
      %33 = sbr.rel target = $region3
    $region8: #{tpu_custom_call.1} parent=1 // loop_exit
      _
    %3191 = vsyncpa [#allocation4], 1
    %s3192 = scalar_lea.sflag [#allocation4], 1
    %3193 = vsyncpa %s3192, 1
    %3194 = vsyncpa [#allocation7], 1
    %3195 = vsyncpa [#allocation5], 1
    %s3196 = scalar_lea.sflag [#allocation5], 1
    %3197 = vsyncpa %s3196, 1

</llo_original>
